<compile_context>
chip_gen: v7x
topology: tpu7x:2x2x1
jax: 0.10.0
libtpu: 0.0.40
codegen_flags: <defaults>
</compile_context>

<pallas_src>
import numpy as np
import jax
import jax.numpy as jnp
from jax import lax
from jax.experimental import pallas as pl
from jax.experimental.pallas import tpu as pltpu


# (dy, dx) shift order shared by the kernel and the weight packing in the wrapper.
_SHIFTS = ((0, 0), (0, 1), (1, 0), (1, 1))


# ----------------------------------------------------------------------------
# Fused kernel: LeakyReLU -> Conv2d(4,2,1) -> ReLU -> ConvTranspose2d(4,2,1)
# -> concat skip, all on one VMEM-resident tile per batch element.
#
# Inputs (per grid step n):
#   xpar_ref : (1, Hp, Wp, 4*Cin)  padded input, parity packed:
#              xpar[i, j, (2p+q)*Cin + c] = xpad[2i+p, 2j+q, c]
#   wd_ref   : (4, 4*Cin, inner_nc)  down-conv weights, one block per (dy,dx) shift
#   wu_ref   : (4, 4, inner_nc, outer_nc)  up-conv weights [phase, tap, ci, co]
# Output:
#   out_ref  : (1, 4, Ho, Wo, Cin+outer_nc)  phase-major result,
#              out[ph=2*py+px, a, b, :Cin]  = x[2a+py, 2b+px, :]   (skip connection)
#              out[ph,          a, b, Cin:] = y[2a+py, 2b+px, :]
# Scratch:
#   hpad_ref : (Ho+2, Wo+2, inner_nc) VMEM — zero-padded ReLU(h), never written to HBM.
# ----------------------------------------------------------------------------
def _unet_innermost_kernel(xpar_ref, wd_ref, wu_ref, out_ref, hpad_ref):
    Hp, Wp = xpar_ref.shape[1], xpar_ref.shape[2]
    Ho, Wo = Hp - 1, Wp - 1
    cin = xpar_ref.shape[3] // 4
    inner_nc = hpad_ref.shape[2]

    x_raw = xpar_ref[0]                                   # (Hp, Wp, 4*Cin), raw input
    # LeakyReLU(0.1) applied ONCE to the un-expanded tile (act(0)==0, so the padded
    # zeros stay zero).
    xa = jnp.where(x_raw >= 0.0, x_raw, 0.1 * x_raw)

    # ---- down conv: stride-2 4x4 conv as 4 accumulated shifted dots (in-VMEM patches)
    h = None
    for s, (dy, dx) in enumerate(_SHIFTS):
        slab = xa[dy:dy + Ho, dx:dx + Wo, :].reshape(Ho * Wo, 4 * cin)
        term = jnp.dot(slab, wd_ref[s], preferred_element_type=jnp.float32)
        h = term if h is None else h + term                # (Ho*Wo, inner_nc)

    # ---- ReLU once, stage zero-padded h in VMEM scratch (h never hits HBM) ----
    h = jnp.maximum(h, 0.0)
    hpad_ref[...] = jnp.zeros_like(hpad_ref)
    hpad_ref[1:Ho + 1, 1:Wo + 1, :] = h.reshape(Ho, Wo, inner_nc)

    # ---- up conv: 4-phase decomposition of the stride-2 transposed conv ----
    # y[2a+py, 2b+px, co] = sum_{dy,dx,ci} hpad[a+py+dy, b+px+dx, ci]
    #                                      * W_up[ci, co, 3-py-2dy, 3-px-2dx]
    for py in (0, 1):
        for px in (0, 1):
            ph = 2 * py + px
            y_ph = None
            for t, (dy, dx) in enumerate(_SHIFTS):
                tap = hpad_ref[py + dy:py + dy + Ho,
                               px + dx:px + dx + Wo, :].reshape(Ho * Wo, inner_nc)
                term = jnp.dot(tap, wu_ref[ph, t],
                               preferred_element_type=jnp.float32)
                y_ph = term if y_ph is None else y_ph + term
            y_ph = y_ph.reshape(Ho, Wo, wu_ref.shape[3])

            # skip connection fused here: the raw (un-activated) x pixels of this
            # output phase are a contiguous slab of the parity-packed input.
            par = 2 * (1 - py) + (1 - px)
            x_ph = x_raw[py:py + Ho, px:px + Wo, par * cin:(par + 1) * cin]

            out_ref[0, ph, :, :, :cin] = x_ph
            out_ref[0, ph, :, :, cin:] = y_ph


# ----------------------------------------------------------------------------
# Wrapper: bytes-neutral boundary shuffles + weight packing + pallas_call.
#   x:      (N, input_nc, H, W)        NCHW, as PyTorch
#   w_down: (inner_nc, input_nc, 4, 4) nn.Conv2d weight (OIHW)
#   w_up:   (inner_nc, outer_nc, 4, 4) nn.ConvTranspose2d weight (I O H W)
# ----------------------------------------------------------------------------
def unet_innermost_forward(x_nchw, w_down, w_up):
    N, Cin, H, W = x_nchw.shape
    assert H % 2 == 0 and W % 2 == 0
    inner_nc = w_down.shape[0]
    outer_nc = w_up.shape[1]
    Ho, Wo = H // 2, W // 2
    Hp, Wp = Ho + 1, Wo + 1
    Ctot = Cin + outer_nc

    # --- input: single layout pass  NCHW -> pad(1) -> parity-packed NHWC -------------
    x_nhwc = jnp.transpose(x_nchw, (0, 2, 3, 1))
    xpad = jnp.pad(x_nhwc, ((0, 0), (1, 1), (1, 1), (0, 0)))
    xpar = (xpad.reshape(N, Hp, 2, Wp, 2, Cin)
                .transpose(0, 1, 3, 2, 4, 5)
                .reshape(N, Hp, Wp, 4 * Cin))

    # --- pack down-conv weights: one (4*Cin, inner_nc) block per (dy, dx) shift ------
    wd_t = jnp.transpose(w_down, (2, 3, 1, 0))            # (ky, kx, ci, co)
    wd_blocks = []
    for dy, dx in _SHIFTS:
        rows = [wd_t[2 * dy + p, 2 * dx + q] for p in (0, 1) for q in (0, 1)]
        wd_blocks.append(jnp.concatenate(rows, axis=0))    # (4*Cin, inner_nc)
    wd_all = jnp.stack(wd_blocks, axis=0)                  # (4, 4*Cin, inner_nc)

    # --- pack up-conv weights per output phase / tap ----------------------------------
    wu_t = jnp.transpose(w_up, (2, 3, 0, 1))               # (ky, kx, ci, co)
    wu_phases = []
    for py in (0, 1):
        for px in (0, 1):
            taps = [wu_t[3 - py - 2 * dy, 3 - px - 2 * dx] for dy, dx in _SHIFTS]
            wu_phases.append(jnp.stack(taps, axis=0))      # (4, inner_nc, outer_nc)
    wu_all = jnp.stack(wu_phases, axis=0)                  # (4, 4, inner_nc, outer_nc)

    out_par = pl.pallas_call(
        _unet_innermost_kernel,
        out_shape=jax.ShapeDtypeStruct((N, 4, Ho, Wo, Ctot), jnp.float32),
        grid=(N,),
        in_specs=[
            pl.BlockSpec((1, Hp, Wp, 4 * Cin), lambda n: (n, 0, 0, 0)),
            pl.BlockSpec((4, 4 * Cin, inner_nc), lambda n: (0, 0, 0)),
            pl.BlockSpec((4, 4, inner_nc, outer_nc), lambda n: (0, 0, 0, 0)),
        ],
        out_specs=pl.BlockSpec((1, 4, Ho, Wo, Ctot), lambda n: (n, 0, 0, 0, 0)),
        scratch_shapes=[pltpu.VMEM((Ho + 2, Wo + 2, inner_nc), jnp.float32)],
        compiler_params=pltpu.CompilerParams(
            dimension_semantics=("parallel",)),
    )(xpar, wd_all, wu_all)

    # --- output: single de-parity shuffle straight to NCHW (concat already done) -----
    out = (out_par.reshape(N, 2, 2, Ho, Wo, Ctot)
                  .transpose(0, 5, 3, 1, 4, 2)
                  .reshape(N, Ctot, H, W))
    return out


# ----------------------------------------------------------------------------
# Pure-JAX reference (lax convs) for numerical validation.
# ----------------------------------------------------------------------------
def _reference(x, w_down, w_up):
    h = jnp.where(x >= 0.0, x, 0.1 * x)
    h = lax.conv_general_dilated(
        h, w_down, window_strides=(2, 2), padding=[(1, 1), (1, 1)],
        dimension_numbers=("NCHW", "OIHW", "NCHW"),
        precision=lax.Precision.HIGHEST)
    h = jnp.maximum(h, 0.0)
    w_up_conv = jnp.transpose(w_up[:, :, ::-1, ::-1], (1, 0, 2, 3))
    h = lax.conv_general_dilated(
        h, w_up_conv, window_strides=(1, 1), padding=[(2, 2), (2, 2)],
        lhs_dilation=(2, 2),
        dimension_numbers=("NCHW", "OIHW", "NCHW"),
        precision=lax.Precision.HIGHEST)
    return jnp.concatenate([x, h], axis=1)


if __name__ == "__main__":
    # Small shapes consistent with the module: outer_nc = input_nc = 4, inner_nc = 8.
    N, outer_nc, inner_nc, H, W = 2, 4, 8, 16, 16
    input_nc = outer_nc  # input_nc=None branch of the module

    key = jax.random.PRNGKey(0)
    kx, kd, ku = jax.random.split(key, 3)
    x = jax.random.normal(kx, (N, input_nc, H, W), dtype=jnp.float32)
    w_down = 0.1 * jax.random.normal(kd, (inner_nc, input_nc, 4, 4), dtype=jnp.float32)
    w_up = 0.1 * jax.random.normal(ku, (inner_nc, outer_nc, 4, 4), dtype=jnp.float32)

    out = jax.jit(unet_innermost_forward)(x, w_down, w_up)
    out = jax.block_until_ready(out)
    assert out.shape == (N, input_nc + outer_nc, H, W), out.shape

    ref = jax.block_until_ready(_reference(x, w_down, w_up))
    np.testing.assert_allclose(np.asarray(out), np.asarray(ref),
                               rtol=1e-3, atol=1e-3)
    print("KERNEL_OK")
</pallas_src>

<mosaic_0001>
module attributes {stable_mosaic.version = 11 : i64} {
  func.func @_unet_innermost_kernel(%arg0: i32, %arg1: memref<1x9x9x16xf32, #tpu.memory_space<vmem>>, %arg2: memref<4x16x8xf32, #tpu.memory_space<vmem>>, %arg3: memref<4x4x8x4xf32, #tpu.memory_space<vmem>>, %arg4: memref<1x4x8x8x8xf32, #tpu.memory_space<vmem>>, %arg5: memref<10x10x8xf32, #tpu.memory_space<vmem>>) attributes {dimension_semantics = [#tpu.dimension_semantics<parallel>], iteration_bounds = array<i64: 2>, scalar_prefetch = 0 : i64, scratch_operands = 1 : i64, tpu.core_type = #tpu.core_type<tc>, window_params = [{transform_indices = @transform_0, window_bounds = array<i64: 1, 9, 9, 16>}, {pipeline_mode = #tpu.pipeline_mode<synchronous>, transform_indices = @transform_1, window_bounds = array<i64: 4, 16, 8>}, {pipeline_mode = #tpu.pipeline_mode<synchronous>, transform_indices = @transform_2, window_bounds = array<i64: 4, 4, 8, 4>}, {transform_indices = @transform_3, window_bounds = array<i64: 1, 4, 8, 8, 8>}]} {
    %c0 = arith.constant 0 : index
    %c0_0 = arith.constant 0 : index
    %c0_1 = arith.constant 0 : index
    %c0_2 = arith.constant 0 : index
    %0 = vector.load %arg1[%c0, %c0_0, %c0_1, %c0_2] : memref<1x9x9x16xf32, #tpu.memory_space<vmem>>, vector<1x9x9x16xf32>
    %1 = vector.shape_cast %0 : vector<1x9x9x16xf32> to vector<9x9x16xf32>
    %cst = arith.constant 0.000000e+00 : f32
    %2 = vector.broadcast %cst : f32 to vector<9x9x16xf32>
    %3 = arith.cmpf oge, %1, %2 : vector<9x9x16xf32>
    %cst_3 = arith.constant 1.000000e-01 : f32
    %4 = vector.broadcast %cst_3 : f32 to vector<9x9x16xf32>
    %5 = arith.mulf %4, %1 : vector<9x9x16xf32>
    %6 = arith.select %3, %1, %5 : vector<9x9x16xi1>, vector<9x9x16xf32>
    %7 = vector.extract_strided_slice %6 {offsets = [0, 0, 0], sizes = [8, 8, 16], strides = [1, 1, 1]} : vector<9x9x16xf32> to vector<8x8x16xf32>
    %8 = vector.shape_cast %7 : vector<8x8x16xf32> to vector<64x16xf32>
    %c0_4 = arith.constant 0 : index
    %c0_5 = arith.constant 0 : index
    %c0_6 = arith.constant 0 : index
    %9 = vector.load %arg2[%c0_4, %c0_5, %c0_6] : memref<4x16x8xf32, #tpu.memory_space<vmem>>, vector<1x16x8xf32>
    %10 = vector.shape_cast %9 : vector<1x16x8xf32> to vector<16x8xf32>
    %cst_7 = arith.constant dense<0.000000e+00> : vector<64x8xf32>
    %11 = tpu.matmul %8, %10, %cst_7 {dimension_numbers = #tpu.dot_dimension_numbers<[1], [0], [0], [1], [0, 0, 1, 1], [], []>} : vector<64x16xf32>, vector<16x8xf32>, vector<64x8xf32> -> vector<64x8xf32>
    %12 = vector.extract_strided_slice %6 {offsets = [0, 1, 0], sizes = [8, 8, 16], strides = [1, 1, 1]} : vector<9x9x16xf32> to vector<8x8x16xf32>
    %13 = vector.shape_cast %12 : vector<8x8x16xf32> to vector<64x16xf32>
    %c1 = arith.constant 1 : index
    %c0_8 = arith.constant 0 : index
    %c0_9 = arith.constant 0 : index
    %14 = vector.load %arg2[%c1, %c0_8, %c0_9] : memref<4x16x8xf32, #tpu.memory_space<vmem>>, vector<1x16x8xf32>
    %15 = vector.shape_cast %14 : vector<1x16x8xf32> to vector<16x8xf32>
    %cst_10 = arith.constant dense<0.000000e+00> : vector<64x8xf32>
    %16 = tpu.matmul %13, %15, %cst_10 {dimension_numbers = #tpu.dot_dimension_numbers<[1], [0], [0], [1], [0, 0, 1, 1], [], []>} : vector<64x16xf32>, vector<16x8xf32>, vector<64x8xf32> -> vector<64x8xf32>
    %17 = arith.addf %11, %16 : vector<64x8xf32>
    %18 = vector.extract_strided_slice %6 {offsets = [1, 0, 0], sizes = [8, 8, 16], strides = [1, 1, 1]} : vector<9x9x16xf32> to vector<8x8x16xf32>
    %19 = vector.shape_cast %18 : vector<8x8x16xf32> to vector<64x16xf32>
    %c2 = arith.constant 2 : index
    %c0_11 = arith.constant 0 : index
    %c0_12 = arith.constant 0 : index
    %20 = vector.load %arg2[%c2, %c0_11, %c0_12] : memref<4x16x8xf32, #tpu.memory_space<vmem>>, vector<1x16x8xf32>
    %21 = vector.shape_cast %20 : vector<1x16x8xf32> to vector<16x8xf32>
    %cst_13 = arith.constant dense<0.000000e+00> : vector<64x8xf32>
    %22 = tpu.matmul %19, %21, %cst_13 {dimension_numbers = #tpu.dot_dimension_numbers<[1], [0], [0], [1], [0, 0, 1, 1], [], []>} : vector<64x16xf32>, vector<16x8xf32>, vector<64x8xf32> -> vector<64x8xf32>
    %23 = arith.addf %17, %22 : vector<64x8xf32>
    %24 = vector.extract_strided_slice %6 {offsets = [1, 1, 0], sizes = [8, 8, 16], strides = [1, 1, 1]} : vector<9x9x16xf32> to vector<8x8x16xf32>
    %25 = vector.shape_cast %24 : vector<8x8x16xf32> to vector<64x16xf32>
    %c3 = arith.constant 3 : index
    %c0_14 = arith.constant 0 : index
    %c0_15 = arith.constant 0 : index
    %26 = vector.load %arg2[%c3, %c0_14, %c0_15] : memref<4x16x8xf32, #tpu.memory_space<vmem>>, vector<1x16x8xf32>
    %27 = vector.shape_cast %26 : vector<1x16x8xf32> to vector<16x8xf32>
    %cst_16 = arith.constant dense<0.000000e+00> : vector<64x8xf32>
    %28 = tpu.matmul %25, %27, %cst_16 {dimension_numbers = #tpu.dot_dimension_numbers<[1], [0], [0], [1], [0, 0, 1, 1], [], []>} : vector<64x16xf32>, vector<16x8xf32>, vector<64x8xf32> -> vector<64x8xf32>
    %29 = arith.addf %23, %28 : vector<64x8xf32>
    %cst_17 = arith.constant 0.000000e+00 : f32
    %30 = vector.broadcast %cst_17 : f32 to vector<64x8xf32>
    %31 = arith.maximumf %29, %30 : vector<64x8xf32>
    %cst_18 = arith.constant 0.000000e+00 : f32
    %32 = vector.broadcast %cst_18 : f32 to vector<10x10x8xf32>
    %c0_19 = arith.constant 0 : index
    %c0_20 = arith.constant 0 : index
    %c0_21 = arith.constant 0 : index
    %33 = vector.load %arg5[%c0_19, %c0_20, %c0_21] : memref<10x10x8xf32, #tpu.memory_space<vmem>>, vector<10x10x8xf32>
    tpu.vector_store %arg5[%c0_19, %c0_20, %c0_21], %32 {strides = array<i32>} : memref<10x10x8xf32, #tpu.memory_space<vmem>>, vector<10x10x8xf32>,
    %34 = vector.shape_cast %31 : vector<64x8xf32> to vector<8x8x8xf32>
    %c1_22 = arith.constant 1 : index
    %c1_23 = arith.constant 1 : index
    %c0_24 = arith.constant 0 : index
    %35 = vector.load %arg5[%c1_22, %c1_23, %c0_24] : memref<10x10x8xf32, #tpu.memory_space<vmem>>, vector<8x8x8xf32>
    tpu.vector_store %arg5[%c1_22, %c1_23, %c0_24], %34 {strides = array<i32>} : memref<10x10x8xf32, #tpu.memory_space<vmem>>, vector<8x8x8xf32>,
    %c0_25 = arith.constant 0 : index
    %c0_26 = arith.constant 0 : index
    %c0_27 = arith.constant 0 : index
    %36 = vector.load %arg5[%c0_25, %c0_26, %c0_27] : memref<10x10x8xf32, #tpu.memory_space<vmem>>, vector<8x8x8xf32>
    %37 = vector.shape_cast %36 : vector<8x8x8xf32> to vector<64x8xf32>
    %c0_28 = arith.constant 0 : index
    %c0_29 = arith.constant 0 : index
    %c0_30 = arith.constant 0 : index
    %c0_31 = arith.constant 0 : index
    %38 = vector.load %arg3[%c0_28, %c0_29, %c0_30, %c0_31] : memref<4x4x8x4xf32, #tpu.memory_space<vmem>>, vector<1x1x8x4xf32>
    %39 = vector.shape_cast %38 : vector<1x1x8x4xf32> to vector<8x4xf32>
    %cst_32 = arith.constant dense<0.000000e+00> : vector<64x4xf32>
    %40 = tpu.matmul %37, %39, %cst_32 {dimension_numbers = #tpu.dot_dimension_numbers<[1], [0], [0], [1], [0, 0, 1, 1], [], []>} : vector<64x8xf32>, vector<8x4xf32>, vector<64x4xf32> -> vector<64x4xf32>
    %c0_33 = arith.constant 0 : index
    %c1_34 = arith.constant 1 : index
    %c0_35 = arith.constant 0 : index
    %41 = vector.load %arg5[%c0_33, %c1_34, %c0_35] : memref<10x10x8xf32, #tpu.memory_space<vmem>>, vector<8x8x8xf32>
    %42 = vector.shape_cast %41 : vector<8x8x8xf32> to vector<64x8xf32>
    %c0_36 = arith.constant 0 : index
    %c1_37 = arith.constant 1 : index
    %c0_38 = arith.constant 0 : index
    %c0_39 = arith.constant 0 : index
    %43 = vector.load %arg3[%c0_36, %c1_37, %c0_38, %c0_39] : memref<4x4x8x4xf32, #tpu.memory_space<vmem>>, vector<1x1x8x4xf32>
    %44 = vector.shape_cast %43 : vector<1x1x8x4xf32> to vector<8x4xf32>
    %cst_40 = arith.constant dense<0.000000e+00> : vector<64x4xf32>
    %45 = tpu.matmul %42, %44, %cst_40 {dimension_numbers = #tpu.dot_dimension_numbers<[1], [0], [0], [1], [0, 0, 1, 1], [], []>} : vector<64x8xf32>, vector<8x4xf32>, vector<64x4xf32> -> vector<64x4xf32>
    %46 = arith.addf %40, %45 : vector<64x4xf32>
    %c1_41 = arith.constant 1 : index
    %c0_42 = arith.constant 0 : index
    %c0_43 = arith.constant 0 : index
    %47 = vector.load %arg5[%c1_41, %c0_42, %c0_43] : memref<10x10x8xf32, #tpu.memory_space<vmem>>, vector<8x8x8xf32>
    %48 = vector.shape_cast %47 : vector<8x8x8xf32> to vector<64x8xf32>
    %c0_44 = arith.constant 0 : index
    %c2_45 = arith.constant 2 : index
    %c0_46 = arith.constant 0 : index
    %c0_47 = arith.constant 0 : index
    %49 = vector.load %arg3[%c0_44, %c2_45, %c0_46, %c0_47] : memref<4x4x8x4xf32, #tpu.memory_space<vmem>>, vector<1x1x8x4xf32>
    %50 = vector.shape_cast %49 : vector<1x1x8x4xf32> to vector<8x4xf32>
    %cst_48 = arith.constant dense<0.000000e+00> : vector<64x4xf32>
    %51 = tpu.matmul %48, %50, %cst_48 {dimension_numbers = #tpu.dot_dimension_numbers<[1], [0], [0], [1], [0, 0, 1, 1], [], []>} : vector<64x8xf32>, vector<8x4xf32>, vector<64x4xf32> -> vector<64x4xf32>
    %52 = arith.addf %46, %51 : vector<64x4xf32>
    %c1_49 = arith.constant 1 : index
    %c1_50 = arith.constant 1 : index
    %c0_51 = arith.constant 0 : index
    %53 = vector.load %arg5[%c1_49, %c1_50, %c0_51] : memref<10x10x8xf32, #tpu.memory_space<vmem>>, vector<8x8x8xf32>
    %54 = vector.shape_cast %53 : vector<8x8x8xf32> to vector<64x8xf32>
    %c0_52 = arith.constant 0 : index
    %c3_53 = arith.constant 3 : index
    %c0_54 = arith.constant 0 : index
    %c0_55 = arith.constant 0 : index
    %55 = vector.load %arg3[%c0_52, %c3_53, %c0_54, %c0_55] : memref<4x4x8x4xf32, #tpu.memory_space<vmem>>, vector<1x1x8x4xf32>
    %56 = vector.shape_cast %55 : vector<1x1x8x4xf32> to vector<8x4xf32>
    %cst_56 = arith.constant dense<0.000000e+00> : vector<64x4xf32>
    %57 = tpu.matmul %54, %56, %cst_56 {dimension_numbers = #tpu.dot_dimension_numbers<[1], [0], [0], [1], [0, 0, 1, 1], [], []>} : vector<64x8xf32>, vector<8x4xf32>, vector<64x4xf32> -> vector<64x4xf32>
    %58 = arith.addf %52, %57 : vector<64x4xf32>
    %59 = vector.shape_cast %58 : vector<64x4xf32> to vector<8x8x4xf32>
    %60 = vector.extract_strided_slice %1 {offsets = [0, 0, 12], sizes = [8, 8, 4], strides = [1, 1, 1]} : vector<9x9x16xf32> to vector<8x8x4xf32>
    %c0_57 = arith.constant 0 : index
    %c0_58 = arith.constant 0 : index
    %c0_59 = arith.constant 0 : index
    %c0_60 = arith.constant 0 : index
    %c0_61 = arith.constant 0 : index
    %61 = vector.load %arg4[%c0_57, %c0_58, %c0_59, %c0_60, %c0_61] : memref<1x4x8x8x8xf32, #tpu.memory_space<vmem>>, vector<1x1x8x8x4xf32>
    %62 = vector.shape_cast %61 : vector<1x1x8x8x4xf32> to vector<8x8x4xf32>
    %63 = vector.shape_cast %60 : vector<8x8x4xf32> to vector<1x1x8x8x4xf32>
    tpu.vector_store %arg4[%c0_57, %c0_58, %c0_59, %c0_60, %c0_61], %63 {strides = array<i32>} : memref<1x4x8x8x8xf32, #tpu.memory_space<vmem>>, vector<1x1x8x8x4xf32>,
    %c0_62 = arith.constant 0 : index
    %c0_63 = arith.constant 0 : index
    %c0_64 = arith.constant 0 : index
    %c0_65 = arith.constant 0 : index
    %c4 = arith.constant 4 : index
    %64 = vector.load %arg4[%c0_62, %c0_63, %c0_64, %c0_65, %c4] : memref<1x4x8x8x8xf32, #tpu.memory_space<vmem>>, vector<1x1x8x8x4xf32>
    %65 = vector.shape_cast %64 : vector<1x1x8x8x4xf32> to vector<8x8x4xf32>
    %66 = vector.shape_cast %59 : vector<8x8x4xf32> to vector<1x1x8x8x4xf32>
    tpu.vector_store %arg4[%c0_62, %c0_63, %c0_64, %c0_65, %c4], %66 {strides = array<i32>} : memref<1x4x8x8x8xf32, #tpu.memory_space<vmem>>, vector<1x1x8x8x4xf32>,
    %c0_66 = arith.constant 0 : index
    %c1_67 = arith.constant 1 : index
    %c0_68 = arith.constant 0 : index
    %67 = vector.load %arg5[%c0_66, %c1_67, %c0_68] : memref<10x10x8xf32, #tpu.memory_space<vmem>>, vector<8x8x8xf32>
    %68 = vector.shape_cast %67 : vector<8x8x8xf32> to vector<64x8xf32>
    %c1_69 = arith.constant 1 : index
    %c0_70 = arith.constant 0 : index
    %c0_71 = arith.constant 0 : index
    %c0_72 = arith.constant 0 : index
    %69 = vector.load %arg3[%c1_69, %c0_70, %c0_71, %c0_72] : memref<4x4x8x4xf32, #tpu.memory_space<vmem>>, vector<1x1x8x4xf32>
    %70 = vector.shape_cast %69 : vector<1x1x8x4xf32> to vector<8x4xf32>
    %cst_73 = arith.constant dense<0.000000e+00> : vector<64x4xf32>
    %71 = tpu.matmul %68, %70, %cst_73 {dimension_numbers = #tpu.dot_dimension_numbers<[1], [0], [0], [1], [0, 0, 1, 1], [], []>} : vector<64x8xf32>, vector<8x4xf32>, vector<64x4xf32> -> vector<64x4xf32>
    %c0_74 = arith.constant 0 : index
    %c2_75 = arith.constant 2 : index
    %c0_76 = arith.constant 0 : index
    %72 = vector.load %arg5[%c0_74, %c2_75, %c0_76] : memref<10x10x8xf32, #tpu.memory_space<vmem>>, vector<8x8x8xf32>
    %73 = vector.shape_cast %72 : vector<8x8x8xf32> to vector<64x8xf32>
    %c1_77 = arith.constant 1 : index
    %c1_78 = arith.constant 1 : index
    %c0_79 = arith.constant 0 : index
    %c0_80 = arith.constant 0 : index
    %74 = vector.load %arg3[%c1_77, %c1_78, %c0_79, %c0_80] : memref<4x4x8x4xf32, #tpu.memory_space<vmem>>, vector<1x1x8x4xf32>
    %75 = vector.shape_cast %74 : vector<1x1x8x4xf32> to vector<8x4xf32>
    %cst_81 = arith.constant dense<0.000000e+00> : vector<64x4xf32>
    %76 = tpu.matmul %73, %75, %cst_81 {dimension_numbers = #tpu.dot_dimension_numbers<[1], [0], [0], [1], [0, 0, 1, 1], [], []>} : vector<64x8xf32>, vector<8x4xf32>, vector<64x4xf32> -> vector<64x4xf32>
    %77 = arith.addf %71, %76 : vector<64x4xf32>
    %c1_82 = arith.constant 1 : index
    %c1_83 = arith.constant 1 : index
    %c0_84 = arith.constant 0 : index
    %78 = vector.load %arg5[%c1_82, %c1_83, %c0_84] : memref<10x10x8xf32, #tpu.memory_space<vmem>>, vector<8x8x8xf32>
    %79 = vector.shape_cast %78 : vector<8x8x8xf32> to vector<64x8xf32>
    %c1_85 = arith.constant 1 : index
    %c2_86 = arith.constant 2 : index
    %c0_87 = arith.constant 0 : index
    %c0_88 = arith.constant 0 : index
    %80 = vector.load %arg3[%c1_85, %c2_86, %c0_87, %c0_88] : memref<4x4x8x4xf32, #tpu.memory_space<vmem>>, vector<1x1x8x4xf32>
    %81 = vector.shape_cast %80 : vector<1x1x8x4xf32> to vector<8x4xf32>
    %cst_89 = arith.constant dense<0.000000e+00> : vector<64x4xf32>
    %82 = tpu.matmul %79, %81, %cst_89 {dimension_numbers = #tpu.dot_dimension_numbers<[1], [0], [0], [1], [0, 0, 1, 1], [], []>} : vector<64x8xf32>, vector<8x4xf32>, vector<64x4xf32> -> vector<64x4xf32>
    %83 = arith.addf %77, %82 : vector<64x4xf32>
    %c1_90 = arith.constant 1 : index
    %c2_91 = arith.constant 2 : index
    %c0_92 = arith.constant 0 : index
    %84 = vector.load %arg5[%c1_90, %c2_91, %c0_92] : memref<10x10x8xf32, #tpu.memory_space<vmem>>, vector<8x8x8xf32>
    %85 = vector.shape_cast %84 : vector<8x8x8xf32> to vector<64x8xf32>
    %c1_93 = arith.constant 1 : index
    %c3_94 = arith.constant 3 : index
    %c0_95 = arith.constant 0 : index
    %c0_96 = arith.constant 0 : index
    %86 = vector.load %arg3[%c1_93, %c3_94, %c0_95, %c0_96] : memref<4x4x8x4xf32, #tpu.memory_space<vmem>>, vector<1x1x8x4xf32>
    %87 = vector.shape_cast %86 : vector<1x1x8x4xf32> to vector<8x4xf32>
    %cst_97 = arith.constant dense<0.000000e+00> : vector<64x4xf32>
    %88 = tpu.matmul %85, %87, %cst_97 {dimension_numbers = #tpu.dot_dimension_numbers<[1], [0], [0], [1], [0, 0, 1, 1], [], []>} : vector<64x8xf32>, vector<8x4xf32>, vector<64x4xf32> -> vector<64x4xf32>
    %89 = arith.addf %83, %88 : vector<64x4xf32>
    %90 = vector.shape_cast %89 : vector<64x4xf32> to vector<8x8x4xf32>
    %91 = vector.extract_strided_slice %1 {offsets = [0, 1, 8], sizes = [8, 8, 4], strides = [1, 1, 1]} : vector<9x9x16xf32> to vector<8x8x4xf32>
    %c0_98 = arith.constant 0 : index
    %c1_99 = arith.constant 1 : index
    %c0_100 = arith.constant 0 : index
    %c0_101 = arith.constant 0 : index
    %c0_102 = arith.constant 0 : index
    %92 = vector.load %arg4[%c0_98, %c1_99, %c0_100, %c0_101, %c0_102] : memref<1x4x8x8x8xf32, #tpu.memory_space<vmem>>, vector<1x1x8x8x4xf32>
    %93 = vector.shape_cast %92 : vector<1x1x8x8x4xf32> to vector<8x8x4xf32>
    %94 = vector.shape_cast %91 : vector<8x8x4xf32> to vector<1x1x8x8x4xf32>
    tpu.vector_store %arg4[%c0_98, %c1_99, %c0_100, %c0_101, %c0_102], %94 {strides = array<i32>} : memref<1x4x8x8x8xf32, #tpu.memory_space<vmem>>, vector<1x1x8x8x4xf32>,
    %c0_103 = arith.constant 0 : index
    %c1_104 = arith.constant 1 : index
    %c0_105 = arith.constant 0 : index
    %c0_106 = arith.constant 0 : index
    %c4_107 = arith.constant 4 : index
    %95 = vector.load %arg4[%c0_103, %c1_104, %c0_105, %c0_106, %c4_107] : memref<1x4x8x8x8xf32, #tpu.memory_space<vmem>>, vector<1x1x8x8x4xf32>
    %96 = vector.shape_cast %95 : vector<1x1x8x8x4xf32> to vector<8x8x4xf32>
    %97 = vector.shape_cast %90 : vector<8x8x4xf32> to vector<1x1x8x8x4xf32>
    tpu.vector_store %arg4[%c0_103, %c1_104, %c0_105, %c0_106, %c4_107], %97 {strides = array<i32>} : memref<1x4x8x8x8xf32, #tpu.memory_space<vmem>>, vector<1x1x8x8x4xf32>,
    %c1_108 = arith.constant 1 : index
    %c0_109 = arith.constant 0 : index
    %c0_110 = arith.constant 0 : index
    %98 = vector.load %arg5[%c1_108, %c0_109, %c0_110] : memref<10x10x8xf32, #tpu.memory_space<vmem>>, vector<8x8x8xf32>
    %99 = vector.shape_cast %98 : vector<8x8x8xf32> to vector<64x8xf32>
    %c2_111 = arith.constant 2 : index
    %c0_112 = arith.constant 0 : index
    %c0_113 = arith.constant 0 : index
    %c0_114 = arith.constant 0 : index
    %100 = vector.load %arg3[%c2_111, %c0_112, %c0_113, %c0_114] : memref<4x4x8x4xf32, #tpu.memory_space<vmem>>, vector<1x1x8x4xf32>
    %101 = vector.shape_cast %100 : vector<1x1x8x4xf32> to vector<8x4xf32>
    %cst_115 = arith.constant dense<0.000000e+00> : vector<64x4xf32>
    %102 = tpu.matmul %99, %101, %cst_115 {dimension_numbers = #tpu.dot_dimension_numbers<[1], [0], [0], [1], [0, 0, 1, 1], [], []>} : vector<64x8xf32>, vector<8x4xf32>, vector<64x4xf32> -> vector<64x4xf32>
    %c1_116 = arith.constant 1 : index
    %c1_117 = arith.constant 1 : index
    %c0_118 = arith.constant 0 : index
    %103 = vector.load %arg5[%c1_116, %c1_117, %c0_118] : memref<10x10x8xf32, #tpu.memory_space<vmem>>, vector<8x8x8xf32>
    %104 = vector.shape_cast %103 : vector<8x8x8xf32> to vector<64x8xf32>
    %c2_119 = arith.constant 2 : index
    %c1_120 = arith.constant 1 : index
    %c0_121 = arith.constant 0 : index
    %c0_122 = arith.constant 0 : index
    %105 = vector.load %arg3[%c2_119, %c1_120, %c0_121, %c0_122] : memref<4x4x8x4xf32, #tpu.memory_space<vmem>>, vector<1x1x8x4xf32>
    %106 = vector.shape_cast %105 : vector<1x1x8x4xf32> to vector<8x4xf32>
    %cst_123 = arith.constant dense<0.000000e+00> : vector<64x4xf32>
    %107 = tpu.matmul %104, %106, %cst_123 {dimension_numbers = #tpu.dot_dimension_numbers<[1], [0], [0], [1], [0, 0, 1, 1], [], []>} : vector<64x8xf32>, vector<8x4xf32>, vector<64x4xf32> -> vector<64x4xf32>
    %108 = arith.addf %102, %107 : vector<64x4xf32>
    %c2_124 = arith.constant 2 : index
    %c0_125 = arith.constant 0 : index
    %c0_126 = arith.constant 0 : index
    %109 = vector.load %arg5[%c2_124, %c0_125, %c0_126] : memref<10x10x8xf32, #tpu.memory_space<vmem>>, vector<8x8x8xf32>
    %110 = vector.shape_cast %109 : vector<8x8x8xf32> to vector<64x8xf32>
    %c2_127 = arith.constant 2 : index
    %c2_128 = arith.constant 2 : index
    %c0_129 = arith.constant 0 : index
    %c0_130 = arith.constant 0 : index
    %111 = vector.load %arg3[%c2_127, %c2_128, %c0_129, %c0_130] : memref<4x4x8x4xf32, #tpu.memory_space<vmem>>, vector<1x1x8x4xf32>
    %112 = vector.shape_cast %111 : vector<1x1x8x4xf32> to vector<8x4xf32>
    %cst_131 = arith.constant dense<0.000000e+00> : vector<64x4xf32>
    %113 = tpu.matmul %110, %112, %cst_131 {dimension_numbers = #tpu.dot_dimension_numbers<[1], [0], [0], [1], [0, 0, 1, 1], [], []>} : vector<64x8xf32>, vector<8x4xf32>, vector<64x4xf32> -> vector<64x4xf32>
    %114 = arith.addf %108, %113 : vector<64x4xf32>
    %c2_132 = arith.constant 2 : index
    %c1_133 = arith.constant 1 : index
    %c0_134 = arith.constant 0 : index
    %115 = vector.load %arg5[%c2_132, %c1_133, %c0_134] : memref<10x10x8xf32, #tpu.memory_space<vmem>>, vector<8x8x8xf32>
    %116 = vector.shape_cast %115 : vector<8x8x8xf32> to vector<64x8xf32>
    %c2_135 = arith.constant 2 : index
    %c3_136 = arith.constant 3 : index
    %c0_137 = arith.constant 0 : index
    %c0_138 = arith.constant 0 : index
    %117 = vector.load %arg3[%c2_135, %c3_136, %c0_137, %c0_138] : memref<4x4x8x4xf32, #tpu.memory_space<vmem>>, vector<1x1x8x4xf32>
    %118 = vector.shape_cast %117 : vector<1x1x8x4xf32> to vector<8x4xf32>
    %cst_139 = arith.constant dense<0.000000e+00> : vector<64x4xf32>
    %119 = tpu.matmul %116, %118, %cst_139 {dimension_numbers = #tpu.dot_dimension_numbers<[1], [0], [0], [1], [0, 0, 1, 1], [], []>} : vector<64x8xf32>, vector<8x4xf32>, vector<64x4xf32> -> vector<64x4xf32>
    %120 = arith.addf %114, %119 : vector<64x4xf32>
    %121 = vector.shape_cast %120 : vector<64x4xf32> to vector<8x8x4xf32>
    %122 = vector.extract_strided_slice %1 {offsets = [1, 0, 4], sizes = [8, 8, 4], strides = [1, 1, 1]} : vector<9x9x16xf32> to vector<8x8x4xf32>
    %c0_140 = arith.constant 0 : index
    %c2_141 = arith.constant 2 : index
    %c0_142 = arith.constant 0 : index
    %c0_143 = arith.constant 0 : index
    %c0_144 = arith.constant 0 : index
    %123 = vector.load %arg4[%c0_140, %c2_141, %c0_142, %c0_143, %c0_144] : memref<1x4x8x8x8xf32, #tpu.memory_space<vmem>>, vector<1x1x8x8x4xf32>
    %124 = vector.shape_cast %123 : vector<1x1x8x8x4xf32> to vector<8x8x4xf32>
    %125 = vector.shape_cast %122 : vector<8x8x4xf32> to vector<1x1x8x8x4xf32>
    tpu.vector_store %arg4[%c0_140, %c2_141, %c0_142, %c0_143, %c0_144], %125 {strides = array<i32>} : memref<1x4x8x8x8xf32, #tpu.memory_space<vmem>>, vector<1x1x8x8x4xf32>,
    %c0_145 = arith.constant 0 : index
    %c2_146 = arith.constant 2 : index
    %c0_147 = arith.constant 0 : index
    %c0_148 = arith.constant 0 : index
    %c4_149 = arith.constant 4 : index
    %126 = vector.load %arg4[%c0_145, %c2_146, %c0_147, %c0_148, %c4_149] : memref<1x4x8x8x8xf32, #tpu.memory_space<vmem>>, vector<1x1x8x8x4xf32>
    %127 = vector.shape_cast %126 : vector<1x1x8x8x4xf32> to vector<8x8x4xf32>
    %128 = vector.shape_cast %121 : vector<8x8x4xf32> to vector<1x1x8x8x4xf32>
    tpu.vector_store %arg4[%c0_145, %c2_146, %c0_147, %c0_148, %c4_149], %128 {strides = array<i32>} : memref<1x4x8x8x8xf32, #tpu.memory_space<vmem>>, vector<1x1x8x8x4xf32>,
    %c1_150 = arith.constant 1 : index
    %c1_151 = arith.constant 1 : index
    %c0_152 = arith.constant 0 : index
    %129 = vector.load %arg5[%c1_150, %c1_151, %c0_152] : memref<10x10x8xf32, #tpu.memory_space<vmem>>, vector<8x8x8xf32>
    %130 = vector.shape_cast %129 : vector<8x8x8xf32> to vector<64x8xf32>
    %c3_153 = arith.constant 3 : index
    %c0_154 = arith.constant 0 : index
    %c0_155 = arith.constant 0 : index
    %c0_156 = arith.constant 0 : index
    %131 = vector.load %arg3[%c3_153, %c0_154, %c0_155, %c0_156] : memref<4x4x8x4xf32, #tpu.memory_space<vmem>>, vector<1x1x8x4xf32>
    %132 = vector.shape_cast %131 : vector<1x1x8x4xf32> to vector<8x4xf32>
    %cst_157 = arith.constant dense<0.000000e+00> : vector<64x4xf32>
    %133 = tpu.matmul %130, %132, %cst_157 {dimension_numbers = #tpu.dot_dimension_numbers<[1], [0], [0], [1], [0, 0, 1, 1], [], []>} : vector<64x8xf32>, vector<8x4xf32>, vector<64x4xf32> -> vector<64x4xf32>
    %c1_158 = arith.constant 1 : index
    %c2_159 = arith.constant 2 : index
    %c0_160 = arith.constant 0 : index
    %134 = vector.load %arg5[%c1_158, %c2_159, %c0_160] : memref<10x10x8xf32, #tpu.memory_space<vmem>>, vector<8x8x8xf32>
    %135 = vector.shape_cast %134 : vector<8x8x8xf32> to vector<64x8xf32>
    %c3_161 = arith.constant 3 : index
    %c1_162 = arith.constant 1 : index
    %c0_163 = arith.constant 0 : index
    %c0_164 = arith.constant 0 : index
    %136 = vector.load %arg3[%c3_161, %c1_162, %c0_163, %c0_164] : memref<4x4x8x4xf32, #tpu.memory_space<vmem>>, vector<1x1x8x4xf32>
    %137 = vector.shape_cast %136 : vector<1x1x8x4xf32> to vector<8x4xf32>
    %cst_165 = arith.constant dense<0.000000e+00> : vector<64x4xf32>
    %138 = tpu.matmul %135, %137, %cst_165 {dimension_numbers = #tpu.dot_dimension_numbers<[1], [0], [0], [1], [0, 0, 1, 1], [], []>} : vector<64x8xf32>, vector<8x4xf32>, vector<64x4xf32> -> vector<64x4xf32>
    %139 = arith.addf %133, %138 : vector<64x4xf32>
    %c2_166 = arith.constant 2 : index
    %c1_167 = arith.constant 1 : index
    %c0_168 = arith.constant 0 : index
    %140 = vector.load %arg5[%c2_166, %c1_167, %c0_168] : memref<10x10x8xf32, #tpu.memory_space<vmem>>, vector<8x8x8xf32>
    %141 = vector.shape_cast %140 : vector<8x8x8xf32> to vector<64x8xf32>
    %c3_169 = arith.constant 3 : index
    %c2_170 = arith.constant 2 : index
    %c0_171 = arith.constant 0 : index
    %c0_172 = arith.constant 0 : index
    %142 = vector.load %arg3[%c3_169, %c2_170, %c0_171, %c0_172] : memref<4x4x8x4xf32, #tpu.memory_space<vmem>>, vector<1x1x8x4xf32>
    %143 = vector.shape_cast %142 : vector<1x1x8x4xf32> to vector<8x4xf32>
    %cst_173 = arith.constant dense<0.000000e+00> : vector<64x4xf32>
    %144 = tpu.matmul %141, %143, %cst_173 {dimension_numbers = #tpu.dot_dimension_numbers<[1], [0], [0], [1], [0, 0, 1, 1], [], []>} : vector<64x8xf32>, vector<8x4xf32>, vector<64x4xf32> -> vector<64x4xf32>
    %145 = arith.addf %139, %144 : vector<64x4xf32>
    %c2_174 = arith.constant 2 : index
    %c2_175 = arith.constant 2 : index
    %c0_176 = arith.constant 0 : index
    %146 = vector.load %arg5[%c2_174, %c2_175, %c0_176] : memref<10x10x8xf32, #tpu.memory_space<vmem>>, vector<8x8x8xf32>
    %147 = vector.shape_cast %146 : vector<8x8x8xf32> to vector<64x8xf32>
    %c3_177 = arith.constant 3 : index
    %c3_178 = arith.constant 3 : index
    %c0_179 = arith.constant 0 : index
    %c0_180 = arith.constant 0 : index
    %148 = vector.load %arg3[%c3_177, %c3_178, %c0_179, %c0_180] : memref<4x4x8x4xf32, #tpu.memory_space<vmem>>, vector<1x1x8x4xf32>
    %149 = vector.shape_cast %148 : vector<1x1x8x4xf32> to vector<8x4xf32>
    %cst_181 = arith.constant dense<0.000000e+00> : vector<64x4xf32>
    %150 = tpu.matmul %147, %149, %cst_181 {dimension_numbers = #tpu.dot_dimension_numbers<[1], [0], [0], [1], [0, 0, 1, 1], [], []>} : vector<64x8xf32>, vector<8x4xf32>, vector<64x4xf32> -> vector<64x4xf32>
    %151 = arith.addf %145, %150 : vector<64x4xf32>
    %152 = vector.shape_cast %151 : vector<64x4xf32> to vector<8x8x4xf32>
    %153 = vector.extract_strided_slice %1 {offsets = [1, 1, 0], sizes = [8, 8, 4], strides = [1, 1, 1]} : vector<9x9x16xf32> to vector<8x8x4xf32>
    %c0_182 = arith.constant 0 : index
    %c3_183 = arith.constant 3 : index
    %c0_184 = arith.constant 0 : index
    %c0_185 = arith.constant 0 : index
    %c0_186 = arith.constant 0 : index
    %154 = vector.load %arg4[%c0_182, %c3_183, %c0_184, %c0_185, %c0_186] : memref<1x4x8x8x8xf32, #tpu.memory_space<vmem>>, vector<1x1x8x8x4xf32>
    %155 = vector.shape_cast %154 : vector<1x1x8x8x4xf32> to vector<8x8x4xf32>
    %156 = vector.shape_cast %153 : vector<8x8x4xf32> to vector<1x1x8x8x4xf32>
    tpu.vector_store %arg4[%c0_182, %c3_183, %c0_184, %c0_185, %c0_186], %156 {strides = array<i32>} : memref<1x4x8x8x8xf32, #tpu.memory_space<vmem>>, vector<1x1x8x8x4xf32>,
    %c0_187 = arith.constant 0 : index
    %c3_188 = arith.constant 3 : index
    %c0_189 = arith.constant 0 : index
    %c0_190 = arith.constant 0 : index
    %c4_191 = arith.constant 4 : index
    %157 = vector.load %arg4[%c0_187, %c3_188, %c0_189, %c0_190, %c4_191] : memref<1x4x8x8x8xf32, #tpu.memory_space<vmem>>, vector<1x1x8x8x4xf32>
    %158 = vector.shape_cast %157 : vector<1x1x8x8x4xf32> to vector<8x8x4xf32>
    %159 = vector.shape_cast %152 : vector<8x8x4xf32> to vector<1x1x8x8x4xf32>
    tpu.vector_store %arg4[%c0_187, %c3_188, %c0_189, %c0_190, %c4_191], %159 {strides = array<i32>} : memref<1x4x8x8x8xf32, #tpu.memory_space<vmem>>, vector<1x1x8x8x4xf32>,
    return
  }
  func.func @transform_0(%arg0: i32) -> (i32, i32, i32, i32) {
    %c0_i32 = arith.constant 0 : i32
    %c0_i32_0 = arith.constant 0 : i32
    %c0_i32_1 = arith.constant 0 : i32
    %c0_i32_2 = arith.constant 0 : i32
    return %arg0, %c0_i32, %c0_i32_0, %c0_i32_1 : i32, i32, i32, i32
  }
  func.func @transform_1(%arg0: i32) -> (i32, i32, i32) {
    %c0_i32 = arith.constant 0 : i32
    %c0_i32_0 = arith.constant 0 : i32
    %c0_i32_1 = arith.constant 0 : i32
    %c0_i32_2 = arith.constant 0 : i32
    return %c0_i32, %c0_i32_0, %c0_i32_1 : i32, i32, i32
  }
  func.func @transform_2(%arg0: i32) -> (i32, i32, i32, i32) {
    %c0_i32 = arith.constant 0 : i32
    %c0_i32_0 = arith.constant 0 : i32
    %c0_i32_1 = arith.constant 0 : i32
    %c0_i32_2 = arith.constant 0 : i32
    %c0_i32_3 = arith.constant 0 : i32
    return %c0_i32, %c0_i32_0, %c0_i32_1, %c0_i32_2 : i32, i32, i32, i32
  }
  func.func @transform_3(%arg0: i32) -> (i32, i32, i32, i32, i32) {
    %c0_i32 = arith.constant 0 : i32
    %c0_i32_0 = arith.constant 0 : i32
    %c0_i32_1 = arith.constant 0 : i32
    %c0_i32_2 = arith.constant 0 : i32
    %c0_i32_3 = arith.constant 0 : i32
    return %arg0, %c0_i32, %c0_i32_0, %c0_i32_1, %c0_i32_2 : i32, i32, i32, i32, i32
  }
}

</mosaic_0001>

<llo_original>
// kernel: unet_innermost_forward.1
$region0: #{unet_innermost_forward.1}
  #allocation0 [shape = 'u32[]', space=smem, size = 0x4, offset = 0x4, fixed_abs, tag = 'smem constant byte address 0x4 - core index']
  #allocation1 [shape = 'u32[144,128]{1,0:T(1,128)}', space=vmem, size = 0x12000, scoped, tag = 'internal scratch']
  #allocation2 [shape = 'f32[10,10,8]{2,1,0:T(8,128)}', space=vmem, size = 0x14000, scoped, tag = 'scratch operand']
  %s0 = inlined_call_operand.vmem [shape: f32[2,9,9,16], index: 0, kind: input, shape index: {}]
  %s1 = inlined_call_operand.vmem [shape: f32[4,16,8], index: 1, kind: input, shape index: {}]
  %s2 = inlined_call_operand.vmem [shape: f32[4,4,8,4], index: 2, kind: input, shape index: {}]
  %s3 = inlined_call_operand.vmem [shape: f32[2,4,8,8,8], index: 3, kind: output, shape index: {}]
  %s4 = sld [smem:[#allocation0]]
  $region45: #{unet_innermost_forward.1} parent=0
    _
  %s6 = ssub.s32 1, %s4
  %s7 = scalar_select 0, %s6, %s4
  loop: start=0, step=1, limit=4
  $region2: #{unet_innermost_forward.1} parent=0 // loop_pre_header
    _
  $region3: #{unet_innermost_forward.1} parent=0 // loop_header
    %s9 = sphi 0, %s13
    %p10 = scmp.ge.s32.totalorder %s9, 4
    %s19 = sphi 0, %s21
    %s22 = sphi 0, %s19
    %s23 = sphi 0, %s22
    %s39 = sphi 0, %s23
    %s43 = sphi 0, %s43
    %s45 = sphi 0, %s43
    %s46 = sphi 0, %s45
    %s60 = sphi 0, %s46
    %s64 = sphi 0, %s64
    %s66 = sphi 0, %s64
    %s67 = sphi 0, %s66
    %s81 = sphi 0, %s67
    %s87 = sphi 0, %s89
    %s90 = sphi 0, %s87
    %s91 = sphi 0, %s90
    %s107 = sphi 0, %s91
  $region4: #{unet_innermost_forward.1} parent=0 // loop_header_branch
    %12 = sbr.rel (%p10) target = $region8
  $region5: #{unet_innermost_forward.1} parent=0 // loop_body
    %s14 = ssub.s32 %s9, 1
    %s15 = ssub.s32 %s9, 2
    %s16 = sadd.s32 %s9, 1
    %s17 = ssub.s32 %s9, %s16
    %p18 = scmp.eq.s32.totalorder %s17, 0
    %s20 = sadd.s32 %s19, 1
    %s21 = scalar_select %p18, %s19, %s20
    %p24 = pneg %p18
    %p25 = scmp.eq.s32.totalorder %s9, 1
    %p26 = por %p24, %p25
    %p27 = scmp.ne.s32.totalorder %s19, %s22
    %p28 = scmp.eq.s32.totalorder %s9, 0
    %p29 = por %p27, %p28
    %p30 = scmp.ne.s32.totalorder %s19, %s22
    %p31 = scmp.eq.s32.totalorder %s14, 1
    %p32 = por %p30, %p31
    %p33 = scmp.ne.s32.totalorder %s22, %s23
    %p34 = scmp.eq.s32.totalorder %s14, 0
    %p35 = por %p33, %p34
    %p36 = scmp.ne.s32.totalorder %s22, %s23
    %p37 = scmp.eq.s32.totalorder %s15, 1
    %p38 = por %p36, %p37
    %p40 = scmp.ne.s32.totalorder %s23, %s39
    %p41 = scmp.eq.s32.totalorder %s15, 0
    %p42 = por %p40, %p41
    %s44 = sadd.s32 %s43, 1
    %p47 = scmp.eq.s32.totalorder %s9, 1
    %p48 = scmp.ne.s32.totalorder %s43, %s45
    %p49 = scmp.eq.s32.totalorder %s9, 0
    %p50 = por %p48, %p49
    %p51 = scmp.ne.s32.totalorder %s43, %s45
    %p52 = scmp.eq.s32.totalorder %s14, 1
    %p53 = por %p51, %p52
    %p54 = scmp.ne.s32.totalorder %s45, %s46
    %p55 = scmp.eq.s32.totalorder %s14, 0
    %p56 = por %p54, %p55
    %p57 = scmp.ne.s32.totalorder %s45, %s46
    %p58 = scmp.eq.s32.totalorder %s15, 1
    %p59 = por %p57, %p58
    %p61 = scmp.ne.s32.totalorder %s46, %s60
    %p62 = scmp.eq.s32.totalorder %s15, 0
    %p63 = por %p61, %p62
    %s65 = sadd.s32 %s64, 1
    %p68 = scmp.eq.s32.totalorder %s9, 1
    %p69 = scmp.ne.s32.totalorder %s64, %s66
    %p70 = scmp.eq.s32.totalorder %s9, 0
    %p71 = por %p69, %p70
    %p72 = scmp.ne.s32.totalorder %s64, %s66
    %p73 = scmp.eq.s32.totalorder %s14, 1
    %p74 = por %p72, %p73
    %p75 = scmp.ne.s32.totalorder %s66, %s67
    %p76 = scmp.eq.s32.totalorder %s14, 0
    %p77 = por %p75, %p76
    %p78 = scmp.ne.s32.totalorder %s66, %s67
    %p79 = scmp.eq.s32.totalorder %s15, 1
    %p80 = por %p78, %p79
    %p82 = scmp.ne.s32.totalorder %s67, %s81
    %p83 = scmp.eq.s32.totalorder %s15, 0
    %p84 = por %p82, %p83
    %s85 = ssub.s32 %s9, %s16
    %p86 = scmp.eq.s32.totalorder %s85, 0
    %s88 = sadd.s32 %s87, 1
    %s89 = scalar_select %p86, %s87, %s88
    %p92 = pneg %p86
    %p93 = scmp.eq.s32.totalorder %s9, 1
    %p94 = por %p92, %p93
    %p95 = scmp.ne.s32.totalorder %s87, %s90
    %p96 = scmp.eq.s32.totalorder %s9, 0
    %p97 = por %p95, %p96
    %p98 = scmp.ne.s32.totalorder %s87, %s90
    %p99 = scmp.eq.s32.totalorder %s14, 1
    %p100 = por %p98, %p99
    %p101 = scmp.ne.s32.totalorder %s90, %s91
    %p102 = scmp.eq.s32.totalorder %s14, 0
    %p103 = por %p101, %p102
    %p104 = scmp.ne.s32.totalorder %s90, %s91
    %p105 = scmp.eq.s32.totalorder %s15, 1
    %p106 = por %p104, %p105
    %p108 = scmp.ne.s32.totalorder %s91, %s107
    %p109 = scmp.eq.s32.totalorder %s15, 0
    %p110 = por %p108, %p109
    %p111 = scmp.le.s32.totalorder 1, %s9
    %p112 = scmp.lt.s32.totalorder %s9, 3
    %p113 = pnand %p111, %p112
    %p114 = pneg %p113
    // Predicated region
    $region9: #{unet_innermost_forward.1} parent=5 // pred_check
      _
    $region10: #{unet_innermost_forward.1} parent=5 // pred_check_branch
      %116 = sbr.rel (%p113) target = $region12
    $region11: #{unet_innermost_forward.1} parent=5 // pred_region
      %s117 = ssub.s32 %s9, 1
      // Predicated region
      $region13: #{unet_innermost_forward.1} parent=11 // pred_check
        %p118 = pneg %p56
      $region14: #{unet_innermost_forward.1} parent=11 // pred_check_branch
        %120 = sbr.rel (%p118) target = $region16
      $region15: #{unet_innermost_forward.1} parent=11 // pred_region
        _
      $region16: #{unet_innermost_forward.1} parent=11 // pred_fallthru
        _
      // Predicated region
      $region17: #{unet_innermost_forward.1} parent=11 // pred_check
        %p121 = pneg %p77
      $region18: #{unet_innermost_forward.1} parent=11 // pred_check_branch
        %123 = sbr.rel (%p121) target = $region20
      $region19: #{unet_innermost_forward.1} parent=11 // pred_region
        _
      $region20: #{unet_innermost_forward.1} parent=11 // pred_fallthru
        _
    $region12: #{unet_innermost_forward.1} parent=5 // pred_fallthru
      _
    %p124 = scmp.lt.s32.totalorder %s9, 2
    // Predicated region
    $region21: #{unet_innermost_forward.1} parent=5 // pred_check
      %p125 = pneg %p124
    $region22: #{unet_innermost_forward.1} parent=5 // pred_check_branch
      %127 = sbr.rel (%p125) target = $region24
    $region23: #{unet_innermost_forward.1} parent=5 // pred_region
      // Predicated region
      $region25: #{unet_innermost_forward.1} parent=23 // pred_check
        %p128 = pneg %p29
      $region26: #{unet_innermost_forward.1} parent=23 // pred_check_branch
        %130 = sbr.rel (%p128) target = $region28
      $region27: #{unet_innermost_forward.1} parent=23 // pred_region
        %p131 = scmp.lt.s32.totalorder %s9, 1
        %s132 = scalar_select %p131, %s9, 1
        %s133 = smul.addr %s132, 18
        %s134 = smul.addr %s133, 8
        %s135 = scalar_lea.vmem %s0, %s134
      $region28: #{unet_innermost_forward.1} parent=23 // pred_fallthru
        _
    $region24: #{unet_innermost_forward.1} parent=5 // pred_fallthru
      _
    %p136 = scmp.le.s32.totalorder 1, %s9
    %p137 = scmp.lt.s32.totalorder %s9, 3
    %p138 = pnand %p136, %p137
    %p139 = pneg %p138
    // Predicated region
    $region29: #{unet_innermost_forward.1} parent=5 // pred_check
      _
    $region30: #{unet_innermost_forward.1} parent=5 // pred_check_branch
      %141 = sbr.rel (%p138) target = $region32
    $region31: #{unet_innermost_forward.1} parent=5 // pred_region
      %s142 = ssub.s32 %s9, 1
      %p143 = scmp.lt.s32.totalorder %s14, 1
      %s144 = scalar_select %p143, %s14, 1
      %s145 = smul.addr %s144, 18
      %s146 = smul.addr %s145, 8
      %s147 = scalar_lea.vmem %s0, %s146
      %p148 = pneg %p35
      %p149 = pneg %p32
      %p150 = pneg %p56
      %p151 = pneg %p53
      %p152 = pneg %p77
      %p153 = pneg %p74
      %p154 = pneg %p103
      %p155 = pneg %p100
      %p156 = scmp.lt.s32.totalorder %s14, 1
      %s157 = scalar_select %p156, %s14, 1
      %s158 = smul.addr %s157, 32
      %s159 = smul.addr %s158, 8
      %s160 = scalar_lea.vmem %s3, %s159
      %p161 = scmp.lt.s32.totalorder %s14, 1
      %s162 = scalar_select %p161, %s14, 1
      %s163 = smul.addr %s162, 18
      %s164 = smul.addr %s163, 8
      %s165 = scalar_lea.vmem %s0, %s164
      %p166 = scmp.lt.s32.totalorder %s14, 1
      %s167 = scalar_select %p166, %s14, 1
      %s168 = smul.addr %s167, 32
      %s169 = smul.addr %s168, 8
      %s170 = scalar_lea.vmem %s3, %s169
      %v171 = vld [vmem:[%s165] sm:$0xff]
      %v172 = vld [vmem:[%s165 + $0x8] sm:$0x1]
      %v173 = vld [vmem:[%s165 + $0x10] sm:$0xff]
      %v174 = vld [vmem:[%s165 + $0x18] sm:$0x1]
      %v175 = vld [vmem:[%s165 + $0x20] sm:$0xff]
      %v176 = vld [vmem:[%s165 + $0x28] sm:$0x1]
      %v177 = vld [vmem:[%s165 + $0x30] sm:$0xff]
      %v178 = vld [vmem:[%s165 + $0x38] sm:$0x1]
      %v179 = vld [vmem:[%s165 + $0x40] sm:$0xff]
      %v180 = vld [vmem:[%s165 + $0x48] sm:$0x1]
      %v181 = vld [vmem:[%s165 + $0x50] sm:$0xff]
      %v182 = vld [vmem:[%s165 + $0x58] sm:$0x1]
      %v183 = vld [vmem:[%s165 + $0x60] sm:$0xff]
      %v184 = vld [vmem:[%s165 + $0x68] sm:$0x1]
      %v185 = vld [vmem:[%s165 + $0x70] sm:$0xff]
      %v186 = vld [vmem:[%s165 + $0x78] sm:$0x1]
      %v187 = vld [vmem:[%s165 + $0x80] sm:$0xff]
      %v188 = vld [vmem:[%s165 + $0x88] sm:$0x1]
      %vm189 = vcmp.ge.f32.partialorder %v171, 0.0
      %vm190 = vcmp.ge.f32.partialorder %v172, 0.0
      %vm191 = vcmp.ge.f32.partialorder %v173, 0.0
      %vm192 = vcmp.ge.f32.partialorder %v174, 0.0
      %vm193 = vcmp.ge.f32.partialorder %v175, 0.0
      %vm194 = vcmp.ge.f32.partialorder %v176, 0.0
      %vm195 = vcmp.ge.f32.partialorder %v177, 0.0
      %vm196 = vcmp.ge.f32.partialorder %v178, 0.0
      %vm197 = vcmp.ge.f32.partialorder %v179, 0.0
      %vm198 = vcmp.ge.f32.partialorder %v180, 0.0
      %vm199 = vcmp.ge.f32.partialorder %v181, 0.0
      %vm200 = vcmp.ge.f32.partialorder %v182, 0.0
      %vm201 = vcmp.ge.f32.partialorder %v183, 0.0
      %vm202 = vcmp.ge.f32.partialorder %v184, 0.0
      %vm203 = vcmp.ge.f32.partialorder %v185, 0.0
      %vm204 = vcmp.ge.f32.partialorder %v186, 0.0
      %vm205 = vcmp.ge.f32.partialorder %v187, 0.0
      %vm206 = vcmp.ge.f32.partialorder %v188, 0.0
      %v207 = vmul.f32 %v171, 0.1
      %v208 = vmul.f32 %v172, 0.1
      %v209 = vmul.f32 %v173, 0.1
      %v210 = vmul.f32 %v174, 0.1
      %v211 = vmul.f32 %v175, 0.1
      %v212 = vmul.f32 %v176, 0.1
      %v213 = vmul.f32 %v177, 0.1
      %v214 = vmul.f32 %v178, 0.1
      %v215 = vmul.f32 %v179, 0.1
      %v216 = vmul.f32 %v180, 0.1
      %v217 = vmul.f32 %v181, 0.1
      %v218 = vmul.f32 %v182, 0.1
      %v219 = vmul.f32 %v183, 0.1
      %v220 = vmul.f32 %v184, 0.1
      %v221 = vmul.f32 %v185, 0.1
      %v222 = vmul.f32 %v186, 0.1
      %v223 = vmul.f32 %v187, 0.1
      %v224 = vmul.f32 %v188, 0.1
      %v225 = vsel %vm189, %v171, %v207
      %v226 = vsel %vm190, %v172, %v208
      %v227 = vsel %vm191, %v173, %v209
      %v228 = vsel %vm192, %v174, %v210
      %v229 = vsel %vm193, %v175, %v211
      %v230 = vsel %vm194, %v176, %v212
      %v231 = vsel %vm195, %v177, %v213
      %v232 = vsel %vm196, %v178, %v214
      %v233 = vsel %vm197, %v179, %v215
      %v234 = vsel %vm198, %v180, %v216
      %v235 = vsel %vm199, %v181, %v217
      %v236 = vsel %vm200, %v182, %v218
      %v237 = vsel %vm201, %v183, %v219
      %v238 = vsel %vm202, %v184, %v220
      %v239 = vsel %vm203, %v185, %v221
      %v240 = vsel %vm204, %v186, %v222
      %v241 = vsel %vm205, %v187, %v223
      %v242 = vsel %vm206, %v188, %v224
      %v243 = vld [vmem:[%s1] sm:$0xff]
      %v244 = vld [vmem:[%s1 + $0x8] sm:$0xff]
      %vm261 = vcmask 1046528
      %v262 = vrot.slane %v225, 1
      %v263 = vrot.slane %v226, 1
      %v264 = vsel %vm261, %v262, %v263
      %v265 = vrot.slane %v227, 1
      %v266 = vrot.slane %v228, 1
      %v267 = vsel %vm261, %v265, %v266
      %v268 = vrot.slane %v229, 1
      %v269 = vrot.slane %v230, 1
      %v270 = vsel %vm261, %v268, %v269
      %v271 = vrot.slane %v231, 1
      %v272 = vrot.slane %v232, 1
      %v273 = vsel %vm261, %v271, %v272
      %v274 = vrot.slane %v233, 1
      %v275 = vrot.slane %v234, 1
      %v276 = vsel %vm261, %v274, %v275
      %v277 = vrot.slane %v235, 1
      %v278 = vrot.slane %v236, 1
      %v279 = vsel %vm261, %v277, %v278
      %v280 = vrot.slane %v237, 1
      %v281 = vrot.slane %v238, 1
      %v282 = vsel %vm261, %v280, %v281
      %v283 = vrot.slane %v239, 1
      %v284 = vrot.slane %v240, 1
      %v285 = vsel %vm261, %v283, %v284
      %s286 = scalar_lea.vmem %s1, 16
      %v287 = vld [vmem:[%s286] sm:$0xff]
      %v288 = vld [vmem:[%s286 + $0x8] sm:$0xff]
      %vm289 = vcmask 130048
      %v290 = vsel %vm289, %v264, 0
      %v292 = vsel %vm289, %v267, 0
      %v294 = vsel %vm289, %v270, 0
      %v296 = vsel %vm289, %v273, 0
      %v298 = vsel %vm289, %v276, 0
      %v300 = vsel %vm289, %v279, 0
      %v302 = vsel %vm289, %v282, 0
      %v304 = vsel %vm289, %v285, 0
      %306 = vmatprep.subr.mxu0 0.0
      %307 = vmatpush1.msra.mxu0 %v287
      %308 = vmatprep.subr.mxu0 0.0
      %309 = vmatpush1.msra.mxu0 %v288
      %310 = vmatprep.subr.mxu0 0.0
      %311 = vmatpush1.msra.mxu0 0.0
      %312 = vmatprep.subr.mxu0 0.0
      %313 = vmatpush1.msra.mxu0 0.0
      %314 = vmatprep.subr.mxu0 0.0
      %315 = vmatpush1.msra.mxu0 0.0
      %316 = vmatprep.subr.mxu0 0.0
      %317 = vmatpush1.msra.mxu0 0.0
      %318 = vmatprep.subr.mxu0 0.0
      %319 = vmatpush1.msra.mxu0 0.0
      %320 = vmatprep.subr.mxu0 0.0
      %321 = vmatpush1.msra.mxu0 0.0
      %322 = vmatprep.subr.mxu0 0.0
      %323 = vmatpush1.msra.mxu0 0.0
      %324 = vmatprep.subr.mxu0 0.0
      %325 = vmatpush1.msra.mxu0 0.0
      %326 = vmatprep.subr.mxu0 0.0
      %327 = vmatpush1.msra.mxu0 0.0
      %328 = vmatprep.subr.mxu0 0.0
      %329 = vmatpush1.msra.mxu0 0.0
      %330 = vmatprep.subr.mxu0 0.0
      %331 = vmatpush1.msra.mxu0 0.0
      %332 = vmatprep.subr.mxu0 0.0
      %333 = vmatpush1.msra.mxu0 0.0
      %334 = vmatprep.subr.mxu0 0.0
      %335 = vmatpush1.msra.mxu0 0.0
      %336 = vmatprep.subr.mxu0 0.0
      %337 = vmatpush1.msra.mxu0 0.0
      %338 = vmatprep.subr.mxu0 0.0
      %339 = vmatpush1.msra.mxu0 0.0
      %340 = vmatprep.subr.mxu0 0.0
      %341 = vmatpush1.msra.mxu0 0.0
      %342 = vmatprep.subr.mxu0 0.0
      %343 = vmatpush1.msra.mxu0 0.0
      %344 = vmatprep.subr.mxu0 0.0
      %345 = vmatpush1.msra.mxu0 0.0
      %346 = vmatprep.subr.mxu0 0.0
      %347 = vmatpush1.msra.mxu0 0.0
      %348 = vmatprep.subr.mxu0 0.0
      %349 = vmatpush1.msra.mxu0 0.0
      %350 = vmatprep.subr.mxu0 0.0
      %351 = vmatpush1.msra.mxu0 0.0
      %352 = vmatprep.subr.mxu0 0.0
      %353 = vmatpush1.msra.mxu0 0.0
      %354 = vmatprep.subr.mxu0 0.0
      %355 = vmatpush1.msra.mxu0 0.0
      %356 = vmatprep.subr.mxu0 0.0
      %357 = vmatpush1.msra.mxu0 0.0
      %358 = vmatprep.subr.mxu0 0.0
      %359 = vmatpush1.msra.mxu0 0.0
      %360 = vmatprep.subr.mxu0 0.0
      %361 = vmatpush1.msra.mxu0 0.0
      %362 = vmatprep.subr.mxu0 0.0
      %363 = vmatpush1.msra.mxu0 0.0
      %364 = vmatprep.subr.mxu0 0.0
      %365 = vmatpush1.msra.mxu0 0.0
      %366 = vmatprep.subr.mxu0 0.0
      %367 = vmatpush1.msra.mxu0 0.0
      %368 = vmatprep.subr.mxu0 0.0
      %369 = vmatpush1.msra.mxu0 0.0
      %370 = vmatprep.mubr.f32.mxu0 0.0
      %371 = vmatmul.mubr.f32.gmra.mrb[0].mxu0 %v290
      %v372 = vpop.f32.mrb[0].mxu0
      %v373 = vadd.f32 0.0, %v372
      %v374 = vpop.f32.mrb[0].mxu0
      %375 = vmatprep.mubr.f32.mxu0 0.0
      %376 = vmatmul.mubr.f32.gmra.mrb[0].mxu0 %v292
      %v377 = vpop.f32.mrb[0].mxu0
      %v378 = vadd.f32 0.0, %v377
      %v379 = vpop.f32.mrb[0].mxu0
      %380 = vmatprep.mubr.f32.mxu0 0.0
      %381 = vmatmul.mubr.f32.gmra.mrb[0].mxu0 %v294
      %v382 = vpop.f32.mrb[0].mxu0
      %v383 = vadd.f32 0.0, %v382
      %v384 = vpop.f32.mrb[0].mxu0
      %385 = vmatprep.mubr.f32.mxu0 0.0
      %386 = vmatmul.mubr.f32.gmra.mrb[0].mxu0 %v296
      %v387 = vpop.f32.mrb[0].mxu0
      %v388 = vadd.f32 0.0, %v387
      %v389 = vpop.f32.mrb[0].mxu0
      %390 = vmatprep.mubr.f32.mxu0 0.0
      %391 = vmatmul.mubr.f32.gmra.mrb[0].mxu0 %v298
      %v392 = vpop.f32.mrb[0].mxu0
      %v393 = vadd.f32 0.0, %v392
      %v394 = vpop.f32.mrb[0].mxu0
      %395 = vmatprep.mubr.f32.mxu0 0.0
      %396 = vmatmul.mubr.f32.gmra.mrb[0].mxu0 %v300
      %v397 = vpop.f32.mrb[0].mxu0
      %v398 = vadd.f32 0.0, %v397
      %v399 = vpop.f32.mrb[0].mxu0
      %400 = vmatprep.mubr.f32.mxu0 0.0
      %401 = vmatmul.mubr.f32.gmra.mrb[0].mxu0 %v302
      %v402 = vpop.f32.mrb[0].mxu0
      %v403 = vadd.f32 0.0, %v402
      %v404 = vpop.f32.mrb[0].mxu0
      %405 = vmatprep.mubr.f32.mxu0 0.0
      %406 = vmatmul.mubr.f32.gmra.mrb[0].mxu0 %v304
      %v407 = vpop.f32.mrb[0].mxu0
      %v408 = vadd.f32 0.0, %v407
      %v409 = vpop.f32.mrb[0].mxu0
      %410 = vdwg.mxu0
      %v411 = vsel %vm289, %v225, 0
      %v413 = vsel %vm289, %v227, 0
      %v415 = vsel %vm289, %v229, 0
      %v417 = vsel %vm289, %v231, 0
      %v419 = vsel %vm289, %v233, 0
      %v421 = vsel %vm289, %v235, 0
      %v423 = vsel %vm289, %v237, 0
      %v425 = vsel %vm289, %v239, 0
      %427 = vmatprep.subr.mxu0 0.0
      %428 = vmatpush1.msra.mxu0 %v243
      %429 = vmatprep.subr.mxu0 0.0
      %430 = vmatpush1.msra.mxu0 %v244
      %431 = vmatprep.subr.mxu0 0.0
      %432 = vmatpush1.msra.mxu0 0.0
      %433 = vmatprep.subr.mxu0 0.0
      %434 = vmatpush1.msra.mxu0 0.0
      %435 = vmatprep.subr.mxu0 0.0
      %436 = vmatpush1.msra.mxu0 0.0
      %437 = vmatprep.subr.mxu0 0.0
      %438 = vmatpush1.msra.mxu0 0.0
      %439 = vmatprep.subr.mxu0 0.0
      %440 = vmatpush1.msra.mxu0 0.0
      %441 = vmatprep.subr.mxu0 0.0
      %442 = vmatpush1.msra.mxu0 0.0
      %443 = vmatprep.subr.mxu0 0.0
      %444 = vmatpush1.msra.mxu0 0.0
      %445 = vmatprep.subr.mxu0 0.0
      %446 = vmatpush1.msra.mxu0 0.0
      %447 = vmatprep.subr.mxu0 0.0
      %448 = vmatpush1.msra.mxu0 0.0
      %449 = vmatprep.subr.mxu0 0.0
      %450 = vmatpush1.msra.mxu0 0.0
      %451 = vmatprep.subr.mxu0 0.0
      %452 = vmatpush1.msra.mxu0 0.0
      %453 = vmatprep.subr.mxu0 0.0
      %454 = vmatpush1.msra.mxu0 0.0
      %455 = vmatprep.subr.mxu0 0.0
      %456 = vmatpush1.msra.mxu0 0.0
      %457 = vmatprep.subr.mxu0 0.0
      %458 = vmatpush1.msra.mxu0 0.0
      %459 = vmatprep.subr.mxu0 0.0
      %460 = vmatpush1.msra.mxu0 0.0
      %461 = vmatprep.subr.mxu0 0.0
      %462 = vmatpush1.msra.mxu0 0.0
      %463 = vmatprep.subr.mxu0 0.0
      %464 = vmatpush1.msra.mxu0 0.0
      %465 = vmatprep.subr.mxu0 0.0
      %466 = vmatpush1.msra.mxu0 0.0
      %467 = vmatprep.subr.mxu0 0.0
      %468 = vmatpush1.msra.mxu0 0.0
      %469 = vmatprep.subr.mxu0 0.0
      %470 = vmatpush1.msra.mxu0 0.0
      %471 = vmatprep.subr.mxu0 0.0
      %472 = vmatpush1.msra.mxu0 0.0
      %473 = vmatprep.subr.mxu0 0.0
      %474 = vmatpush1.msra.mxu0 0.0
      %475 = vmatprep.subr.mxu0 0.0
      %476 = vmatpush1.msra.mxu0 0.0
      %477 = vmatprep.subr.mxu0 0.0
      %478 = vmatpush1.msra.mxu0 0.0
      %479 = vmatprep.subr.mxu0 0.0
      %480 = vmatpush1.msra.mxu0 0.0
      %481 = vmatprep.subr.mxu0 0.0
      %482 = vmatpush1.msra.mxu0 0.0
      %483 = vmatprep.subr.mxu0 0.0
      %484 = vmatpush1.msra.mxu0 0.0
      %485 = vmatprep.subr.mxu0 0.0
      %486 = vmatpush1.msra.mxu0 0.0
      %487 = vmatprep.subr.mxu0 0.0
      %488 = vmatpush1.msra.mxu0 0.0
      %489 = vmatprep.subr.mxu0 0.0
      %490 = vmatpush1.msra.mxu0 0.0
      %491 = vmatprep.mubr.f32.mxu0 0.0
      %492 = vmatmul.mubr.f32.gmra.mrb[0].mxu0 %v411
      %v493 = vpop.f32.mrb[0].mxu0
      %v494 = vadd.f32 %v373, %v493
      %v495 = vpop.f32.mrb[0].mxu0
      %496 = vmatprep.mubr.f32.mxu0 0.0
      %497 = vmatmul.mubr.f32.gmra.mrb[0].mxu0 %v413
      %v498 = vpop.f32.mrb[0].mxu0
      %v499 = vadd.f32 %v378, %v498
      %v500 = vpop.f32.mrb[0].mxu0
      %501 = vmatprep.mubr.f32.mxu0 0.0
      %502 = vmatmul.mubr.f32.gmra.mrb[0].mxu0 %v415
      %v503 = vpop.f32.mrb[0].mxu0
      %v504 = vadd.f32 %v383, %v503
      %v505 = vpop.f32.mrb[0].mxu0
      %506 = vmatprep.mubr.f32.mxu0 0.0
      %507 = vmatmul.mubr.f32.gmra.mrb[0].mxu0 %v417
      %v508 = vpop.f32.mrb[0].mxu0
      %v509 = vadd.f32 %v388, %v508
      %v510 = vpop.f32.mrb[0].mxu0
      %511 = vmatprep.mubr.f32.mxu0 0.0
      %512 = vmatmul.mubr.f32.gmra.mrb[0].mxu0 %v419
      %v513 = vpop.f32.mrb[0].mxu0
      %v514 = vadd.f32 %v393, %v513
      %v515 = vpop.f32.mrb[0].mxu0
      %516 = vmatprep.mubr.f32.mxu0 0.0
      %517 = vmatmul.mubr.f32.gmra.mrb[0].mxu0 %v421
      %v518 = vpop.f32.mrb[0].mxu0
      %v519 = vadd.f32 %v398, %v518
      %v520 = vpop.f32.mrb[0].mxu0
      %521 = vmatprep.mubr.f32.mxu0 0.0
      %522 = vmatmul.mubr.f32.gmra.mrb[0].mxu0 %v423
      %v523 = vpop.f32.mrb[0].mxu0
      %v524 = vadd.f32 %v403, %v523
      %v525 = vpop.f32.mrb[0].mxu0
      %526 = vmatprep.mubr.f32.mxu0 0.0
      %527 = vmatmul.mubr.f32.gmra.mrb[0].mxu0 %v425
      %v528 = vpop.f32.mrb[0].mxu0
      %v529 = vadd.f32 %v408, %v528
      %v530 = vpop.f32.mrb[0].mxu0
      %531 = vdwg.mxu0
      %s532 = scalar_lea.vmem %s1, 32
      %v533 = vld [vmem:[%s532] sm:$0xff]
      %v534 = vld [vmem:[%s532 + $0x8] sm:$0xff]
      %v536 = vsel %vm289, %v241, 0
      %538 = vmatprep.subr.mxu0 0.0
      %539 = vmatpush1.msra.mxu0 %v533
      %540 = vmatprep.subr.mxu0 0.0
      %541 = vmatpush1.msra.mxu0 %v534
      %542 = vmatprep.subr.mxu0 0.0
      %543 = vmatpush1.msra.mxu0 0.0
      %544 = vmatprep.subr.mxu0 0.0
      %545 = vmatpush1.msra.mxu0 0.0
      %546 = vmatprep.subr.mxu0 0.0
      %547 = vmatpush1.msra.mxu0 0.0
      %548 = vmatprep.subr.mxu0 0.0
      %549 = vmatpush1.msra.mxu0 0.0
      %550 = vmatprep.subr.mxu0 0.0
      %551 = vmatpush1.msra.mxu0 0.0
      %552 = vmatprep.subr.mxu0 0.0
      %553 = vmatpush1.msra.mxu0 0.0
      %554 = vmatprep.subr.mxu0 0.0
      %555 = vmatpush1.msra.mxu0 0.0
      %556 = vmatprep.subr.mxu0 0.0
      %557 = vmatpush1.msra.mxu0 0.0
      %558 = vmatprep.subr.mxu0 0.0
      %559 = vmatpush1.msra.mxu0 0.0
      %560 = vmatprep.subr.mxu0 0.0
      %561 = vmatpush1.msra.mxu0 0.0
      %562 = vmatprep.subr.mxu0 0.0
      %563 = vmatpush1.msra.mxu0 0.0
      %564 = vmatprep.subr.mxu0 0.0
      %565 = vmatpush1.msra.mxu0 0.0
      %566 = vmatprep.subr.mxu0 0.0
      %567 = vmatpush1.msra.mxu0 0.0
      %568 = vmatprep.subr.mxu0 0.0
      %569 = vmatpush1.msra.mxu0 0.0
      %570 = vmatprep.subr.mxu0 0.0
      %571 = vmatpush1.msra.mxu0 0.0
      %572 = vmatprep.subr.mxu0 0.0
      %573 = vmatpush1.msra.mxu0 0.0
      %574 = vmatprep.subr.mxu0 0.0
      %575 = vmatpush1.msra.mxu0 0.0
      %576 = vmatprep.subr.mxu0 0.0
      %577 = vmatpush1.msra.mxu0 0.0
      %578 = vmatprep.subr.mxu0 0.0
      %579 = vmatpush1.msra.mxu0 0.0
      %580 = vmatprep.subr.mxu0 0.0
      %581 = vmatpush1.msra.mxu0 0.0
      %582 = vmatprep.subr.mxu0 0.0
      %583 = vmatpush1.msra.mxu0 0.0
      %584 = vmatprep.subr.mxu0 0.0
      %585 = vmatpush1.msra.mxu0 0.0
      %586 = vmatprep.subr.mxu0 0.0
      %587 = vmatpush1.msra.mxu0 0.0
      %588 = vmatprep.subr.mxu0 0.0
      %589 = vmatpush1.msra.mxu0 0.0
      %590 = vmatprep.subr.mxu0 0.0
      %591 = vmatpush1.msra.mxu0 0.0
      %592 = vmatprep.subr.mxu0 0.0
      %593 = vmatpush1.msra.mxu0 0.0
      %594 = vmatprep.subr.mxu0 0.0
      %595 = vmatpush1.msra.mxu0 0.0
      %596 = vmatprep.subr.mxu0 0.0
      %597 = vmatpush1.msra.mxu0 0.0
      %598 = vmatprep.subr.mxu0 0.0
      %599 = vmatpush1.msra.mxu0 0.0
      %600 = vmatprep.subr.mxu0 0.0
      %601 = vmatpush1.msra.mxu0 0.0
      %602 = vmatprep.mubr.f32.mxu0 0.0
      %603 = vmatmul.mubr.f32.gmra.mrb[0].mxu0 %v413
      %v604 = vpop.f32.mrb[0].mxu0
      %v605 = vadd.f32 0.0, %v604
      %v606 = vpop.f32.mrb[0].mxu0
      %607 = vmatprep.mubr.f32.mxu0 0.0
      %608 = vmatmul.mubr.f32.gmra.mrb[0].mxu0 %v415
      %v609 = vpop.f32.mrb[0].mxu0
      %v610 = vadd.f32 0.0, %v609
      %v611 = vpop.f32.mrb[0].mxu0
      %612 = vmatprep.mubr.f32.mxu0 0.0
      %613 = vmatmul.mubr.f32.gmra.mrb[0].mxu0 %v417
      %v614 = vpop.f32.mrb[0].mxu0
      %v615 = vadd.f32 0.0, %v614
      %v616 = vpop.f32.mrb[0].mxu0
      %617 = vmatprep.mubr.f32.mxu0 0.0
      %618 = vmatmul.mubr.f32.gmra.mrb[0].mxu0 %v419
      %v619 = vpop.f32.mrb[0].mxu0
      %v620 = vadd.f32 0.0, %v619
      %v621 = vpop.f32.mrb[0].mxu0
      %622 = vmatprep.mubr.f32.mxu0 0.0
      %623 = vmatmul.mubr.f32.gmra.mrb[0].mxu0 %v421
      %v624 = vpop.f32.mrb[0].mxu0
      %v625 = vadd.f32 0.0, %v624
      %v626 = vpop.f32.mrb[0].mxu0
      %627 = vmatprep.mubr.f32.mxu0 0.0
      %628 = vmatmul.mubr.f32.gmra.mrb[0].mxu0 %v423
      %v629 = vpop.f32.mrb[0].mxu0
      %v630 = vadd.f32 0.0, %v629
      %v631 = vpop.f32.mrb[0].mxu0
      %632 = vmatprep.mubr.f32.mxu0 0.0
      %633 = vmatmul.mubr.f32.gmra.mrb[0].mxu0 %v425
      %v634 = vpop.f32.mrb[0].mxu0
      %v635 = vadd.f32 0.0, %v634
      %v636 = vpop.f32.mrb[0].mxu0
      %637 = vmatprep.mubr.f32.mxu0 0.0
      %638 = vmatmul.mubr.f32.gmra.mrb[0].mxu0 %v536
      %v639 = vpop.f32.mrb[0].mxu0
      %v640 = vadd.f32 0.0, %v639
      %v641 = vpop.f32.mrb[0].mxu0
      %642 = vdwg.mxu0
      %v643 = vadd.f32 %v494, %v605
      %v644 = vadd.f32 %v499, %v610
      %v645 = vadd.f32 %v504, %v615
      %v646 = vadd.f32 %v509, %v620
      %v647 = vadd.f32 %v514, %v625
      %v648 = vadd.f32 %v519, %v630
      %v649 = vadd.f32 %v524, %v635
      %v650 = vadd.f32 %v529, %v640
      %v652 = vrot.slane %v241, 1
      %v653 = vrot.slane %v242, 1
      %v654 = vsel %vm261, %v652, %v653
      %s655 = scalar_lea.vmem %s1, 48
      %v656 = vld [vmem:[%s655] sm:$0xff]
      %v657 = vld [vmem:[%s655 + $0x8] sm:$0xff]
      %v658 = vsel %vm289, %v654, 0
      %660 = vmatprep.subr.mxu0 0.0
      %661 = vmatpush1.msra.mxu0 %v656
      %662 = vmatprep.subr.mxu0 0.0
      %663 = vmatpush1.msra.mxu0 %v657
      %664 = vmatprep.subr.mxu0 0.0
      %665 = vmatpush1.msra.mxu0 0.0
      %666 = vmatprep.subr.mxu0 0.0
      %667 = vmatpush1.msra.mxu0 0.0
      %668 = vmatprep.subr.mxu0 0.0
      %669 = vmatpush1.msra.mxu0 0.0
      %670 = vmatprep.subr.mxu0 0.0
      %671 = vmatpush1.msra.mxu0 0.0
      %672 = vmatprep.subr.mxu0 0.0
      %673 = vmatpush1.msra.mxu0 0.0
      %674 = vmatprep.subr.mxu0 0.0
      %675 = vmatpush1.msra.mxu0 0.0
      %676 = vmatprep.subr.mxu0 0.0
      %677 = vmatpush1.msra.mxu0 0.0
      %678 = vmatprep.subr.mxu0 0.0
      %679 = vmatpush1.msra.mxu0 0.0
      %680 = vmatprep.subr.mxu0 0.0
      %681 = vmatpush1.msra.mxu0 0.0
      %682 = vmatprep.subr.mxu0 0.0
      %683 = vmatpush1.msra.mxu0 0.0
      %684 = vmatprep.subr.mxu0 0.0
      %685 = vmatpush1.msra.mxu0 0.0
      %686 = vmatprep.subr.mxu0 0.0
      %687 = vmatpush1.msra.mxu0 0.0
      %688 = vmatprep.subr.mxu0 0.0
      %689 = vmatpush1.msra.mxu0 0.0
      %690 = vmatprep.subr.mxu0 0.0
      %691 = vmatpush1.msra.mxu0 0.0
      %692 = vmatprep.subr.mxu0 0.0
      %693 = vmatpush1.msra.mxu0 0.0
      %694 = vmatprep.subr.mxu0 0.0
      %695 = vmatpush1.msra.mxu0 0.0
      %696 = vmatprep.subr.mxu0 0.0
      %697 = vmatpush1.msra.mxu0 0.0
      %698 = vmatprep.subr.mxu0 0.0
      %699 = vmatpush1.msra.mxu0 0.0
      %700 = vmatprep.subr.mxu0 0.0
      %701 = vmatpush1.msra.mxu0 0.0
      %702 = vmatprep.subr.mxu0 0.0
      %703 = vmatpush1.msra.mxu0 0.0
      %704 = vmatprep.subr.mxu0 0.0
      %705 = vmatpush1.msra.mxu0 0.0
      %706 = vmatprep.subr.mxu0 0.0
      %707 = vmatpush1.msra.mxu0 0.0
      %708 = vmatprep.subr.mxu0 0.0
      %709 = vmatpush1.msra.mxu0 0.0
      %710 = vmatprep.subr.mxu0 0.0
      %711 = vmatpush1.msra.mxu0 0.0
      %712 = vmatprep.subr.mxu0 0.0
      %713 = vmatpush1.msra.mxu0 0.0
      %714 = vmatprep.subr.mxu0 0.0
      %715 = vmatpush1.msra.mxu0 0.0
      %716 = vmatprep.subr.mxu0 0.0
      %717 = vmatpush1.msra.mxu0 0.0
      %718 = vmatprep.subr.mxu0 0.0
      %719 = vmatpush1.msra.mxu0 0.0
      %720 = vmatprep.subr.mxu0 0.0
      %721 = vmatpush1.msra.mxu0 0.0
      %722 = vmatprep.subr.mxu0 0.0
      %723 = vmatpush1.msra.mxu0 0.0
      %724 = vmatprep.mubr.f32.mxu0 0.0
      %725 = vmatmul.mubr.f32.gmra.mrb[0].mxu0 %v292
      %v726 = vpop.f32.mrb[0].mxu0
      %v727 = vadd.f32 0.0, %v726
      %v728 = vpop.f32.mrb[0].mxu0
      %729 = vmatprep.mubr.f32.mxu0 0.0
      %730 = vmatmul.mubr.f32.gmra.mrb[0].mxu0 %v294
      %v731 = vpop.f32.mrb[0].mxu0
      %v732 = vadd.f32 0.0, %v731
      %v733 = vpop.f32.mrb[0].mxu0
      %734 = vmatprep.mubr.f32.mxu0 0.0
      %735 = vmatmul.mubr.f32.gmra.mrb[0].mxu0 %v296
      %v736 = vpop.f32.mrb[0].mxu0
      %v737 = vadd.f32 0.0, %v736
      %v738 = vpop.f32.mrb[0].mxu0
      %739 = vmatprep.mubr.f32.mxu0 0.0
      %740 = vmatmul.mubr.f32.gmra.mrb[0].mxu0 %v298
      %v741 = vpop.f32.mrb[0].mxu0
      %v742 = vadd.f32 0.0, %v741
      %v743 = vpop.f32.mrb[0].mxu0
      %744 = vmatprep.mubr.f32.mxu0 0.0
      %745 = vmatmul.mubr.f32.gmra.mrb[0].mxu0 %v300
      %v746 = vpop.f32.mrb[0].mxu0
      %v747 = vadd.f32 0.0, %v746
      %v748 = vpop.f32.mrb[0].mxu0
      %749 = vmatprep.mubr.f32.mxu0 0.0
      %750 = vmatmul.mubr.f32.gmra.mrb[0].mxu0 %v302
      %v751 = vpop.f32.mrb[0].mxu0
      %v752 = vadd.f32 0.0, %v751
      %v753 = vpop.f32.mrb[0].mxu0
      %754 = vmatprep.mubr.f32.mxu0 0.0
      %755 = vmatmul.mubr.f32.gmra.mrb[0].mxu0 %v304
      %v756 = vpop.f32.mrb[0].mxu0
      %v757 = vadd.f32 0.0, %v756
      %v758 = vpop.f32.mrb[0].mxu0
      %759 = vmatprep.mubr.f32.mxu0 0.0
      %760 = vmatmul.mubr.f32.gmra.mrb[0].mxu0 %v658
      %v761 = vpop.f32.mrb[0].mxu0
      %v762 = vadd.f32 0.0, %v761
      %v763 = vpop.f32.mrb[0].mxu0
      %764 = vdwg.mxu0
      %v765 = vadd.f32 %v643, %v727
      %v766 = vadd.f32 %v644, %v732
      %v767 = vadd.f32 %v645, %v737
      %v768 = vadd.f32 %v646, %v742
      %v769 = vadd.f32 %v647, %v747
      %v770 = vadd.f32 %v648, %v752
      %v771 = vadd.f32 %v649, %v757
      %v772 = vadd.f32 %v650, %v762
      %v773 = vmax.f32 %v765, 0.0
      %v774 = vmax.f32 %v766, 0.0
      %v775 = vmax.f32 %v767, 0.0
      %v776 = vmax.f32 %v768, 0.0
      %v777 = vmax.f32 %v769, 0.0
      %v778 = vmax.f32 %v770, 0.0
      %v779 = vmax.f32 %v771, 0.0
      %v780 = vmax.f32 %v772, 0.0
      %vm781 = vcmask 64512
      %782 = vst.msk [vmem:[#allocation2] sm:$0xff] %vm781, 0.0
      %vm783 = vcmask 58368
      %784 = vst.msk [vmem:[#allocation2 + $0x8] sm:$0x3] %vm783, 0.0
      %785 = vst.msk [vmem:[#allocation2 + $0x10] sm:$0xff] %vm781, 0.0
      %786 = vst.msk [vmem:[#allocation2 + $0x18] sm:$0x3] %vm783, 0.0
      %787 = vst.msk [vmem:[#allocation2 + $0x20] sm:$0xff] %vm781, 0.0
      %788 = vst.msk [vmem:[#allocation2 + $0x28] sm:$0x3] %vm783, 0.0
      %789 = vst.msk [vmem:[#allocation2 + $0x30] sm:$0xff] %vm781, 0.0
      %790 = vst.msk [vmem:[#allocation2 + $0x38] sm:$0x3] %vm783, 0.0
      %791 = vst.msk [vmem:[#allocation2 + $0x40] sm:$0xff] %vm781, 0.0
      %792 = vst.msk [vmem:[#allocation2 + $0x48] sm:$0x3] %vm783, 0.0
      %793 = vst.msk [vmem:[#allocation2 + $0x50] sm:$0xff] %vm781, 0.0
      %794 = vst.msk [vmem:[#allocation2 + $0x58] sm:$0x3] %vm783, 0.0
      %795 = vst.msk [vmem:[#allocation2 + $0x60] sm:$0xff] %vm781, 0.0
      %796 = vst.msk [vmem:[#allocation2 + $0x68] sm:$0x3] %vm783, 0.0
      %797 = vst.msk [vmem:[#allocation2 + $0x70] sm:$0xff] %vm781, 0.0
      %798 = vst.msk [vmem:[#allocation2 + $0x78] sm:$0x3] %vm783, 0.0
      %799 = vst.msk [vmem:[#allocation2 + $0x80] sm:$0xff] %vm781, 0.0
      %800 = vst.msk [vmem:[#allocation2 + $0x88] sm:$0x3] %vm783, 0.0
      %801 = vst.msk [vmem:[#allocation2 + $0x90] sm:$0xff] %vm781, 0.0
      %802 = vst.msk [vmem:[#allocation2 + $0x98] sm:$0x3] %vm783, 0.0
      %s803 = scalar_lea.vmem [#allocation2], 16
      %804 = vst.msk [vmem:[%s803 + $0x1] sm:$0xff] %vm781, %v773
      %805 = vst.msk [vmem:[%s803 + $0x11] sm:$0xff] %vm781, %v774
      %806 = vst.msk [vmem:[%s803 + $0x21] sm:$0xff] %vm781, %v775
      %807 = vst.msk [vmem:[%s803 + $0x31] sm:$0xff] %vm781, %v776
      %808 = vst.msk [vmem:[%s803 + $0x41] sm:$0xff] %vm781, %v777
      %809 = vst.msk [vmem:[%s803 + $0x51] sm:$0xff] %vm781, %v778
      %810 = vst.msk [vmem:[%s803 + $0x61] sm:$0xff] %vm781, %v779
      %811 = vst.msk [vmem:[%s803 + $0x71] sm:$0xff] %vm781, %v780
      %v812 = vld [vmem:[#allocation2] sm:$0xff]
      %v813 = vld [vmem:[#allocation2 + $0x10] sm:$0xff]
      %v814 = vld [vmem:[#allocation2 + $0x20] sm:$0xff]
      %v815 = vld [vmem:[#allocation2 + $0x30] sm:$0xff]
      %v816 = vld [vmem:[#allocation2 + $0x40] sm:$0xff]
      %v817 = vld [vmem:[#allocation2 + $0x50] sm:$0xff]
      %v818 = vld [vmem:[#allocation2 + $0x60] sm:$0xff]
      %v819 = vld [vmem:[#allocation2 + $0x70] sm:$0xff]
      %v820 = vld [vmem:[%s2] sm:$0xff]
      %v821 = vld [vmem:[#allocation2 + $0x1] sm:$0xff]
      %v822 = vld [vmem:[#allocation2 + $0x11] sm:$0xff]
      %v823 = vld [vmem:[#allocation2 + $0x21] sm:$0xff]
      %v824 = vld [vmem:[#allocation2 + $0x31] sm:$0xff]
      %v825 = vld [vmem:[#allocation2 + $0x41] sm:$0xff]
      %v826 = vld [vmem:[#allocation2 + $0x51] sm:$0xff]
      %v827 = vld [vmem:[#allocation2 + $0x61] sm:$0xff]
      %v828 = vld [vmem:[#allocation2 + $0x71] sm:$0xff]
      %s829 = scalar_lea.vmem %s2, 8
      %v830 = vld [vmem:[%s829] sm:$0xff]
      %v832 = vsel %vm781, %v821, 0
      %v835 = vsel %vm781, %v822, 0
      %v838 = vsel %vm781, %v823, 0
      %v841 = vsel %vm781, %v824, 0
      %v844 = vsel %vm781, %v825, 0
      %v847 = vsel %vm781, %v826, 0
      %v850 = vsel %vm781, %v827, 0
      %v853 = vsel %vm781, %v828, 0
      %855 = vmatprep.subr.mxu0 0.0
      %856 = vmatpush1.msra.mxu0 %v830
      %857 = vmatprep.subr.mxu0 0.0
      %858 = vmatpush1.msra.mxu0 0.0
      %859 = vmatprep.subr.mxu0 0.0
      %860 = vmatpush1.msra.mxu0 0.0
      %861 = vmatprep.subr.mxu0 0.0
      %862 = vmatpush1.msra.mxu0 0.0
      %863 = vmatprep.subr.mxu0 0.0
      %864 = vmatpush1.msra.mxu0 0.0
      %865 = vmatprep.subr.mxu0 0.0
      %866 = vmatpush1.msra.mxu0 0.0
      %867 = vmatprep.subr.mxu0 0.0
      %868 = vmatpush1.msra.mxu0 0.0
      %869 = vmatprep.subr.mxu0 0.0
      %870 = vmatpush1.msra.mxu0 0.0
      %871 = vmatprep.subr.mxu0 0.0
      %872 = vmatpush1.msra.mxu0 0.0
      %873 = vmatprep.subr.mxu0 0.0
      %874 = vmatpush1.msra.mxu0 0.0
      %875 = vmatprep.subr.mxu0 0.0
      %876 = vmatpush1.msra.mxu0 0.0
      %877 = vmatprep.subr.mxu0 0.0
      %878 = vmatpush1.msra.mxu0 0.0
      %879 = vmatprep.subr.mxu0 0.0
      %880 = vmatpush1.msra.mxu0 0.0
      %881 = vmatprep.subr.mxu0 0.0
      %882 = vmatpush1.msra.mxu0 0.0
      %883 = vmatprep.subr.mxu0 0.0
      %884 = vmatpush1.msra.mxu0 0.0
      %885 = vmatprep.subr.mxu0 0.0
      %886 = vmatpush1.msra.mxu0 0.0
      %887 = vmatprep.subr.mxu0 0.0
      %888 = vmatpush1.msra.mxu0 0.0
      %889 = vmatprep.subr.mxu0 0.0
      %890 = vmatpush1.msra.mxu0 0.0
      %891 = vmatprep.subr.mxu0 0.0
      %892 = vmatpush1.msra.mxu0 0.0
      %893 = vmatprep.subr.mxu0 0.0
      %894 = vmatpush1.msra.mxu0 0.0
      %895 = vmatprep.subr.mxu0 0.0
      %896 = vmatpush1.msra.mxu0 0.0
      %897 = vmatprep.subr.mxu0 0.0
      %898 = vmatpush1.msra.mxu0 0.0
      %899 = vmatprep.subr.mxu0 0.0
      %900 = vmatpush1.msra.mxu0 0.0
      %901 = vmatprep.subr.mxu0 0.0
      %902 = vmatpush1.msra.mxu0 0.0
      %903 = vmatprep.subr.mxu0 0.0
      %904 = vmatpush1.msra.mxu0 0.0
      %905 = vmatprep.subr.mxu0 0.0
      %906 = vmatpush1.msra.mxu0 0.0
      %907 = vmatprep.subr.mxu0 0.0
      %908 = vmatpush1.msra.mxu0 0.0
      %909 = vmatprep.subr.mxu0 0.0
      %910 = vmatpush1.msra.mxu0 0.0
      %911 = vmatprep.subr.mxu0 0.0
      %912 = vmatpush1.msra.mxu0 0.0
      %913 = vmatprep.subr.mxu0 0.0
      %914 = vmatpush1.msra.mxu0 0.0
      %915 = vmatprep.subr.mxu0 0.0
      %916 = vmatpush1.msra.mxu0 0.0
      %917 = vmatprep.subr.mxu0 0.0
      %918 = vmatpush1.msra.mxu0 0.0
      %919 = vmatprep.mubr.f32.mxu0 0.0
      %920 = vmatmul.mubr.f32.gmra.mrb[0].mxu0 %v832
      %v921 = vpop.f32.mrb[0].mxu0
      %v922 = vadd.f32 0.0, %v921
      %v923 = vpop.f32.mrb[0].mxu0
      %924 = vmatprep.mubr.f32.mxu0 0.0
      %925 = vmatmul.mubr.f32.gmra.mrb[0].mxu0 %v835
      %v926 = vpop.f32.mrb[0].mxu0
      %v927 = vadd.f32 0.0, %v926
      %v928 = vpop.f32.mrb[0].mxu0
      %929 = vmatprep.mubr.f32.mxu0 0.0
      %930 = vmatmul.mubr.f32.gmra.mrb[0].mxu0 %v838
      %v931 = vpop.f32.mrb[0].mxu0
      %v932 = vadd.f32 0.0, %v931
      %v933 = vpop.f32.mrb[0].mxu0
      %934 = vmatprep.mubr.f32.mxu0 0.0
      %935 = vmatmul.mubr.f32.gmra.mrb[0].mxu0 %v841
      %v936 = vpop.f32.mrb[0].mxu0
      %v937 = vadd.f32 0.0, %v936
      %v938 = vpop.f32.mrb[0].mxu0
      %939 = vmatprep.mubr.f32.mxu0 0.0
      %940 = vmatmul.mubr.f32.gmra.mrb[0].mxu0 %v844
      %v941 = vpop.f32.mrb[0].mxu0
      %v942 = vadd.f32 0.0, %v941
      %v943 = vpop.f32.mrb[0].mxu0
      %944 = vmatprep.mubr.f32.mxu0 0.0
      %945 = vmatmul.mubr.f32.gmra.mrb[0].mxu0 %v847
      %v946 = vpop.f32.mrb[0].mxu0
      %v947 = vadd.f32 0.0, %v946
      %v948 = vpop.f32.mrb[0].mxu0
      %949 = vmatprep.mubr.f32.mxu0 0.0
      %950 = vmatmul.mubr.f32.gmra.mrb[0].mxu0 %v850
      %v951 = vpop.f32.mrb[0].mxu0
      %v952 = vadd.f32 0.0, %v951
      %v953 = vpop.f32.mrb[0].mxu0
      %954 = vmatprep.mubr.f32.mxu0 0.0
      %955 = vmatmul.mubr.f32.gmra.mrb[0].mxu0 %v853
      %v956 = vpop.f32.mrb[0].mxu0
      %v957 = vadd.f32 0.0, %v956
      %v958 = vpop.f32.mrb[0].mxu0
      %959 = vdwg.mxu0
      %v961 = vsel %vm781, %v812, 0
      %v964 = vsel %vm781, %v813, 0
      %v967 = vsel %vm781, %v814, 0
      %v970 = vsel %vm781, %v815, 0
      %v973 = vsel %vm781, %v816, 0
      %v976 = vsel %vm781, %v817, 0
      %v979 = vsel %vm781, %v818, 0
      %v982 = vsel %vm781, %v819, 0
      %984 = vmatprep.subr.mxu0 0.0
      %985 = vmatpush1.msra.mxu0 %v820
      %986 = vmatprep.subr.mxu0 0.0
      %987 = vmatpush1.msra.mxu0 0.0
      %988 = vmatprep.subr.mxu0 0.0
      %989 = vmatpush1.msra.mxu0 0.0
      %990 = vmatprep.subr.mxu0 0.0
      %991 = vmatpush1.msra.mxu0 0.0
      %992 = vmatprep.subr.mxu0 0.0
      %993 = vmatpush1.msra.mxu0 0.0
      %994 = vmatprep.subr.mxu0 0.0
      %995 = vmatpush1.msra.mxu0 0.0
      %996 = vmatprep.subr.mxu0 0.0
      %997 = vmatpush1.msra.mxu0 0.0
      %998 = vmatprep.subr.mxu0 0.0
      %999 = vmatpush1.msra.mxu0 0.0
      %1000 = vmatprep.subr.mxu0 0.0
      %1001 = vmatpush1.msra.mxu0 0.0
      %1002 = vmatprep.subr.mxu0 0.0
      %1003 = vmatpush1.msra.mxu0 0.0
      %1004 = vmatprep.subr.mxu0 0.0
      %1005 = vmatpush1.msra.mxu0 0.0
      %1006 = vmatprep.subr.mxu0 0.0
      %1007 = vmatpush1.msra.mxu0 0.0
      %1008 = vmatprep.subr.mxu0 0.0
      %1009 = vmatpush1.msra.mxu0 0.0
      %1010 = vmatprep.subr.mxu0 0.0
      %1011 = vmatpush1.msra.mxu0 0.0
      %1012 = vmatprep.subr.mxu0 0.0
      %1013 = vmatpush1.msra.mxu0 0.0
      %1014 = vmatprep.subr.mxu0 0.0
      %1015 = vmatpush1.msra.mxu0 0.0
      %1016 = vmatprep.subr.mxu0 0.0
      %1017 = vmatpush1.msra.mxu0 0.0
      %1018 = vmatprep.subr.mxu0 0.0
      %1019 = vmatpush1.msra.mxu0 0.0
      %1020 = vmatprep.subr.mxu0 0.0
      %1021 = vmatpush1.msra.mxu0 0.0
      %1022 = vmatprep.subr.mxu0 0.0
      %1023 = vmatpush1.msra.mxu0 0.0
      %1024 = vmatprep.subr.mxu0 0.0
      %1025 = vmatpush1.msra.mxu0 0.0
      %1026 = vmatprep.subr.mxu0 0.0
      %1027 = vmatpush1.msra.mxu0 0.0
      %1028 = vmatprep.subr.mxu0 0.0
      %1029 = vmatpush1.msra.mxu0 0.0
      %1030 = vmatprep.subr.mxu0 0.0
      %1031 = vmatpush1.msra.mxu0 0.0
      %1032 = vmatprep.subr.mxu0 0.0
      %1033 = vmatpush1.msra.mxu0 0.0
      %1034 = vmatprep.subr.mxu0 0.0
      %1035 = vmatpush1.msra.mxu0 0.0
      %1036 = vmatprep.subr.mxu0 0.0
      %1037 = vmatpush1.msra.mxu0 0.0
      %1038 = vmatprep.subr.mxu0 0.0
      %1039 = vmatpush1.msra.mxu0 0.0
      %1040 = vmatprep.subr.mxu0 0.0
      %1041 = vmatpush1.msra.mxu0 0.0
      %1042 = vmatprep.subr.mxu0 0.0
      %1043 = vmatpush1.msra.mxu0 0.0
      %1044 = vmatprep.subr.mxu0 0.0
      %1045 = vmatpush1.msra.mxu0 0.0
      %1046 = vmatprep.subr.mxu0 0.0
      %1047 = vmatpush1.msra.mxu0 0.0
      %1048 = vmatprep.mubr.f32.mxu0 0.0
      %1049 = vmatmul.mubr.f32.gmra.mrb[0].mxu0 %v961
      %v1050 = vpop.f32.mrb[0].mxu0
      %v1051 = vadd.f32 %v922, %v1050
      %v1052 = vpop.f32.mrb[0].mxu0
      %1053 = vmatprep.mubr.f32.mxu0 0.0
      %1054 = vmatmul.mubr.f32.gmra.mrb[0].mxu0 %v964
      %v1055 = vpop.f32.mrb[0].mxu0
      %v1056 = vadd.f32 %v927, %v1055
      %v1057 = vpop.f32.mrb[0].mxu0
      %1058 = vmatprep.mubr.f32.mxu0 0.0
      %1059 = vmatmul.mubr.f32.gmra.mrb[0].mxu0 %v967
      %v1060 = vpop.f32.mrb[0].mxu0
      %v1061 = vadd.f32 %v932, %v1060
      %v1062 = vpop.f32.mrb[0].mxu0
      %1063 = vmatprep.mubr.f32.mxu0 0.0
      %1064 = vmatmul.mubr.f32.gmra.mrb[0].mxu0 %v970
      %v1065 = vpop.f32.mrb[0].mxu0
      %v1066 = vadd.f32 %v937, %v1065
      %v1067 = vpop.f32.mrb[0].mxu0
      %1068 = vmatprep.mubr.f32.mxu0 0.0
      %1069 = vmatmul.mubr.f32.gmra.mrb[0].mxu0 %v973
      %v1070 = vpop.f32.mrb[0].mxu0
      %v1071 = vadd.f32 %v942, %v1070
      %v1072 = vpop.f32.mrb[0].mxu0
      %1073 = vmatprep.mubr.f32.mxu0 0.0
      %1074 = vmatmul.mubr.f32.gmra.mrb[0].mxu0 %v976
      %v1075 = vpop.f32.mrb[0].mxu0
      %v1076 = vadd.f32 %v947, %v1075
      %v1077 = vpop.f32.mrb[0].mxu0
      %1078 = vmatprep.mubr.f32.mxu0 0.0
      %1079 = vmatmul.mubr.f32.gmra.mrb[0].mxu0 %v979
      %v1080 = vpop.f32.mrb[0].mxu0
      %v1081 = vadd.f32 %v952, %v1080
      %v1082 = vpop.f32.mrb[0].mxu0
      %1083 = vmatprep.mubr.f32.mxu0 0.0
      %1084 = vmatmul.mubr.f32.gmra.mrb[0].mxu0 %v982
      %v1085 = vpop.f32.mrb[0].mxu0
      %v1086 = vadd.f32 %v957, %v1085
      %v1087 = vpop.f32.mrb[0].mxu0
      %1088 = vdwg.mxu0
      %v1089 = vld [vmem:[%s803] sm:$0xff]
      %v1090 = vld [vmem:[%s803 + $0x10] sm:$0xff]
      %v1091 = vld [vmem:[%s803 + $0x20] sm:$0xff]
      %v1092 = vld [vmem:[%s803 + $0x30] sm:$0xff]
      %v1093 = vld [vmem:[%s803 + $0x40] sm:$0xff]
      %v1094 = vld [vmem:[%s803 + $0x50] sm:$0xff]
      %v1095 = vld [vmem:[%s803 + $0x60] sm:$0xff]
      %v1096 = vld [vmem:[%s803 + $0x70] sm:$0xff]
      %s1097 = scalar_lea.vmem %s2, 16
      %v1098 = vld [vmem:[%s1097] sm:$0xff]
      %v1100 = vsel %vm781, %v1089, 0
      %v1103 = vsel %vm781, %v1090, 0
      %v1106 = vsel %vm781, %v1091, 0
      %v1109 = vsel %vm781, %v1092, 0
      %v1112 = vsel %vm781, %v1093, 0
      %v1115 = vsel %vm781, %v1094, 0
      %v1118 = vsel %vm781, %v1095, 0
      %v1121 = vsel %vm781, %v1096, 0
      %1123 = vmatprep.subr.mxu0 0.0
      %1124 = vmatpush1.msra.mxu0 %v1098
      %1125 = vmatprep.subr.mxu0 0.0
      %1126 = vmatpush1.msra.mxu0 0.0
      %1127 = vmatprep.subr.mxu0 0.0
      %1128 = vmatpush1.msra.mxu0 0.0
      %1129 = vmatprep.subr.mxu0 0.0
      %1130 = vmatpush1.msra.mxu0 0.0
      %1131 = vmatprep.subr.mxu0 0.0
      %1132 = vmatpush1.msra.mxu0 0.0
      %1133 = vmatprep.subr.mxu0 0.0
      %1134 = vmatpush1.msra.mxu0 0.0
      %1135 = vmatprep.subr.mxu0 0.0
      %1136 = vmatpush1.msra.mxu0 0.0
      %1137 = vmatprep.subr.mxu0 0.0
      %1138 = vmatpush1.msra.mxu0 0.0
      %1139 = vmatprep.subr.mxu0 0.0
      %1140 = vmatpush1.msra.mxu0 0.0
      %1141 = vmatprep.subr.mxu0 0.0
      %1142 = vmatpush1.msra.mxu0 0.0
      %1143 = vmatprep.subr.mxu0 0.0
      %1144 = vmatpush1.msra.mxu0 0.0
      %1145 = vmatprep.subr.mxu0 0.0
      %1146 = vmatpush1.msra.mxu0 0.0
      %1147 = vmatprep.subr.mxu0 0.0
      %1148 = vmatpush1.msra.mxu0 0.0
      %1149 = vmatprep.subr.mxu0 0.0
      %1150 = vmatpush1.msra.mxu0 0.0
      %1151 = vmatprep.subr.mxu0 0.0
      %1152 = vmatpush1.msra.mxu0 0.0
      %1153 = vmatprep.subr.mxu0 0.0
      %1154 = vmatpush1.msra.mxu0 0.0
      %1155 = vmatprep.subr.mxu0 0.0
      %1156 = vmatpush1.msra.mxu0 0.0
      %1157 = vmatprep.subr.mxu0 0.0
      %1158 = vmatpush1.msra.mxu0 0.0
      %1159 = vmatprep.subr.mxu0 0.0
      %1160 = vmatpush1.msra.mxu0 0.0
      %1161 = vmatprep.subr.mxu0 0.0
      %1162 = vmatpush1.msra.mxu0 0.0
      %1163 = vmatprep.subr.mxu0 0.0
      %1164 = vmatpush1.msra.mxu0 0.0
      %1165 = vmatprep.subr.mxu0 0.0
      %1166 = vmatpush1.msra.mxu0 0.0
      %1167 = vmatprep.subr.mxu0 0.0
      %1168 = vmatpush1.msra.mxu0 0.0
      %1169 = vmatprep.subr.mxu0 0.0
      %1170 = vmatpush1.msra.mxu0 0.0
      %1171 = vmatprep.subr.mxu0 0.0
      %1172 = vmatpush1.msra.mxu0 0.0
      %1173 = vmatprep.subr.mxu0 0.0
      %1174 = vmatpush1.msra.mxu0 0.0
      %1175 = vmatprep.subr.mxu0 0.0
      %1176 = vmatpush1.msra.mxu0 0.0
      %1177 = vmatprep.subr.mxu0 0.0
      %1178 = vmatpush1.msra.mxu0 0.0
      %1179 = vmatprep.subr.mxu0 0.0
      %1180 = vmatpush1.msra.mxu0 0.0
      %1181 = vmatprep.subr.mxu0 0.0
      %1182 = vmatpush1.msra.mxu0 0.0
      %1183 = vmatprep.subr.mxu0 0.0
      %1184 = vmatpush1.msra.mxu0 0.0
      %1185 = vmatprep.subr.mxu0 0.0
      %1186 = vmatpush1.msra.mxu0 0.0
      %1187 = vmatprep.mubr.f32.mxu0 0.0
      %1188 = vmatmul.mubr.f32.gmra.mrb[0].mxu0 %v1100
      %v1189 = vpop.f32.mrb[0].mxu0
      %v1190 = vadd.f32 0.0, %v1189
      %v1191 = vpop.f32.mrb[0].mxu0
      %1192 = vmatprep.mubr.f32.mxu0 0.0
      %1193 = vmatmul.mubr.f32.gmra.mrb[0].mxu0 %v1103
      %v1194 = vpop.f32.mrb[0].mxu0
      %v1195 = vadd.f32 0.0, %v1194
      %v1196 = vpop.f32.mrb[0].mxu0
      %1197 = vmatprep.mubr.f32.mxu0 0.0
      %1198 = vmatmul.mubr.f32.gmra.mrb[0].mxu0 %v1106
      %v1199 = vpop.f32.mrb[0].mxu0
      %v1200 = vadd.f32 0.0, %v1199
      %v1201 = vpop.f32.mrb[0].mxu0
      %1202 = vmatprep.mubr.f32.mxu0 0.0
      %1203 = vmatmul.mubr.f32.gmra.mrb[0].mxu0 %v1109
      %v1204 = vpop.f32.mrb[0].mxu0
      %v1205 = vadd.f32 0.0, %v1204
      %v1206 = vpop.f32.mrb[0].mxu0
      %1207 = vmatprep.mubr.f32.mxu0 0.0
      %1208 = vmatmul.mubr.f32.gmra.mrb[0].mxu0 %v1112
      %v1209 = vpop.f32.mrb[0].mxu0
      %v1210 = vadd.f32 0.0, %v1209
      %v1211 = vpop.f32.mrb[0].mxu0
      %1212 = vmatprep.mubr.f32.mxu0 0.0
      %1213 = vmatmul.mubr.f32.gmra.mrb[0].mxu0 %v1115
      %v1214 = vpop.f32.mrb[0].mxu0
      %v1215 = vadd.f32 0.0, %v1214
      %v1216 = vpop.f32.mrb[0].mxu0
      %1217 = vmatprep.mubr.f32.mxu0 0.0
      %1218 = vmatmul.mubr.f32.gmra.mrb[0].mxu0 %v1118
      %v1219 = vpop.f32.mrb[0].mxu0
      %v1220 = vadd.f32 0.0, %v1219
      %v1221 = vpop.f32.mrb[0].mxu0
      %1222 = vmatprep.mubr.f32.mxu0 0.0
      %1223 = vmatmul.mubr.f32.gmra.mrb[0].mxu0 %v1121
      %v1224 = vpop.f32.mrb[0].mxu0
      %v1225 = vadd.f32 0.0, %v1224
      %v1226 = vpop.f32.mrb[0].mxu0
      %1227 = vdwg.mxu0
      %v1228 = vadd.f32 %v1051, %v1190
      %v1229 = vadd.f32 %v1056, %v1195
      %v1230 = vadd.f32 %v1061, %v1200
      %v1231 = vadd.f32 %v1066, %v1205
      %v1232 = vadd.f32 %v1071, %v1210
      %v1233 = vadd.f32 %v1076, %v1215
      %v1234 = vadd.f32 %v1081, %v1220
      %v1235 = vadd.f32 %v1086, %v1225
      %v1236 = vld [vmem:[%s803 + $0x1] sm:$0xff]
      %v1237 = vld [vmem:[%s803 + $0x11] sm:$0xff]
      %v1238 = vld [vmem:[%s803 + $0x21] sm:$0xff]
      %v1239 = vld [vmem:[%s803 + $0x31] sm:$0xff]
      %v1240 = vld [vmem:[%s803 + $0x41] sm:$0xff]
      %v1241 = vld [vmem:[%s803 + $0x51] sm:$0xff]
      %v1242 = vld [vmem:[%s803 + $0x61] sm:$0xff]
      %v1243 = vld [vmem:[%s803 + $0x71] sm:$0xff]
      %s1244 = scalar_lea.vmem %s2, 24
      %v1245 = vld [vmem:[%s1244] sm:$0xff]
      %v1247 = vsel %vm781, %v1236, 0
      %v1250 = vsel %vm781, %v1237, 0
      %v1253 = vsel %vm781, %v1238, 0
      %v1256 = vsel %vm781, %v1239, 0
      %v1259 = vsel %vm781, %v1240, 0
      %v1262 = vsel %vm781, %v1241, 0
      %v1265 = vsel %vm781, %v1242, 0
      %v1268 = vsel %vm781, %v1243, 0
      %1270 = vmatprep.subr.mxu0 0.0
      %1271 = vmatpush1.msra.mxu0 %v1245
      %1272 = vmatprep.subr.mxu0 0.0
      %1273 = vmatpush1.msra.mxu0 0.0
      %1274 = vmatprep.subr.mxu0 0.0
      %1275 = vmatpush1.msra.mxu0 0.0
      %1276 = vmatprep.subr.mxu0 0.0
      %1277 = vmatpush1.msra.mxu0 0.0
      %1278 = vmatprep.subr.mxu0 0.0
      %1279 = vmatpush1.msra.mxu0 0.0
      %1280 = vmatprep.subr.mxu0 0.0
      %1281 = vmatpush1.msra.mxu0 0.0
      %1282 = vmatprep.subr.mxu0 0.0
      %1283 = vmatpush1.msra.mxu0 0.0
      %1284 = vmatprep.subr.mxu0 0.0
      %1285 = vmatpush1.msra.mxu0 0.0
      %1286 = vmatprep.subr.mxu0 0.0
      %1287 = vmatpush1.msra.mxu0 0.0
      %1288 = vmatprep.subr.mxu0 0.0
      %1289 = vmatpush1.msra.mxu0 0.0
      %1290 = vmatprep.subr.mxu0 0.0
      %1291 = vmatpush1.msra.mxu0 0.0
      %1292 = vmatprep.subr.mxu0 0.0
      %1293 = vmatpush1.msra.mxu0 0.0
      %1294 = vmatprep.subr.mxu0 0.0
      %1295 = vmatpush1.msra.mxu0 0.0
      %1296 = vmatprep.subr.mxu0 0.0
      %1297 = vmatpush1.msra.mxu0 0.0
      %1298 = vmatprep.subr.mxu0 0.0
      %1299 = vmatpush1.msra.mxu0 0.0
      %1300 = vmatprep.subr.mxu0 0.0
      %1301 = vmatpush1.msra.mxu0 0.0
      %1302 = vmatprep.subr.mxu0 0.0
      %1303 = vmatpush1.msra.mxu0 0.0
      %1304 = vmatprep.subr.mxu0 0.0
      %1305 = vmatpush1.msra.mxu0 0.0
      %1306 = vmatprep.subr.mxu0 0.0
      %1307 = vmatpush1.msra.mxu0 0.0
      %1308 = vmatprep.subr.mxu0 0.0
      %1309 = vmatpush1.msra.mxu0 0.0
      %1310 = vmatprep.subr.mxu0 0.0
      %1311 = vmatpush1.msra.mxu0 0.0
      %1312 = vmatprep.subr.mxu0 0.0
      %1313 = vmatpush1.msra.mxu0 0.0
      %1314 = vmatprep.subr.mxu0 0.0
      %1315 = vmatpush1.msra.mxu0 0.0
      %1316 = vmatprep.subr.mxu0 0.0
      %1317 = vmatpush1.msra.mxu0 0.0
      %1318 = vmatprep.subr.mxu0 0.0
      %1319 = vmatpush1.msra.mxu0 0.0
      %1320 = vmatprep.subr.mxu0 0.0
      %1321 = vmatpush1.msra.mxu0 0.0
      %1322 = vmatprep.subr.mxu0 0.0
      %1323 = vmatpush1.msra.mxu0 0.0
      %1324 = vmatprep.subr.mxu0 0.0
      %1325 = vmatpush1.msra.mxu0 0.0
      %1326 = vmatprep.subr.mxu0 0.0
      %1327 = vmatpush1.msra.mxu0 0.0
      %1328 = vmatprep.subr.mxu0 0.0
      %1329 = vmatpush1.msra.mxu0 0.0
      %1330 = vmatprep.subr.mxu0 0.0
      %1331 = vmatpush1.msra.mxu0 0.0
      %1332 = vmatprep.subr.mxu0 0.0
      %1333 = vmatpush1.msra.mxu0 0.0
      %1334 = vmatprep.mubr.f32.mxu0 0.0
      %1335 = vmatmul.mubr.f32.gmra.mrb[0].mxu0 %v1247
      %v1336 = vpop.f32.mrb[0].mxu0
      %v1337 = vadd.f32 0.0, %v1336
      %v1338 = vpop.f32.mrb[0].mxu0
      %1339 = vmatprep.mubr.f32.mxu0 0.0
      %1340 = vmatmul.mubr.f32.gmra.mrb[0].mxu0 %v1250
      %v1341 = vpop.f32.mrb[0].mxu0
      %v1342 = vadd.f32 0.0, %v1341
      %v1343 = vpop.f32.mrb[0].mxu0
      %1344 = vmatprep.mubr.f32.mxu0 0.0
      %1345 = vmatmul.mubr.f32.gmra.mrb[0].mxu0 %v1253
      %v1346 = vpop.f32.mrb[0].mxu0
      %v1347 = vadd.f32 0.0, %v1346
      %v1348 = vpop.f32.mrb[0].mxu0
      %1349 = vmatprep.mubr.f32.mxu0 0.0
      %1350 = vmatmul.mubr.f32.gmra.mrb[0].mxu0 %v1256
      %v1351 = vpop.f32.mrb[0].mxu0
      %v1352 = vadd.f32 0.0, %v1351
      %v1353 = vpop.f32.mrb[0].mxu0
      %1354 = vmatprep.mubr.f32.mxu0 0.0
      %1355 = vmatmul.mubr.f32.gmra.mrb[0].mxu0 %v1259
      %v1356 = vpop.f32.mrb[0].mxu0
      %v1357 = vadd.f32 0.0, %v1356
      %v1358 = vpop.f32.mrb[0].mxu0
      %1359 = vmatprep.mubr.f32.mxu0 0.0
      %1360 = vmatmul.mubr.f32.gmra.mrb[0].mxu0 %v1262
      %v1361 = vpop.f32.mrb[0].mxu0
      %v1362 = vadd.f32 0.0, %v1361
      %v1363 = vpop.f32.mrb[0].mxu0
      %1364 = vmatprep.mubr.f32.mxu0 0.0
      %1365 = vmatmul.mubr.f32.gmra.mrb[0].mxu0 %v1265
      %v1366 = vpop.f32.mrb[0].mxu0
      %v1367 = vadd.f32 0.0, %v1366
      %v1368 = vpop.f32.mrb[0].mxu0
      %1369 = vmatprep.mubr.f32.mxu0 0.0
      %1370 = vmatmul.mubr.f32.gmra.mrb[0].mxu0 %v1268
      %v1371 = vpop.f32.mrb[0].mxu0
      %v1372 = vadd.f32 0.0, %v1371
      %v1373 = vpop.f32.mrb[0].mxu0
      %1374 = vdwg.mxu0
      %v1375 = vadd.f32 %v1228, %v1337
      %v1376 = vadd.f32 %v1229, %v1342
      %v1377 = vadd.f32 %v1230, %v1347
      %v1378 = vadd.f32 %v1231, %v1352
      %v1379 = vadd.f32 %v1232, %v1357
      %v1380 = vadd.f32 %v1233, %v1362
      %v1381 = vadd.f32 %v1234, %v1367
      %v1382 = vadd.f32 %v1235, %v1372
      %1391 = vrot.lane.b32.xlu0 %v171, 116
      %v1392 = vpop.permute.xlu0 %1391
      %1393 = vrot.lane.b32.xlu0 %v173, 116
      %v1394 = vpop.permute.xlu0 %1393
      %1395 = vrot.lane.b32.xlu0 %v175, 116
      %v1396 = vpop.permute.xlu0 %1395
      %1397 = vrot.lane.b32.xlu0 %v177, 116
      %v1398 = vpop.permute.xlu0 %1397
      %1399 = vrot.lane.b32.xlu0 %v179, 116
      %v1400 = vpop.permute.xlu0 %1399
      %1401 = vrot.lane.b32.xlu0 %v181, 116
      %v1402 = vpop.permute.xlu0 %1401
      %1403 = vrot.lane.b32.xlu0 %v183, 116
      %v1404 = vpop.permute.xlu0 %1403
      %1405 = vrot.lane.b32.xlu0 %v185, 116
      %v1406 = vpop.permute.xlu0 %1405
      %vm1415 = vcmask 31744
      %1416 = vst.msk [vmem:[%s170] sm:$0xff] %vm1415, %v1392
      %1417 = vst.msk [vmem:[%s170 + $0x8] sm:$0xff] %vm1415, %v1394
      %1418 = vst.msk [vmem:[%s170 + $0x10] sm:$0xff] %vm1415, %v1396
      %1419 = vst.msk [vmem:[%s170 + $0x18] sm:$0xff] %vm1415, %v1398
      %1420 = vst.msk [vmem:[%s170 + $0x20] sm:$0xff] %vm1415, %v1400
      %1421 = vst.msk [vmem:[%s170 + $0x28] sm:$0xff] %vm1415, %v1402
      %1422 = vst.msk [vmem:[%s170 + $0x30] sm:$0xff] %vm1415, %v1404
      %1423 = vst.msk [vmem:[%s170 + $0x38] sm:$0xff] %vm1415, %v1406
      %1432 = vrot.lane.b32.xlu0 %v1375, 4
      %v1433 = vpop.permute.xlu0 %1432
      %1434 = vrot.lane.b32.xlu0 %v1376, 4
      %v1435 = vpop.permute.xlu0 %1434
      %1436 = vrot.lane.b32.xlu0 %v1377, 4
      %v1437 = vpop.permute.xlu0 %1436
      %1438 = vrot.lane.b32.xlu0 %v1378, 4
      %v1439 = vpop.permute.xlu0 %1438
      %1440 = vrot.lane.b32.xlu0 %v1379, 4
      %v1441 = vpop.permute.xlu0 %1440
      %1442 = vrot.lane.b32.xlu0 %v1380, 4
      %v1443 = vpop.permute.xlu0 %1442
      %1444 = vrot.lane.b32.xlu0 %v1381, 4
      %v1445 = vpop.permute.xlu0 %1444
      %1446 = vrot.lane.b32.xlu0 %v1382, 4
      %v1447 = vpop.permute.xlu0 %1446
      %vm1456 = vcmask 64544
      %1457 = vst.msk [vmem:[%s170] sm:$0xff] %vm1456, %v1433
      %1458 = vst.msk [vmem:[%s170 + $0x8] sm:$0xff] %vm1456, %v1435
      %1459 = vst.msk [vmem:[%s170 + $0x10] sm:$0xff] %vm1456, %v1437
      %1460 = vst.msk [vmem:[%s170 + $0x18] sm:$0xff] %vm1456, %v1439
      %1461 = vst.msk [vmem:[%s170 + $0x20] sm:$0xff] %vm1456, %v1441
      %1462 = vst.msk [vmem:[%s170 + $0x28] sm:$0xff] %vm1456, %v1443
      %1463 = vst.msk [vmem:[%s170 + $0x30] sm:$0xff] %vm1456, %v1445
      %1464 = vst.msk [vmem:[%s170 + $0x38] sm:$0xff] %vm1456, %v1447
      %v1465 = vld [vmem:[#allocation2 + $0x1] sm:$0xff]
      %v1466 = vld [vmem:[#allocation2 + $0x11] sm:$0xff]
      %v1467 = vld [vmem:[#allocation2 + $0x21] sm:$0xff]
      %v1468 = vld [vmem:[#allocation2 + $0x31] sm:$0xff]
      %v1469 = vld [vmem:[#allocation2 + $0x41] sm:$0xff]
      %v1470 = vld [vmem:[#allocation2 + $0x51] sm:$0xff]
      %v1471 = vld [vmem:[#allocation2 + $0x61] sm:$0xff]
      %v1472 = vld [vmem:[#allocation2 + $0x71] sm:$0xff]
      %s1473 = scalar_lea.vmem %s2, 32
      %v1474 = vld [vmem:[%s1473] sm:$0xff]
      %v1475 = vld [vmem:[#allocation2 + $0x2] sm:$0xff]
      %v1476 = vld [vmem:[#allocation2 + $0x12] sm:$0xff]
      %v1477 = vld [vmem:[#allocation2 + $0x22] sm:$0xff]
      %v1478 = vld [vmem:[#allocation2 + $0x32] sm:$0xff]
      %v1479 = vld [vmem:[#allocation2 + $0x42] sm:$0xff]
      %v1480 = vld [vmem:[#allocation2 + $0x52] sm:$0xff]
      %v1481 = vld [vmem:[#allocation2 + $0x62] sm:$0xff]
      %v1482 = vld [vmem:[#allocation2 + $0x72] sm:$0xff]
      %s1483 = scalar_lea.vmem %s2, 40
      %v1484 = vld [vmem:[%s1483] sm:$0xff]
      %v1486 = vsel %vm781, %v1475, 0
      %v1489 = vsel %vm781, %v1476, 0
      %v1492 = vsel %vm781, %v1477, 0
      %v1495 = vsel %vm781, %v1478, 0
      %v1498 = vsel %vm781, %v1479, 0
      %v1501 = vsel %vm781, %v1480, 0
      %v1504 = vsel %vm781, %v1481, 0
      %v1507 = vsel %vm781, %v1482, 0
      %1509 = vmatprep.subr.mxu0 0.0
      %1510 = vmatpush1.msra.mxu0 %v1484
      %1511 = vmatprep.subr.mxu0 0.0
      %1512 = vmatpush1.msra.mxu0 0.0
      %1513 = vmatprep.subr.mxu0 0.0
      %1514 = vmatpush1.msra.mxu0 0.0
      %1515 = vmatprep.subr.mxu0 0.0
      %1516 = vmatpush1.msra.mxu0 0.0
      %1517 = vmatprep.subr.mxu0 0.0
      %1518 = vmatpush1.msra.mxu0 0.0
      %1519 = vmatprep.subr.mxu0 0.0
      %1520 = vmatpush1.msra.mxu0 0.0
      %1521 = vmatprep.subr.mxu0 0.0
      %1522 = vmatpush1.msra.mxu0 0.0
      %1523 = vmatprep.subr.mxu0 0.0
      %1524 = vmatpush1.msra.mxu0 0.0
      %1525 = vmatprep.subr.mxu0 0.0
      %1526 = vmatpush1.msra.mxu0 0.0
      %1527 = vmatprep.subr.mxu0 0.0
      %1528 = vmatpush1.msra.mxu0 0.0
      %1529 = vmatprep.subr.mxu0 0.0
      %1530 = vmatpush1.msra.mxu0 0.0
      %1531 = vmatprep.subr.mxu0 0.0
      %1532 = vmatpush1.msra.mxu0 0.0
      %1533 = vmatprep.subr.mxu0 0.0
      %1534 = vmatpush1.msra.mxu0 0.0
      %1535 = vmatprep.subr.mxu0 0.0
      %1536 = vmatpush1.msra.mxu0 0.0
      %1537 = vmatprep.subr.mxu0 0.0
      %1538 = vmatpush1.msra.mxu0 0.0
      %1539 = vmatprep.subr.mxu0 0.0
      %1540 = vmatpush1.msra.mxu0 0.0
      %1541 = vmatprep.subr.mxu0 0.0
      %1542 = vmatpush1.msra.mxu0 0.0
      %1543 = vmatprep.subr.mxu0 0.0
      %1544 = vmatpush1.msra.mxu0 0.0
      %1545 = vmatprep.subr.mxu0 0.0
      %1546 = vmatpush1.msra.mxu0 0.0
      %1547 = vmatprep.subr.mxu0 0.0
      %1548 = vmatpush1.msra.mxu0 0.0
      %1549 = vmatprep.subr.mxu0 0.0
      %1550 = vmatpush1.msra.mxu0 0.0
      %1551 = vmatprep.subr.mxu0 0.0
      %1552 = vmatpush1.msra.mxu0 0.0
      %1553 = vmatprep.subr.mxu0 0.0
      %1554 = vmatpush1.msra.mxu0 0.0
      %1555 = vmatprep.subr.mxu0 0.0
      %1556 = vmatpush1.msra.mxu0 0.0
      %1557 = vmatprep.subr.mxu0 0.0
      %1558 = vmatpush1.msra.mxu0 0.0
      %1559 = vmatprep.subr.mxu0 0.0
      %1560 = vmatpush1.msra.mxu0 0.0
      %1561 = vmatprep.subr.mxu0 0.0
      %1562 = vmatpush1.msra.mxu0 0.0
      %1563 = vmatprep.subr.mxu0 0.0
      %1564 = vmatpush1.msra.mxu0 0.0
      %1565 = vmatprep.subr.mxu0 0.0
      %1566 = vmatpush1.msra.mxu0 0.0
      %1567 = vmatprep.subr.mxu0 0.0
      %1568 = vmatpush1.msra.mxu0 0.0
      %1569 = vmatprep.subr.mxu0 0.0
      %1570 = vmatpush1.msra.mxu0 0.0
      %1571 = vmatprep.subr.mxu0 0.0
      %1572 = vmatpush1.msra.mxu0 0.0
      %1573 = vmatprep.mubr.f32.mxu0 0.0
      %1574 = vmatmul.mubr.f32.gmra.mrb[0].mxu0 %v1486
      %v1575 = vpop.f32.mrb[0].mxu0
      %v1576 = vadd.f32 0.0, %v1575
      %v1577 = vpop.f32.mrb[0].mxu0
      %1578 = vmatprep.mubr.f32.mxu0 0.0
      %1579 = vmatmul.mubr.f32.gmra.mrb[0].mxu0 %v1489
      %v1580 = vpop.f32.mrb[0].mxu0
      %v1581 = vadd.f32 0.0, %v1580
      %v1582 = vpop.f32.mrb[0].mxu0
      %1583 = vmatprep.mubr.f32.mxu0 0.0
      %1584 = vmatmul.mubr.f32.gmra.mrb[0].mxu0 %v1492
      %v1585 = vpop.f32.mrb[0].mxu0
      %v1586 = vadd.f32 0.0, %v1585
      %v1587 = vpop.f32.mrb[0].mxu0
      %1588 = vmatprep.mubr.f32.mxu0 0.0
      %1589 = vmatmul.mubr.f32.gmra.mrb[0].mxu0 %v1495
      %v1590 = vpop.f32.mrb[0].mxu0
      %v1591 = vadd.f32 0.0, %v1590
      %v1592 = vpop.f32.mrb[0].mxu0
      %1593 = vmatprep.mubr.f32.mxu0 0.0
      %1594 = vmatmul.mubr.f32.gmra.mrb[0].mxu0 %v1498
      %v1595 = vpop.f32.mrb[0].mxu0
      %v1596 = vadd.f32 0.0, %v1595
      %v1597 = vpop.f32.mrb[0].mxu0
      %1598 = vmatprep.mubr.f32.mxu0 0.0
      %1599 = vmatmul.mubr.f32.gmra.mrb[0].mxu0 %v1501
      %v1600 = vpop.f32.mrb[0].mxu0
      %v1601 = vadd.f32 0.0, %v1600
      %v1602 = vpop.f32.mrb[0].mxu0
      %1603 = vmatprep.mubr.f32.mxu0 0.0
      %1604 = vmatmul.mubr.f32.gmra.mrb[0].mxu0 %v1504
      %v1605 = vpop.f32.mrb[0].mxu0
      %v1606 = vadd.f32 0.0, %v1605
      %v1607 = vpop.f32.mrb[0].mxu0
      %1608 = vmatprep.mubr.f32.mxu0 0.0
      %1609 = vmatmul.mubr.f32.gmra.mrb[0].mxu0 %v1507
      %v1610 = vpop.f32.mrb[0].mxu0
      %v1611 = vadd.f32 0.0, %v1610
      %v1612 = vpop.f32.mrb[0].mxu0
      %1613 = vdwg.mxu0
      %v1615 = vsel %vm781, %v1465, 0
      %v1618 = vsel %vm781, %v1466, 0
      %v1621 = vsel %vm781, %v1467, 0
      %v1624 = vsel %vm781, %v1468, 0
      %v1627 = vsel %vm781, %v1469, 0
      %v1630 = vsel %vm781, %v1470, 0
      %v1633 = vsel %vm781, %v1471, 0
      %v1636 = vsel %vm781, %v1472, 0
      %1638 = vmatprep.subr.mxu0 0.0
      %1639 = vmatpush1.msra.mxu0 %v1474
      %1640 = vmatprep.subr.mxu0 0.0
      %1641 = vmatpush1.msra.mxu0 0.0
      %1642 = vmatprep.subr.mxu0 0.0
      %1643 = vmatpush1.msra.mxu0 0.0
      %1644 = vmatprep.subr.mxu0 0.0
      %1645 = vmatpush1.msra.mxu0 0.0
      %1646 = vmatprep.subr.mxu0 0.0
      %1647 = vmatpush1.msra.mxu0 0.0
      %1648 = vmatprep.subr.mxu0 0.0
      %1649 = vmatpush1.msra.mxu0 0.0
      %1650 = vmatprep.subr.mxu0 0.0
      %1651 = vmatpush1.msra.mxu0 0.0
      %1652 = vmatprep.subr.mxu0 0.0
      %1653 = vmatpush1.msra.mxu0 0.0
      %1654 = vmatprep.subr.mxu0 0.0
      %1655 = vmatpush1.msra.mxu0 0.0
      %1656 = vmatprep.subr.mxu0 0.0
      %1657 = vmatpush1.msra.mxu0 0.0
      %1658 = vmatprep.subr.mxu0 0.0
      %1659 = vmatpush1.msra.mxu0 0.0
      %1660 = vmatprep.subr.mxu0 0.0
      %1661 = vmatpush1.msra.mxu0 0.0
      %1662 = vmatprep.subr.mxu0 0.0
      %1663 = vmatpush1.msra.mxu0 0.0
      %1664 = vmatprep.subr.mxu0 0.0
      %1665 = vmatpush1.msra.mxu0 0.0
      %1666 = vmatprep.subr.mxu0 0.0
      %1667 = vmatpush1.msra.mxu0 0.0
      %1668 = vmatprep.subr.mxu0 0.0
      %1669 = vmatpush1.msra.mxu0 0.0
      %1670 = vmatprep.subr.mxu0 0.0
      %1671 = vmatpush1.msra.mxu0 0.0
      %1672 = vmatprep.subr.mxu0 0.0
      %1673 = vmatpush1.msra.mxu0 0.0
      %1674 = vmatprep.subr.mxu0 0.0
      %1675 = vmatpush1.msra.mxu0 0.0
      %1676 = vmatprep.subr.mxu0 0.0
      %1677 = vmatpush1.msra.mxu0 0.0
      %1678 = vmatprep.subr.mxu0 0.0
      %1679 = vmatpush1.msra.mxu0 0.0
      %1680 = vmatprep.subr.mxu0 0.0
      %1681 = vmatpush1.msra.mxu0 0.0
      %1682 = vmatprep.subr.mxu0 0.0
      %1683 = vmatpush1.msra.mxu0 0.0
      %1684 = vmatprep.subr.mxu0 0.0
      %1685 = vmatpush1.msra.mxu0 0.0
      %1686 = vmatprep.subr.mxu0 0.0
      %1687 = vmatpush1.msra.mxu0 0.0
      %1688 = vmatprep.subr.mxu0 0.0
      %1689 = vmatpush1.msra.mxu0 0.0
      %1690 = vmatprep.subr.mxu0 0.0
      %1691 = vmatpush1.msra.mxu0 0.0
      %1692 = vmatprep.subr.mxu0 0.0
      %1693 = vmatpush1.msra.mxu0 0.0
      %1694 = vmatprep.subr.mxu0 0.0
      %1695 = vmatpush1.msra.mxu0 0.0
      %1696 = vmatprep.subr.mxu0 0.0
      %1697 = vmatpush1.msra.mxu0 0.0
      %1698 = vmatprep.subr.mxu0 0.0
      %1699 = vmatpush1.msra.mxu0 0.0
      %1700 = vmatprep.subr.mxu0 0.0
      %1701 = vmatpush1.msra.mxu0 0.0
      %1702 = vmatprep.mubr.f32.mxu0 0.0
      %1703 = vmatmul.mubr.f32.gmra.mrb[0].mxu0 %v1615
      %v1704 = vpop.f32.mrb[0].mxu0
      %v1705 = vadd.f32 %v1576, %v1704
      %v1706 = vpop.f32.mrb[0].mxu0
      %1707 = vmatprep.mubr.f32.mxu0 0.0
      %1708 = vmatmul.mubr.f32.gmra.mrb[0].mxu0 %v1618
      %v1709 = vpop.f32.mrb[0].mxu0
      %v1710 = vadd.f32 %v1581, %v1709
      %v1711 = vpop.f32.mrb[0].mxu0
      %1712 = vmatprep.mubr.f32.mxu0 0.0
      %1713 = vmatmul.mubr.f32.gmra.mrb[0].mxu0 %v1621
      %v1714 = vpop.f32.mrb[0].mxu0
      %v1715 = vadd.f32 %v1586, %v1714
      %v1716 = vpop.f32.mrb[0].mxu0
      %1717 = vmatprep.mubr.f32.mxu0 0.0
      %1718 = vmatmul.mubr.f32.gmra.mrb[0].mxu0 %v1624
      %v1719 = vpop.f32.mrb[0].mxu0
      %v1720 = vadd.f32 %v1591, %v1719
      %v1721 = vpop.f32.mrb[0].mxu0
      %1722 = vmatprep.mubr.f32.mxu0 0.0
      %1723 = vmatmul.mubr.f32.gmra.mrb[0].mxu0 %v1627
      %v1724 = vpop.f32.mrb[0].mxu0
      %v1725 = vadd.f32 %v1596, %v1724
      %v1726 = vpop.f32.mrb[0].mxu0
      %1727 = vmatprep.mubr.f32.mxu0 0.0
      %1728 = vmatmul.mubr.f32.gmra.mrb[0].mxu0 %v1630
      %v1729 = vpop.f32.mrb[0].mxu0
      %v1730 = vadd.f32 %v1601, %v1729
      %v1731 = vpop.f32.mrb[0].mxu0
      %1732 = vmatprep.mubr.f32.mxu0 0.0
      %1733 = vmatmul.mubr.f32.gmra.mrb[0].mxu0 %v1633
      %v1734 = vpop.f32.mrb[0].mxu0
      %v1735 = vadd.f32 %v1606, %v1734
      %v1736 = vpop.f32.mrb[0].mxu0
      %1737 = vmatprep.mubr.f32.mxu0 0.0
      %1738 = vmatmul.mubr.f32.gmra.mrb[0].mxu0 %v1636
      %v1739 = vpop.f32.mrb[0].mxu0
      %v1740 = vadd.f32 %v1611, %v1739
      %v1741 = vpop.f32.mrb[0].mxu0
      %1742 = vdwg.mxu0
      %v1743 = vld [vmem:[%s803 + $0x1] sm:$0xff]
      %v1744 = vld [vmem:[%s803 + $0x11] sm:$0xff]
      %v1745 = vld [vmem:[%s803 + $0x21] sm:$0xff]
      %v1746 = vld [vmem:[%s803 + $0x31] sm:$0xff]
      %v1747 = vld [vmem:[%s803 + $0x41] sm:$0xff]
      %v1748 = vld [vmem:[%s803 + $0x51] sm:$0xff]
      %v1749 = vld [vmem:[%s803 + $0x61] sm:$0xff]
      %v1750 = vld [vmem:[%s803 + $0x71] sm:$0xff]
      %s1751 = scalar_lea.vmem %s2, 48
      %v1752 = vld [vmem:[%s1751] sm:$0xff]
      %v1754 = vsel %vm781, %v1743, 0
      %v1757 = vsel %vm781, %v1744, 0
      %v1760 = vsel %vm781, %v1745, 0
      %v1763 = vsel %vm781, %v1746, 0
      %v1766 = vsel %vm781, %v1747, 0
      %v1769 = vsel %vm781, %v1748, 0
      %v1772 = vsel %vm781, %v1749, 0
      %v1775 = vsel %vm781, %v1750, 0
      %1777 = vmatprep.subr.mxu0 0.0
      %1778 = vmatpush1.msra.mxu0 %v1752
      %1779 = vmatprep.subr.mxu0 0.0
      %1780 = vmatpush1.msra.mxu0 0.0
      %1781 = vmatprep.subr.mxu0 0.0
      %1782 = vmatpush1.msra.mxu0 0.0
      %1783 = vmatprep.subr.mxu0 0.0
      %1784 = vmatpush1.msra.mxu0 0.0
      %1785 = vmatprep.subr.mxu0 0.0
      %1786 = vmatpush1.msra.mxu0 0.0
      %1787 = vmatprep.subr.mxu0 0.0
      %1788 = vmatpush1.msra.mxu0 0.0
      %1789 = vmatprep.subr.mxu0 0.0
      %1790 = vmatpush1.msra.mxu0 0.0
      %1791 = vmatprep.subr.mxu0 0.0
      %1792 = vmatpush1.msra.mxu0 0.0
      %1793 = vmatprep.subr.mxu0 0.0
      %1794 = vmatpush1.msra.mxu0 0.0
      %1795 = vmatprep.subr.mxu0 0.0
      %1796 = vmatpush1.msra.mxu0 0.0
      %1797 = vmatprep.subr.mxu0 0.0
      %1798 = vmatpush1.msra.mxu0 0.0
      %1799 = vmatprep.subr.mxu0 0.0
      %1800 = vmatpush1.msra.mxu0 0.0
      %1801 = vmatprep.subr.mxu0 0.0
      %1802 = vmatpush1.msra.mxu0 0.0
      %1803 = vmatprep.subr.mxu0 0.0
      %1804 = vmatpush1.msra.mxu0 0.0
      %1805 = vmatprep.subr.mxu0 0.0
      %1806 = vmatpush1.msra.mxu0 0.0
      %1807 = vmatprep.subr.mxu0 0.0
      %1808 = vmatpush1.msra.mxu0 0.0
      %1809 = vmatprep.subr.mxu0 0.0
      %1810 = vmatpush1.msra.mxu0 0.0
      %1811 = vmatprep.subr.mxu0 0.0
      %1812 = vmatpush1.msra.mxu0 0.0
      %1813 = vmatprep.subr.mxu0 0.0
      %1814 = vmatpush1.msra.mxu0 0.0
      %1815 = vmatprep.subr.mxu0 0.0
      %1816 = vmatpush1.msra.mxu0 0.0
      %1817 = vmatprep.subr.mxu0 0.0
      %1818 = vmatpush1.msra.mxu0 0.0
      %1819 = vmatprep.subr.mxu0 0.0
      %1820 = vmatpush1.msra.mxu0 0.0
      %1821 = vmatprep.subr.mxu0 0.0
      %1822 = vmatpush1.msra.mxu0 0.0
      %1823 = vmatprep.subr.mxu0 0.0
      %1824 = vmatpush1.msra.mxu0 0.0
      %1825 = vmatprep.subr.mxu0 0.0
      %1826 = vmatpush1.msra.mxu0 0.0
      %1827 = vmatprep.subr.mxu0 0.0
      %1828 = vmatpush1.msra.mxu0 0.0
      %1829 = vmatprep.subr.mxu0 0.0
      %1830 = vmatpush1.msra.mxu0 0.0
      %1831 = vmatprep.subr.mxu0 0.0
      %1832 = vmatpush1.msra.mxu0 0.0
      %1833 = vmatprep.subr.mxu0 0.0
      %1834 = vmatpush1.msra.mxu0 0.0
      %1835 = vmatprep.subr.mxu0 0.0
      %1836 = vmatpush1.msra.mxu0 0.0
      %1837 = vmatprep.subr.mxu0 0.0
      %1838 = vmatpush1.msra.mxu0 0.0
      %1839 = vmatprep.subr.mxu0 0.0
      %1840 = vmatpush1.msra.mxu0 0.0
      %1841 = vmatprep.mubr.f32.mxu0 0.0
      %1842 = vmatmul.mubr.f32.gmra.mrb[0].mxu0 %v1754
      %v1843 = vpop.f32.mrb[0].mxu0
      %v1844 = vadd.f32 0.0, %v1843
      %v1845 = vpop.f32.mrb[0].mxu0
      %1846 = vmatprep.mubr.f32.mxu0 0.0
      %1847 = vmatmul.mubr.f32.gmra.mrb[0].mxu0 %v1757
      %v1848 = vpop.f32.mrb[0].mxu0
      %v1849 = vadd.f32 0.0, %v1848
      %v1850 = vpop.f32.mrb[0].mxu0
      %1851 = vmatprep.mubr.f32.mxu0 0.0
      %1852 = vmatmul.mubr.f32.gmra.mrb[0].mxu0 %v1760
      %v1853 = vpop.f32.mrb[0].mxu0
      %v1854 = vadd.f32 0.0, %v1853
      %v1855 = vpop.f32.mrb[0].mxu0
      %1856 = vmatprep.mubr.f32.mxu0 0.0
      %1857 = vmatmul.mubr.f32.gmra.mrb[0].mxu0 %v1763
      %v1858 = vpop.f32.mrb[0].mxu0
      %v1859 = vadd.f32 0.0, %v1858
      %v1860 = vpop.f32.mrb[0].mxu0
      %1861 = vmatprep.mubr.f32.mxu0 0.0
      %1862 = vmatmul.mubr.f32.gmra.mrb[0].mxu0 %v1766
      %v1863 = vpop.f32.mrb[0].mxu0
      %v1864 = vadd.f32 0.0, %v1863
      %v1865 = vpop.f32.mrb[0].mxu0
      %1866 = vmatprep.mubr.f32.mxu0 0.0
      %1867 = vmatmul.mubr.f32.gmra.mrb[0].mxu0 %v1769
      %v1868 = vpop.f32.mrb[0].mxu0
      %v1869 = vadd.f32 0.0, %v1868
      %v1870 = vpop.f32.mrb[0].mxu0
      %1871 = vmatprep.mubr.f32.mxu0 0.0
      %1872 = vmatmul.mubr.f32.gmra.mrb[0].mxu0 %v1772
      %v1873 = vpop.f32.mrb[0].mxu0
      %v1874 = vadd.f32 0.0, %v1873
      %v1875 = vpop.f32.mrb[0].mxu0
      %1876 = vmatprep.mubr.f32.mxu0 0.0
      %1877 = vmatmul.mubr.f32.gmra.mrb[0].mxu0 %v1775
      %v1878 = vpop.f32.mrb[0].mxu0
      %v1879 = vadd.f32 0.0, %v1878
      %v1880 = vpop.f32.mrb[0].mxu0
      %1881 = vdwg.mxu0
      %v1882 = vadd.f32 %v1705, %v1844
      %v1883 = vadd.f32 %v1710, %v1849
      %v1884 = vadd.f32 %v1715, %v1854
      %v1885 = vadd.f32 %v1720, %v1859
      %v1886 = vadd.f32 %v1725, %v1864
      %v1887 = vadd.f32 %v1730, %v1869
      %v1888 = vadd.f32 %v1735, %v1874
      %v1889 = vadd.f32 %v1740, %v1879
      %v1890 = vld [vmem:[%s803 + $0x2] sm:$0xff]
      %v1891 = vld [vmem:[%s803 + $0x12] sm:$0xff]
      %v1892 = vld [vmem:[%s803 + $0x22] sm:$0xff]
      %v1893 = vld [vmem:[%s803 + $0x32] sm:$0xff]
      %v1894 = vld [vmem:[%s803 + $0x42] sm:$0xff]
      %v1895 = vld [vmem:[%s803 + $0x52] sm:$0xff]
      %v1896 = vld [vmem:[%s803 + $0x62] sm:$0xff]
      %v1897 = vld [vmem:[%s803 + $0x72] sm:$0xff]
      %s1898 = scalar_lea.vmem %s2, 56
      %v1899 = vld [vmem:[%s1898] sm:$0xff]
      %v1901 = vsel %vm781, %v1890, 0
      %v1904 = vsel %vm781, %v1891, 0
      %v1907 = vsel %vm781, %v1892, 0
      %v1910 = vsel %vm781, %v1893, 0
      %v1913 = vsel %vm781, %v1894, 0
      %v1916 = vsel %vm781, %v1895, 0
      %v1919 = vsel %vm781, %v1896, 0
      %v1922 = vsel %vm781, %v1897, 0
      %1924 = vmatprep.subr.mxu0 0.0
      %1925 = vmatpush1.msra.mxu0 %v1899
      %1926 = vmatprep.subr.mxu0 0.0
      %1927 = vmatpush1.msra.mxu0 0.0
      %1928 = vmatprep.subr.mxu0 0.0
      %1929 = vmatpush1.msra.mxu0 0.0
      %1930 = vmatprep.subr.mxu0 0.0
      %1931 = vmatpush1.msra.mxu0 0.0
      %1932 = vmatprep.subr.mxu0 0.0
      %1933 = vmatpush1.msra.mxu0 0.0
      %1934 = vmatprep.subr.mxu0 0.0
      %1935 = vmatpush1.msra.mxu0 0.0
      %1936 = vmatprep.subr.mxu0 0.0
      %1937 = vmatpush1.msra.mxu0 0.0
      %1938 = vmatprep.subr.mxu0 0.0
      %1939 = vmatpush1.msra.mxu0 0.0
      %1940 = vmatprep.subr.mxu0 0.0
      %1941 = vmatpush1.msra.mxu0 0.0
      %1942 = vmatprep.subr.mxu0 0.0
      %1943 = vmatpush1.msra.mxu0 0.0
      %1944 = vmatprep.subr.mxu0 0.0
      %1945 = vmatpush1.msra.mxu0 0.0
      %1946 = vmatprep.subr.mxu0 0.0
      %1947 = vmatpush1.msra.mxu0 0.0
      %1948 = vmatprep.subr.mxu0 0.0
      %1949 = vmatpush1.msra.mxu0 0.0
      %1950 = vmatprep.subr.mxu0 0.0
      %1951 = vmatpush1.msra.mxu0 0.0
      %1952 = vmatprep.subr.mxu0 0.0
      %1953 = vmatpush1.msra.mxu0 0.0
      %1954 = vmatprep.subr.mxu0 0.0
      %1955 = vmatpush1.msra.mxu0 0.0
      %1956 = vmatprep.subr.mxu0 0.0
      %1957 = vmatpush1.msra.mxu0 0.0
      %1958 = vmatprep.subr.mxu0 0.0
      %1959 = vmatpush1.msra.mxu0 0.0
      %1960 = vmatprep.subr.mxu0 0.0
      %1961 = vmatpush1.msra.mxu0 0.0
      %1962 = vmatprep.subr.mxu0 0.0
      %1963 = vmatpush1.msra.mxu0 0.0
      %1964 = vmatprep.subr.mxu0 0.0
      %1965 = vmatpush1.msra.mxu0 0.0
      %1966 = vmatprep.subr.mxu0 0.0
      %1967 = vmatpush1.msra.mxu0 0.0
      %1968 = vmatprep.subr.mxu0 0.0
      %1969 = vmatpush1.msra.mxu0 0.0
      %1970 = vmatprep.subr.mxu0 0.0
      %1971 = vmatpush1.msra.mxu0 0.0
      %1972 = vmatprep.subr.mxu0 0.0
      %1973 = vmatpush1.msra.mxu0 0.0
      %1974 = vmatprep.subr.mxu0 0.0
      %1975 = vmatpush1.msra.mxu0 0.0
      %1976 = vmatprep.subr.mxu0 0.0
      %1977 = vmatpush1.msra.mxu0 0.0
      %1978 = vmatprep.subr.mxu0 0.0
      %1979 = vmatpush1.msra.mxu0 0.0
      %1980 = vmatprep.subr.mxu0 0.0
      %1981 = vmatpush1.msra.mxu0 0.0
      %1982 = vmatprep.subr.mxu0 0.0
      %1983 = vmatpush1.msra.mxu0 0.0
      %1984 = vmatprep.subr.mxu0 0.0
      %1985 = vmatpush1.msra.mxu0 0.0
      %1986 = vmatprep.subr.mxu0 0.0
      %1987 = vmatpush1.msra.mxu0 0.0
      %1988 = vmatprep.mubr.f32.mxu0 0.0
      %1989 = vmatmul.mubr.f32.gmra.mrb[0].mxu0 %v1901
      %v1990 = vpop.f32.mrb[0].mxu0
      %v1991 = vadd.f32 0.0, %v1990
      %v1992 = vpop.f32.mrb[0].mxu0
      %1993 = vmatprep.mubr.f32.mxu0 0.0
      %1994 = vmatmul.mubr.f32.gmra.mrb[0].mxu0 %v1904
      %v1995 = vpop.f32.mrb[0].mxu0
      %v1996 = vadd.f32 0.0, %v1995
      %v1997 = vpop.f32.mrb[0].mxu0
      %1998 = vmatprep.mubr.f32.mxu0 0.0
      %1999 = vmatmul.mubr.f32.gmra.mrb[0].mxu0 %v1907
      %v2000 = vpop.f32.mrb[0].mxu0
      %v2001 = vadd.f32 0.0, %v2000
      %v2002 = vpop.f32.mrb[0].mxu0
      %2003 = vmatprep.mubr.f32.mxu0 0.0
      %2004 = vmatmul.mubr.f32.gmra.mrb[0].mxu0 %v1910
      %v2005 = vpop.f32.mrb[0].mxu0
      %v2006 = vadd.f32 0.0, %v2005
      %v2007 = vpop.f32.mrb[0].mxu0
      %2008 = vmatprep.mubr.f32.mxu0 0.0
      %2009 = vmatmul.mubr.f32.gmra.mrb[0].mxu0 %v1913
      %v2010 = vpop.f32.mrb[0].mxu0
      %v2011 = vadd.f32 0.0, %v2010
      %v2012 = vpop.f32.mrb[0].mxu0
      %2013 = vmatprep.mubr.f32.mxu0 0.0
      %2014 = vmatmul.mubr.f32.gmra.mrb[0].mxu0 %v1916
      %v2015 = vpop.f32.mrb[0].mxu0
      %v2016 = vadd.f32 0.0, %v2015
      %v2017 = vpop.f32.mrb[0].mxu0
      %2018 = vmatprep.mubr.f32.mxu0 0.0
      %2019 = vmatmul.mubr.f32.gmra.mrb[0].mxu0 %v1919
      %v2020 = vpop.f32.mrb[0].mxu0
      %v2021 = vadd.f32 0.0, %v2020
      %v2022 = vpop.f32.mrb[0].mxu0
      %2023 = vmatprep.mubr.f32.mxu0 0.0
      %2024 = vmatmul.mubr.f32.gmra.mrb[0].mxu0 %v1922
      %v2025 = vpop.f32.mrb[0].mxu0
      %v2026 = vadd.f32 0.0, %v2025
      %v2027 = vpop.f32.mrb[0].mxu0
      %2028 = vdwg.mxu0
      %v2029 = vadd.f32 %v1882, %v1991
      %v2030 = vadd.f32 %v1883, %v1996
      %v2031 = vadd.f32 %v1884, %v2001
      %v2032 = vadd.f32 %v1885, %v2006
      %v2033 = vadd.f32 %v1886, %v2011
      %v2034 = vadd.f32 %v1887, %v2016
      %v2035 = vadd.f32 %v1888, %v2021
      %v2036 = vadd.f32 %v1889, %v2026
      %2045 = vrot.lane.b32.xlu0 %v171, 120
      %v2046 = vpop.permute.xlu0 %2045
      %2047 = vrot.lane.b32.xlu0 %v172, 120
      %v2048 = vpop.permute.xlu0 %2047
      %2049 = vrot.lane.b32.xlu0 %v173, 120
      %v2050 = vpop.permute.xlu0 %2049
      %2051 = vrot.lane.b32.xlu0 %v174, 120
      %v2052 = vpop.permute.xlu0 %2051
      %2053 = vrot.lane.b32.xlu0 %v175, 120
      %v2054 = vpop.permute.xlu0 %2053
      %2055 = vrot.lane.b32.xlu0 %v176, 120
      %v2056 = vpop.permute.xlu0 %2055
      %2057 = vrot.lane.b32.xlu0 %v177, 120
      %v2058 = vpop.permute.xlu0 %2057
      %2059 = vrot.lane.b32.xlu0 %v178, 120
      %v2060 = vpop.permute.xlu0 %2059
      %2061 = vrot.lane.b32.xlu0 %v179, 120
      %v2062 = vpop.permute.xlu0 %2061
      %2063 = vrot.lane.b32.xlu0 %v180, 120
      %v2064 = vpop.permute.xlu0 %2063
      %2065 = vrot.lane.b32.xlu0 %v181, 120
      %v2066 = vpop.permute.xlu0 %2065
      %2067 = vrot.lane.b32.xlu0 %v182, 120
      %v2068 = vpop.permute.xlu0 %2067
      %2069 = vrot.lane.b32.xlu0 %v183, 120
      %v2070 = vpop.permute.xlu0 %2069
      %2071 = vrot.lane.b32.xlu0 %v184, 120
      %v2072 = vpop.permute.xlu0 %2071
      %2073 = vrot.lane.b32.xlu0 %v185, 120
      %v2074 = vpop.permute.xlu0 %2073
      %2075 = vrot.lane.b32.xlu0 %v186, 120
      %v2076 = vpop.permute.xlu0 %2075
      %s2093 = scalar_lea.vmem %s170, 64
      %vm2094 = vcmask 31745
      %2095 = vst.msk [vmem:[%s2093 - $0x1] sm:$0xfe] %vm2094, %v2046
      %vm2096 = vcmask 24576
      %2097 = vst.msk [vmem:[%s2093 + $0x7] sm:$0x1] %vm2096, %v2048
      %2098 = vst.msk [vmem:[%s2093 + $0x7] sm:$0xfe] %vm2094, %v2050
      %2099 = vst.msk [vmem:[%s2093 + $0xf] sm:$0x1] %vm2096, %v2052
      %2100 = vst.msk [vmem:[%s2093 + $0xf] sm:$0xfe] %vm2094, %v2054
      %2101 = vst.msk [vmem:[%s2093 + $0x17] sm:$0x1] %vm2096, %v2056
      %2102 = vst.msk [vmem:[%s2093 + $0x17] sm:$0xfe] %vm2094, %v2058
      %2103 = vst.msk [vmem:[%s2093 + $0x1f] sm:$0x1] %vm2096, %v2060
      %2104 = vst.msk [vmem:[%s2093 + $0x1f] sm:$0xfe] %vm2094, %v2062
      %2105 = vst.msk [vmem:[%s2093 + $0x27] sm:$0x1] %vm2096, %v2064
      %2106 = vst.msk [vmem:[%s2093 + $0x27] sm:$0xfe] %vm2094, %v2066
      %2107 = vst.msk [vmem:[%s2093 + $0x2f] sm:$0x1] %vm2096, %v2068
      %2108 = vst.msk [vmem:[%s2093 + $0x2f] sm:$0xfe] %vm2094, %v2070
      %2109 = vst.msk [vmem:[%s2093 + $0x37] sm:$0x1] %vm2096, %v2072
      %2110 = vst.msk [vmem:[%s2093 + $0x37] sm:$0xfe] %vm2094, %v2074
      %2111 = vst.msk [vmem:[%s2093 + $0x3f] sm:$0x1] %vm2096, %v2076
      %2120 = vrot.lane.b32.xlu0 %v2029, 4
      %v2121 = vpop.permute.xlu0 %2120
      %2122 = vrot.lane.b32.xlu0 %v2030, 4
      %v2123 = vpop.permute.xlu0 %2122
      %2124 = vrot.lane.b32.xlu0 %v2031, 4
      %v2125 = vpop.permute.xlu0 %2124
      %2126 = vrot.lane.b32.xlu0 %v2032, 4
      %v2127 = vpop.permute.xlu0 %2126
      %2128 = vrot.lane.b32.xlu0 %v2033, 4
      %v2129 = vpop.permute.xlu0 %2128
      %2130 = vrot.lane.b32.xlu0 %v2034, 4
      %v2131 = vpop.permute.xlu0 %2130
      %2132 = vrot.lane.b32.xlu0 %v2035, 4
      %v2133 = vpop.permute.xlu0 %2132
      %2134 = vrot.lane.b32.xlu0 %v2036, 4
      %v2135 = vpop.permute.xlu0 %2134
      %2144 = vst.msk [vmem:[%s2093] sm:$0xff] %vm1456, %v2121
      %2145 = vst.msk [vmem:[%s2093 + $0x8] sm:$0xff] %vm1456, %v2123
      %2146 = vst.msk [vmem:[%s2093 + $0x10] sm:$0xff] %vm1456, %v2125
      %2147 = vst.msk [vmem:[%s2093 + $0x18] sm:$0xff] %vm1456, %v2127
      %2148 = vst.msk [vmem:[%s2093 + $0x20] sm:$0xff] %vm1456, %v2129
      %2149 = vst.msk [vmem:[%s2093 + $0x28] sm:$0xff] %vm1456, %v2131
      %2150 = vst.msk [vmem:[%s2093 + $0x30] sm:$0xff] %vm1456, %v2133
      %2151 = vst.msk [vmem:[%s2093 + $0x38] sm:$0xff] %vm1456, %v2135
      %v2152 = vld [vmem:[%s803] sm:$0xff]
      %v2153 = vld [vmem:[%s803 + $0x10] sm:$0xff]
      %v2154 = vld [vmem:[%s803 + $0x20] sm:$0xff]
      %v2155 = vld [vmem:[%s803 + $0x30] sm:$0xff]
      %v2156 = vld [vmem:[%s803 + $0x40] sm:$0xff]
      %v2157 = vld [vmem:[%s803 + $0x50] sm:$0xff]
      %v2158 = vld [vmem:[%s803 + $0x60] sm:$0xff]
      %v2159 = vld [vmem:[%s803 + $0x70] sm:$0xff]
      %s2160 = scalar_lea.vmem %s2, 64
      %v2161 = vld [vmem:[%s2160] sm:$0xff]
      %v2162 = vld [vmem:[%s803 + $0x1] sm:$0xff]
      %v2163 = vld [vmem:[%s803 + $0x11] sm:$0xff]
      %v2164 = vld [vmem:[%s803 + $0x21] sm:$0xff]
      %v2165 = vld [vmem:[%s803 + $0x31] sm:$0xff]
      %v2166 = vld [vmem:[%s803 + $0x41] sm:$0xff]
      %v2167 = vld [vmem:[%s803 + $0x51] sm:$0xff]
      %v2168 = vld [vmem:[%s803 + $0x61] sm:$0xff]
      %v2169 = vld [vmem:[%s803 + $0x71] sm:$0xff]
      %s2170 = scalar_lea.vmem %s2, 72
      %v2171 = vld [vmem:[%s2170] sm:$0xff]
      %v2173 = vsel %vm781, %v2162, 0
      %v2176 = vsel %vm781, %v2163, 0
      %v2179 = vsel %vm781, %v2164, 0
      %v2182 = vsel %vm781, %v2165, 0
      %v2185 = vsel %vm781, %v2166, 0
      %v2188 = vsel %vm781, %v2167, 0
      %v2191 = vsel %vm781, %v2168, 0
      %v2194 = vsel %vm781, %v2169, 0
      %2196 = vmatprep.subr.mxu0 0.0
      %2197 = vmatpush1.msra.mxu0 %v2171
      %2198 = vmatprep.subr.mxu0 0.0
      %2199 = vmatpush1.msra.mxu0 0.0
      %2200 = vmatprep.subr.mxu0 0.0
      %2201 = vmatpush1.msra.mxu0 0.0
      %2202 = vmatprep.subr.mxu0 0.0
      %2203 = vmatpush1.msra.mxu0 0.0
      %2204 = vmatprep.subr.mxu0 0.0
      %2205 = vmatpush1.msra.mxu0 0.0
      %2206 = vmatprep.subr.mxu0 0.0
      %2207 = vmatpush1.msra.mxu0 0.0
      %2208 = vmatprep.subr.mxu0 0.0
      %2209 = vmatpush1.msra.mxu0 0.0
      %2210 = vmatprep.subr.mxu0 0.0
      %2211 = vmatpush1.msra.mxu0 0.0
      %2212 = vmatprep.subr.mxu0 0.0
      %2213 = vmatpush1.msra.mxu0 0.0
      %2214 = vmatprep.subr.mxu0 0.0
      %2215 = vmatpush1.msra.mxu0 0.0
      %2216 = vmatprep.subr.mxu0 0.0
      %2217 = vmatpush1.msra.mxu0 0.0
      %2218 = vmatprep.subr.mxu0 0.0
      %2219 = vmatpush1.msra.mxu0 0.0
      %2220 = vmatprep.subr.mxu0 0.0
      %2221 = vmatpush1.msra.mxu0 0.0
      %2222 = vmatprep.subr.mxu0 0.0
      %2223 = vmatpush1.msra.mxu0 0.0
      %2224 = vmatprep.subr.mxu0 0.0
      %2225 = vmatpush1.msra.mxu0 0.0
      %2226 = vmatprep.subr.mxu0 0.0
      %2227 = vmatpush1.msra.mxu0 0.0
      %2228 = vmatprep.subr.mxu0 0.0
      %2229 = vmatpush1.msra.mxu0 0.0
      %2230 = vmatprep.subr.mxu0 0.0
      %2231 = vmatpush1.msra.mxu0 0.0
      %2232 = vmatprep.subr.mxu0 0.0
      %2233 = vmatpush1.msra.mxu0 0.0
      %2234 = vmatprep.subr.mxu0 0.0
      %2235 = vmatpush1.msra.mxu0 0.0
      %2236 = vmatprep.subr.mxu0 0.0
      %2237 = vmatpush1.msra.mxu0 0.0
      %2238 = vmatprep.subr.mxu0 0.0
      %2239 = vmatpush1.msra.mxu0 0.0
      %2240 = vmatprep.subr.mxu0 0.0
      %2241 = vmatpush1.msra.mxu0 0.0
      %2242 = vmatprep.subr.mxu0 0.0
      %2243 = vmatpush1.msra.mxu0 0.0
      %2244 = vmatprep.subr.mxu0 0.0
      %2245 = vmatpush1.msra.mxu0 0.0
      %2246 = vmatprep.subr.mxu0 0.0
      %2247 = vmatpush1.msra.mxu0 0.0
      %2248 = vmatprep.subr.mxu0 0.0
      %2249 = vmatpush1.msra.mxu0 0.0
      %2250 = vmatprep.subr.mxu0 0.0
      %2251 = vmatpush1.msra.mxu0 0.0
      %2252 = vmatprep.subr.mxu0 0.0
      %2253 = vmatpush1.msra.mxu0 0.0
      %2254 = vmatprep.subr.mxu0 0.0
      %2255 = vmatpush1.msra.mxu0 0.0
      %2256 = vmatprep.subr.mxu0 0.0
      %2257 = vmatpush1.msra.mxu0 0.0
      %2258 = vmatprep.subr.mxu0 0.0
      %2259 = vmatpush1.msra.mxu0 0.0
      %2260 = vmatprep.mubr.f32.mxu0 0.0
      %2261 = vmatmul.mubr.f32.gmra.mrb[0].mxu0 %v2173
      %v2262 = vpop.f32.mrb[0].mxu0
      %v2263 = vadd.f32 0.0, %v2262
      %v2264 = vpop.f32.mrb[0].mxu0
      %2265 = vmatprep.mubr.f32.mxu0 0.0
      %2266 = vmatmul.mubr.f32.gmra.mrb[0].mxu0 %v2176
      %v2267 = vpop.f32.mrb[0].mxu0
      %v2268 = vadd.f32 0.0, %v2267
      %v2269 = vpop.f32.mrb[0].mxu0
      %2270 = vmatprep.mubr.f32.mxu0 0.0
      %2271 = vmatmul.mubr.f32.gmra.mrb[0].mxu0 %v2179
      %v2272 = vpop.f32.mrb[0].mxu0
      %v2273 = vadd.f32 0.0, %v2272
      %v2274 = vpop.f32.mrb[0].mxu0
      %2275 = vmatprep.mubr.f32.mxu0 0.0
      %2276 = vmatmul.mubr.f32.gmra.mrb[0].mxu0 %v2182
      %v2277 = vpop.f32.mrb[0].mxu0
      %v2278 = vadd.f32 0.0, %v2277
      %v2279 = vpop.f32.mrb[0].mxu0
      %2280 = vmatprep.mubr.f32.mxu0 0.0
      %2281 = vmatmul.mubr.f32.gmra.mrb[0].mxu0 %v2185
      %v2282 = vpop.f32.mrb[0].mxu0
      %v2283 = vadd.f32 0.0, %v2282
      %v2284 = vpop.f32.mrb[0].mxu0
      %2285 = vmatprep.mubr.f32.mxu0 0.0
      %2286 = vmatmul.mubr.f32.gmra.mrb[0].mxu0 %v2188
      %v2287 = vpop.f32.mrb[0].mxu0
      %v2288 = vadd.f32 0.0, %v2287
      %v2289 = vpop.f32.mrb[0].mxu0
      %2290 = vmatprep.mubr.f32.mxu0 0.0
      %2291 = vmatmul.mubr.f32.gmra.mrb[0].mxu0 %v2191
      %v2292 = vpop.f32.mrb[0].mxu0
      %v2293 = vadd.f32 0.0, %v2292
      %v2294 = vpop.f32.mrb[0].mxu0
      %2295 = vmatprep.mubr.f32.mxu0 0.0
      %2296 = vmatmul.mubr.f32.gmra.mrb[0].mxu0 %v2194
      %v2297 = vpop.f32.mrb[0].mxu0
      %v2298 = vadd.f32 0.0, %v2297
      %v2299 = vpop.f32.mrb[0].mxu0
      %2300 = vdwg.mxu0
      %v2302 = vsel %vm781, %v2152, 0
      %v2305 = vsel %vm781, %v2153, 0
      %v2308 = vsel %vm781, %v2154, 0
      %v2311 = vsel %vm781, %v2155, 0
      %v2314 = vsel %vm781, %v2156, 0
      %v2317 = vsel %vm781, %v2157, 0
      %v2320 = vsel %vm781, %v2158, 0
      %v2323 = vsel %vm781, %v2159, 0
      %2325 = vmatprep.subr.mxu0 0.0
      %2326 = vmatpush1.msra.mxu0 %v2161
      %2327 = vmatprep.subr.mxu0 0.0
      %2328 = vmatpush1.msra.mxu0 0.0
      %2329 = vmatprep.subr.mxu0 0.0
      %2330 = vmatpush1.msra.mxu0 0.0
      %2331 = vmatprep.subr.mxu0 0.0
      %2332 = vmatpush1.msra.mxu0 0.0
      %2333 = vmatprep.subr.mxu0 0.0
      %2334 = vmatpush1.msra.mxu0 0.0
      %2335 = vmatprep.subr.mxu0 0.0
      %2336 = vmatpush1.msra.mxu0 0.0
      %2337 = vmatprep.subr.mxu0 0.0
      %2338 = vmatpush1.msra.mxu0 0.0
      %2339 = vmatprep.subr.mxu0 0.0
      %2340 = vmatpush1.msra.mxu0 0.0
      %2341 = vmatprep.subr.mxu0 0.0
      %2342 = vmatpush1.msra.mxu0 0.0
      %2343 = vmatprep.subr.mxu0 0.0
      %2344 = vmatpush1.msra.mxu0 0.0
      %2345 = vmatprep.subr.mxu0 0.0
      %2346 = vmatpush1.msra.mxu0 0.0
      %2347 = vmatprep.subr.mxu0 0.0
      %2348 = vmatpush1.msra.mxu0 0.0
      %2349 = vmatprep.subr.mxu0 0.0
      %2350 = vmatpush1.msra.mxu0 0.0
      %2351 = vmatprep.subr.mxu0 0.0
      %2352 = vmatpush1.msra.mxu0 0.0
      %2353 = vmatprep.subr.mxu0 0.0
      %2354 = vmatpush1.msra.mxu0 0.0
      %2355 = vmatprep.subr.mxu0 0.0
      %2356 = vmatpush1.msra.mxu0 0.0
      %2357 = vmatprep.subr.mxu0 0.0
      %2358 = vmatpush1.msra.mxu0 0.0
      %2359 = vmatprep.subr.mxu0 0.0
      %2360 = vmatpush1.msra.mxu0 0.0
      %2361 = vmatprep.subr.mxu0 0.0
      %2362 = vmatpush1.msra.mxu0 0.0
      %2363 = vmatprep.subr.mxu0 0.0
      %2364 = vmatpush1.msra.mxu0 0.0
      %2365 = vmatprep.subr.mxu0 0.0
      %2366 = vmatpush1.msra.mxu0 0.0
      %2367 = vmatprep.subr.mxu0 0.0
      %2368 = vmatpush1.msra.mxu0 0.0
      %2369 = vmatprep.subr.mxu0 0.0
      %2370 = vmatpush1.msra.mxu0 0.0
      %2371 = vmatprep.subr.mxu0 0.0
      %2372 = vmatpush1.msra.mxu0 0.0
      %2373 = vmatprep.subr.mxu0 0.0
      %2374 = vmatpush1.msra.mxu0 0.0
      %2375 = vmatprep.subr.mxu0 0.0
      %2376 = vmatpush1.msra.mxu0 0.0
      %2377 = vmatprep.subr.mxu0 0.0
      %2378 = vmatpush1.msra.mxu0 0.0
      %2379 = vmatprep.subr.mxu0 0.0
      %2380 = vmatpush1.msra.mxu0 0.0
      %2381 = vmatprep.subr.mxu0 0.0
      %2382 = vmatpush1.msra.mxu0 0.0
      %2383 = vmatprep.subr.mxu0 0.0
      %2384 = vmatpush1.msra.mxu0 0.0
      %2385 = vmatprep.subr.mxu0 0.0
      %2386 = vmatpush1.msra.mxu0 0.0
      %2387 = vmatprep.subr.mxu0 0.0
      %2388 = vmatpush1.msra.mxu0 0.0
      %2389 = vmatprep.mubr.f32.mxu0 0.0
      %2390 = vmatmul.mubr.f32.gmra.mrb[0].mxu0 %v2302
      %v2391 = vpop.f32.mrb[0].mxu0
      %v2392 = vadd.f32 %v2263, %v2391
      %v2393 = vpop.f32.mrb[0].mxu0
      %2394 = vmatprep.mubr.f32.mxu0 0.0
      %2395 = vmatmul.mubr.f32.gmra.mrb[0].mxu0 %v2305
      %v2396 = vpop.f32.mrb[0].mxu0
      %v2397 = vadd.f32 %v2268, %v2396
      %v2398 = vpop.f32.mrb[0].mxu0
      %2399 = vmatprep.mubr.f32.mxu0 0.0
      %2400 = vmatmul.mubr.f32.gmra.mrb[0].mxu0 %v2308
      %v2401 = vpop.f32.mrb[0].mxu0
      %v2402 = vadd.f32 %v2273, %v2401
      %v2403 = vpop.f32.mrb[0].mxu0
      %2404 = vmatprep.mubr.f32.mxu0 0.0
      %2405 = vmatmul.mubr.f32.gmra.mrb[0].mxu0 %v2311
      %v2406 = vpop.f32.mrb[0].mxu0
      %v2407 = vadd.f32 %v2278, %v2406
      %v2408 = vpop.f32.mrb[0].mxu0
      %2409 = vmatprep.mubr.f32.mxu0 0.0
      %2410 = vmatmul.mubr.f32.gmra.mrb[0].mxu0 %v2314
      %v2411 = vpop.f32.mrb[0].mxu0
      %v2412 = vadd.f32 %v2283, %v2411
      %v2413 = vpop.f32.mrb[0].mxu0
      %2414 = vmatprep.mubr.f32.mxu0 0.0
      %2415 = vmatmul.mubr.f32.gmra.mrb[0].mxu0 %v2317
      %v2416 = vpop.f32.mrb[0].mxu0
      %v2417 = vadd.f32 %v2288, %v2416
      %v2418 = vpop.f32.mrb[0].mxu0
      %2419 = vmatprep.mubr.f32.mxu0 0.0
      %2420 = vmatmul.mubr.f32.gmra.mrb[0].mxu0 %v2320
      %v2421 = vpop.f32.mrb[0].mxu0
      %v2422 = vadd.f32 %v2293, %v2421
      %v2423 = vpop.f32.mrb[0].mxu0
      %2424 = vmatprep.mubr.f32.mxu0 0.0
      %2425 = vmatmul.mubr.f32.gmra.mrb[0].mxu0 %v2323
      %v2426 = vpop.f32.mrb[0].mxu0
      %v2427 = vadd.f32 %v2298, %v2426
      %v2428 = vpop.f32.mrb[0].mxu0
      %2429 = vdwg.mxu0
      %s2430 = scalar_lea.vmem [#allocation2], 32
      %v2431 = vld [vmem:[%s2430] sm:$0xff]
      %v2432 = vld [vmem:[%s2430 + $0x10] sm:$0xff]
      %v2433 = vld [vmem:[%s2430 + $0x20] sm:$0xff]
      %v2434 = vld [vmem:[%s2430 + $0x30] sm:$0xff]
      %v2435 = vld [vmem:[%s2430 + $0x40] sm:$0xff]
      %v2436 = vld [vmem:[%s2430 + $0x50] sm:$0xff]
      %v2437 = vld [vmem:[%s2430 + $0x60] sm:$0xff]
      %v2438 = vld [vmem:[%s2430 + $0x70] sm:$0xff]
      %s2439 = scalar_lea.vmem %s2, 80
      %v2440 = vld [vmem:[%s2439] sm:$0xff]
      %v2442 = vsel %vm781, %v2431, 0
      %v2445 = vsel %vm781, %v2432, 0
      %v2448 = vsel %vm781, %v2433, 0
      %v2451 = vsel %vm781, %v2434, 0
      %v2454 = vsel %vm781, %v2435, 0
      %v2457 = vsel %vm781, %v2436, 0
      %v2460 = vsel %vm781, %v2437, 0
      %v2463 = vsel %vm781, %v2438, 0
      %2465 = vmatprep.subr.mxu0 0.0
      %2466 = vmatpush1.msra.mxu0 %v2440
      %2467 = vmatprep.subr.mxu0 0.0
      %2468 = vmatpush1.msra.mxu0 0.0
      %2469 = vmatprep.subr.mxu0 0.0
      %2470 = vmatpush1.msra.mxu0 0.0
      %2471 = vmatprep.subr.mxu0 0.0
      %2472 = vmatpush1.msra.mxu0 0.0
      %2473 = vmatprep.subr.mxu0 0.0
      %2474 = vmatpush1.msra.mxu0 0.0
      %2475 = vmatprep.subr.mxu0 0.0
      %2476 = vmatpush1.msra.mxu0 0.0
      %2477 = vmatprep.subr.mxu0 0.0
      %2478 = vmatpush1.msra.mxu0 0.0
      %2479 = vmatprep.subr.mxu0 0.0
      %2480 = vmatpush1.msra.mxu0 0.0
      %2481 = vmatprep.subr.mxu0 0.0
      %2482 = vmatpush1.msra.mxu0 0.0
      %2483 = vmatprep.subr.mxu0 0.0
      %2484 = vmatpush1.msra.mxu0 0.0
      %2485 = vmatprep.subr.mxu0 0.0
      %2486 = vmatpush1.msra.mxu0 0.0
      %2487 = vmatprep.subr.mxu0 0.0
      %2488 = vmatpush1.msra.mxu0 0.0
      %2489 = vmatprep.subr.mxu0 0.0
      %2490 = vmatpush1.msra.mxu0 0.0
      %2491 = vmatprep.subr.mxu0 0.0
      %2492 = vmatpush1.msra.mxu0 0.0
      %2493 = vmatprep.subr.mxu0 0.0
      %2494 = vmatpush1.msra.mxu0 0.0
      %2495 = vmatprep.subr.mxu0 0.0
      %2496 = vmatpush1.msra.mxu0 0.0
      %2497 = vmatprep.subr.mxu0 0.0
      %2498 = vmatpush1.msra.mxu0 0.0
      %2499 = vmatprep.subr.mxu0 0.0
      %2500 = vmatpush1.msra.mxu0 0.0
      %2501 = vmatprep.subr.mxu0 0.0
      %2502 = vmatpush1.msra.mxu0 0.0
      %2503 = vmatprep.subr.mxu0 0.0
      %2504 = vmatpush1.msra.mxu0 0.0
      %2505 = vmatprep.subr.mxu0 0.0
      %2506 = vmatpush1.msra.mxu0 0.0
      %2507 = vmatprep.subr.mxu0 0.0
      %2508 = vmatpush1.msra.mxu0 0.0
      %2509 = vmatprep.subr.mxu0 0.0
      %2510 = vmatpush1.msra.mxu0 0.0
      %2511 = vmatprep.subr.mxu0 0.0
      %2512 = vmatpush1.msra.mxu0 0.0
      %2513 = vmatprep.subr.mxu0 0.0
      %2514 = vmatpush1.msra.mxu0 0.0
      %2515 = vmatprep.subr.mxu0 0.0
      %2516 = vmatpush1.msra.mxu0 0.0
      %2517 = vmatprep.subr.mxu0 0.0
      %2518 = vmatpush1.msra.mxu0 0.0
      %2519 = vmatprep.subr.mxu0 0.0
      %2520 = vmatpush1.msra.mxu0 0.0
      %2521 = vmatprep.subr.mxu0 0.0
      %2522 = vmatpush1.msra.mxu0 0.0
      %2523 = vmatprep.subr.mxu0 0.0
      %2524 = vmatpush1.msra.mxu0 0.0
      %2525 = vmatprep.subr.mxu0 0.0
      %2526 = vmatpush1.msra.mxu0 0.0
      %2527 = vmatprep.subr.mxu0 0.0
      %2528 = vmatpush1.msra.mxu0 0.0
      %2529 = vmatprep.mubr.f32.mxu0 0.0
      %2530 = vmatmul.mubr.f32.gmra.mrb[0].mxu0 %v2442
      %v2531 = vpop.f32.mrb[0].mxu0
      %v2532 = vadd.f32 0.0, %v2531
      %v2533 = vpop.f32.mrb[0].mxu0
      %2534 = vmatprep.mubr.f32.mxu0 0.0
      %2535 = vmatmul.mubr.f32.gmra.mrb[0].mxu0 %v2445
      %v2536 = vpop.f32.mrb[0].mxu0
      %v2537 = vadd.f32 0.0, %v2536
      %v2538 = vpop.f32.mrb[0].mxu0
      %2539 = vmatprep.mubr.f32.mxu0 0.0
      %2540 = vmatmul.mubr.f32.gmra.mrb[0].mxu0 %v2448
      %v2541 = vpop.f32.mrb[0].mxu0
      %v2542 = vadd.f32 0.0, %v2541
      %v2543 = vpop.f32.mrb[0].mxu0
      %2544 = vmatprep.mubr.f32.mxu0 0.0
      %2545 = vmatmul.mubr.f32.gmra.mrb[0].mxu0 %v2451
      %v2546 = vpop.f32.mrb[0].mxu0
      %v2547 = vadd.f32 0.0, %v2546
      %v2548 = vpop.f32.mrb[0].mxu0
      %2549 = vmatprep.mubr.f32.mxu0 0.0
      %2550 = vmatmul.mubr.f32.gmra.mrb[0].mxu0 %v2454
      %v2551 = vpop.f32.mrb[0].mxu0
      %v2552 = vadd.f32 0.0, %v2551
      %v2553 = vpop.f32.mrb[0].mxu0
      %2554 = vmatprep.mubr.f32.mxu0 0.0
      %2555 = vmatmul.mubr.f32.gmra.mrb[0].mxu0 %v2457
      %v2556 = vpop.f32.mrb[0].mxu0
      %v2557 = vadd.f32 0.0, %v2556
      %v2558 = vpop.f32.mrb[0].mxu0
      %2559 = vmatprep.mubr.f32.mxu0 0.0
      %2560 = vmatmul.mubr.f32.gmra.mrb[0].mxu0 %v2460
      %v2561 = vpop.f32.mrb[0].mxu0
      %v2562 = vadd.f32 0.0, %v2561
      %v2563 = vpop.f32.mrb[0].mxu0
      %2564 = vmatprep.mubr.f32.mxu0 0.0
      %2565 = vmatmul.mubr.f32.gmra.mrb[0].mxu0 %v2463
      %v2566 = vpop.f32.mrb[0].mxu0
      %v2567 = vadd.f32 0.0, %v2566
      %v2568 = vpop.f32.mrb[0].mxu0
      %2569 = vdwg.mxu0
      %v2570 = vadd.f32 %v2392, %v2532
      %v2571 = vadd.f32 %v2397, %v2537
      %v2572 = vadd.f32 %v2402, %v2542
      %v2573 = vadd.f32 %v2407, %v2547
      %v2574 = vadd.f32 %v2412, %v2552
      %v2575 = vadd.f32 %v2417, %v2557
      %v2576 = vadd.f32 %v2422, %v2562
      %v2577 = vadd.f32 %v2427, %v2567
      %v2578 = vld [vmem:[%s2430 + $0x1] sm:$0xff]
      %v2579 = vld [vmem:[%s2430 + $0x11] sm:$0xff]
      %v2580 = vld [vmem:[%s2430 + $0x21] sm:$0xff]
      %v2581 = vld [vmem:[%s2430 + $0x31] sm:$0xff]
      %v2582 = vld [vmem:[%s2430 + $0x41] sm:$0xff]
      %v2583 = vld [vmem:[%s2430 + $0x51] sm:$0xff]
      %v2584 = vld [vmem:[%s2430 + $0x61] sm:$0xff]
      %v2585 = vld [vmem:[%s2430 + $0x71] sm:$0xff]
      %s2586 = scalar_lea.vmem %s2, 88
      %v2587 = vld [vmem:[%s2586] sm:$0xff]
      %v2589 = vsel %vm781, %v2578, 0
      %v2592 = vsel %vm781, %v2579, 0
      %v2595 = vsel %vm781, %v2580, 0
      %v2598 = vsel %vm781, %v2581, 0
      %v2601 = vsel %vm781, %v2582, 0
      %v2604 = vsel %vm781, %v2583, 0
      %v2607 = vsel %vm781, %v2584, 0
      %v2610 = vsel %vm781, %v2585, 0
      %2612 = vmatprep.subr.mxu0 0.0
      %2613 = vmatpush1.msra.mxu0 %v2587
      %2614 = vmatprep.subr.mxu0 0.0
      %2615 = vmatpush1.msra.mxu0 0.0
      %2616 = vmatprep.subr.mxu0 0.0
      %2617 = vmatpush1.msra.mxu0 0.0
      %2618 = vmatprep.subr.mxu0 0.0
      %2619 = vmatpush1.msra.mxu0 0.0
      %2620 = vmatprep.subr.mxu0 0.0
      %2621 = vmatpush1.msra.mxu0 0.0
      %2622 = vmatprep.subr.mxu0 0.0
      %2623 = vmatpush1.msra.mxu0 0.0
      %2624 = vmatprep.subr.mxu0 0.0
      %2625 = vmatpush1.msra.mxu0 0.0
      %2626 = vmatprep.subr.mxu0 0.0
      %2627 = vmatpush1.msra.mxu0 0.0
      %2628 = vmatprep.subr.mxu0 0.0
      %2629 = vmatpush1.msra.mxu0 0.0
      %2630 = vmatprep.subr.mxu0 0.0
      %2631 = vmatpush1.msra.mxu0 0.0
      %2632 = vmatprep.subr.mxu0 0.0
      %2633 = vmatpush1.msra.mxu0 0.0
      %2634 = vmatprep.subr.mxu0 0.0
      %2635 = vmatpush1.msra.mxu0 0.0
      %2636 = vmatprep.subr.mxu0 0.0
      %2637 = vmatpush1.msra.mxu0 0.0
      %2638 = vmatprep.subr.mxu0 0.0
      %2639 = vmatpush1.msra.mxu0 0.0
      %2640 = vmatprep.subr.mxu0 0.0
      %2641 = vmatpush1.msra.mxu0 0.0
      %2642 = vmatprep.subr.mxu0 0.0
      %2643 = vmatpush1.msra.mxu0 0.0
      %2644 = vmatprep.subr.mxu0 0.0
      %2645 = vmatpush1.msra.mxu0 0.0
      %2646 = vmatprep.subr.mxu0 0.0
      %2647 = vmatpush1.msra.mxu0 0.0
      %2648 = vmatprep.subr.mxu0 0.0
      %2649 = vmatpush1.msra.mxu0 0.0
      %2650 = vmatprep.subr.mxu0 0.0
      %2651 = vmatpush1.msra.mxu0 0.0
      %2652 = vmatprep.subr.mxu0 0.0
      %2653 = vmatpush1.msra.mxu0 0.0
      %2654 = vmatprep.subr.mxu0 0.0
      %2655 = vmatpush1.msra.mxu0 0.0
      %2656 = vmatprep.subr.mxu0 0.0
      %2657 = vmatpush1.msra.mxu0 0.0
      %2658 = vmatprep.subr.mxu0 0.0
      %2659 = vmatpush1.msra.mxu0 0.0
      %2660 = vmatprep.subr.mxu0 0.0
      %2661 = vmatpush1.msra.mxu0 0.0
      %2662 = vmatprep.subr.mxu0 0.0
      %2663 = vmatpush1.msra.mxu0 0.0
      %2664 = vmatprep.subr.mxu0 0.0
      %2665 = vmatpush1.msra.mxu0 0.0
      %2666 = vmatprep.subr.mxu0 0.0
      %2667 = vmatpush1.msra.mxu0 0.0
      %2668 = vmatprep.subr.mxu0 0.0
      %2669 = vmatpush1.msra.mxu0 0.0
      %2670 = vmatprep.subr.mxu0 0.0
      %2671 = vmatpush1.msra.mxu0 0.0
      %2672 = vmatprep.subr.mxu0 0.0
      %2673 = vmatpush1.msra.mxu0 0.0
      %2674 = vmatprep.subr.mxu0 0.0
      %2675 = vmatpush1.msra.mxu0 0.0
      %2676 = vmatprep.mubr.f32.mxu0 0.0
      %2677 = vmatmul.mubr.f32.gmra.mrb[0].mxu0 %v2589
      %v2678 = vpop.f32.mrb[0].mxu0
      %v2679 = vadd.f32 0.0, %v2678
      %v2680 = vpop.f32.mrb[0].mxu0
      %2681 = vmatprep.mubr.f32.mxu0 0.0
      %2682 = vmatmul.mubr.f32.gmra.mrb[0].mxu0 %v2592
      %v2683 = vpop.f32.mrb[0].mxu0
      %v2684 = vadd.f32 0.0, %v2683
      %v2685 = vpop.f32.mrb[0].mxu0
      %2686 = vmatprep.mubr.f32.mxu0 0.0
      %2687 = vmatmul.mubr.f32.gmra.mrb[0].mxu0 %v2595
      %v2688 = vpop.f32.mrb[0].mxu0
      %v2689 = vadd.f32 0.0, %v2688
      %v2690 = vpop.f32.mrb[0].mxu0
      %2691 = vmatprep.mubr.f32.mxu0 0.0
      %2692 = vmatmul.mubr.f32.gmra.mrb[0].mxu0 %v2598
      %v2693 = vpop.f32.mrb[0].mxu0
      %v2694 = vadd.f32 0.0, %v2693
      %v2695 = vpop.f32.mrb[0].mxu0
      %2696 = vmatprep.mubr.f32.mxu0 0.0
      %2697 = vmatmul.mubr.f32.gmra.mrb[0].mxu0 %v2601
      %v2698 = vpop.f32.mrb[0].mxu0
      %v2699 = vadd.f32 0.0, %v2698
      %v2700 = vpop.f32.mrb[0].mxu0
      %2701 = vmatprep.mubr.f32.mxu0 0.0
      %2702 = vmatmul.mubr.f32.gmra.mrb[0].mxu0 %v2604
      %v2703 = vpop.f32.mrb[0].mxu0
      %v2704 = vadd.f32 0.0, %v2703
      %v2705 = vpop.f32.mrb[0].mxu0
      %2706 = vmatprep.mubr.f32.mxu0 0.0
      %2707 = vmatmul.mubr.f32.gmra.mrb[0].mxu0 %v2607
      %v2708 = vpop.f32.mrb[0].mxu0
      %v2709 = vadd.f32 0.0, %v2708
      %v2710 = vpop.f32.mrb[0].mxu0
      %2711 = vmatprep.mubr.f32.mxu0 0.0
      %2712 = vmatmul.mubr.f32.gmra.mrb[0].mxu0 %v2610
      %v2713 = vpop.f32.mrb[0].mxu0
      %v2714 = vadd.f32 0.0, %v2713
      %v2715 = vpop.f32.mrb[0].mxu0
      %2716 = vdwg.mxu0
      %v2717 = vadd.f32 %v2570, %v2679
      %v2718 = vadd.f32 %v2571, %v2684
      %v2719 = vadd.f32 %v2572, %v2689
      %v2720 = vadd.f32 %v2573, %v2694
      %v2721 = vadd.f32 %v2574, %v2699
      %v2722 = vadd.f32 %v2575, %v2704
      %v2723 = vadd.f32 %v2576, %v2709
      %v2724 = vadd.f32 %v2577, %v2714
      %2726 = vrot.lane.b32.xlu0 %v173, 124
      %v2727 = vpop.permute.xlu0 %2726
      %2728 = vrot.lane.b32.xlu0 %v175, 124
      %v2729 = vpop.permute.xlu0 %2728
      %2730 = vrot.lane.b32.xlu0 %v177, 124
      %v2731 = vpop.permute.xlu0 %2730
      %2732 = vrot.lane.b32.xlu0 %v179, 124
      %v2733 = vpop.permute.xlu0 %2732
      %2734 = vrot.lane.b32.xlu0 %v181, 124
      %v2735 = vpop.permute.xlu0 %2734
      %2736 = vrot.lane.b32.xlu0 %v183, 124
      %v2737 = vpop.permute.xlu0 %2736
      %2738 = vrot.lane.b32.xlu0 %v185, 124
      %v2739 = vpop.permute.xlu0 %2738
      %2740 = vrot.lane.b32.xlu0 %v187, 124
      %v2741 = vpop.permute.xlu0 %2740
      %s2750 = scalar_lea.vmem %s170, 128
      %2751 = vst.msk [vmem:[%s2750] sm:$0xff] %vm1415, %v2727
      %2752 = vst.msk [vmem:[%s2750 + $0x8] sm:$0xff] %vm1415, %v2729
      %2753 = vst.msk [vmem:[%s2750 + $0x10] sm:$0xff] %vm1415, %v2731
      %2754 = vst.msk [vmem:[%s2750 + $0x18] sm:$0xff] %vm1415, %v2733
      %2755 = vst.msk [vmem:[%s2750 + $0x20] sm:$0xff] %vm1415, %v2735
      %2756 = vst.msk [vmem:[%s2750 + $0x28] sm:$0xff] %vm1415, %v2737
      %2757 = vst.msk [vmem:[%s2750 + $0x30] sm:$0xff] %vm1415, %v2739
      %2758 = vst.msk [vmem:[%s2750 + $0x38] sm:$0xff] %vm1415, %v2741
      %2767 = vrot.lane.b32.xlu0 %v2717, 4
      %v2768 = vpop.permute.xlu0 %2767
      %2769 = vrot.lane.b32.xlu0 %v2718, 4
      %v2770 = vpop.permute.xlu0 %2769
      %2771 = vrot.lane.b32.xlu0 %v2719, 4
      %v2772 = vpop.permute.xlu0 %2771
      %2773 = vrot.lane.b32.xlu0 %v2720, 4
      %v2774 = vpop.permute.xlu0 %2773
      %2775 = vrot.lane.b32.xlu0 %v2721, 4
      %v2776 = vpop.permute.xlu0 %2775
      %2777 = vrot.lane.b32.xlu0 %v2722, 4
      %v2778 = vpop.permute.xlu0 %2777
      %2779 = vrot.lane.b32.xlu0 %v2723, 4
      %v2780 = vpop.permute.xlu0 %2779
      %2781 = vrot.lane.b32.xlu0 %v2724, 4
      %v2782 = vpop.permute.xlu0 %2781
      %2791 = vst.msk [vmem:[%s2750] sm:$0xff] %vm1456, %v2768
      %2792 = vst.msk [vmem:[%s2750 + $0x8] sm:$0xff] %vm1456, %v2770
      %2793 = vst.msk [vmem:[%s2750 + $0x10] sm:$0xff] %vm1456, %v2772
      %2794 = vst.msk [vmem:[%s2750 + $0x18] sm:$0xff] %vm1456, %v2774
      %2795 = vst.msk [vmem:[%s2750 + $0x20] sm:$0xff] %vm1456, %v2776
      %2796 = vst.msk [vmem:[%s2750 + $0x28] sm:$0xff] %vm1456, %v2778
      %2797 = vst.msk [vmem:[%s2750 + $0x30] sm:$0xff] %vm1456, %v2780
      %2798 = vst.msk [vmem:[%s2750 + $0x38] sm:$0xff] %vm1456, %v2782
      %v2799 = vld [vmem:[%s803 + $0x1] sm:$0xff]
      %v2800 = vld [vmem:[%s803 + $0x11] sm:$0xff]
      %v2801 = vld [vmem:[%s803 + $0x21] sm:$0xff]
      %v2802 = vld [vmem:[%s803 + $0x31] sm:$0xff]
      %v2803 = vld [vmem:[%s803 + $0x41] sm:$0xff]
      %v2804 = vld [vmem:[%s803 + $0x51] sm:$0xff]
      %v2805 = vld [vmem:[%s803 + $0x61] sm:$0xff]
      %v2806 = vld [vmem:[%s803 + $0x71] sm:$0xff]
      %s2807 = scalar_lea.vmem %s2, 96
      %v2808 = vld [vmem:[%s2807] sm:$0xff]
      %v2809 = vld [vmem:[%s803 + $0x2] sm:$0xff]
      %v2810 = vld [vmem:[%s803 + $0x12] sm:$0xff]
      %v2811 = vld [vmem:[%s803 + $0x22] sm:$0xff]
      %v2812 = vld [vmem:[%s803 + $0x32] sm:$0xff]
      %v2813 = vld [vmem:[%s803 + $0x42] sm:$0xff]
      %v2814 = vld [vmem:[%s803 + $0x52] sm:$0xff]
      %v2815 = vld [vmem:[%s803 + $0x62] sm:$0xff]
      %v2816 = vld [vmem:[%s803 + $0x72] sm:$0xff]
      %s2817 = scalar_lea.vmem %s2, 104
      %v2818 = vld [vmem:[%s2817] sm:$0xff]
      %v2820 = vsel %vm781, %v2809, 0
      %v2823 = vsel %vm781, %v2810, 0
      %v2826 = vsel %vm781, %v2811, 0
      %v2829 = vsel %vm781, %v2812, 0
      %v2832 = vsel %vm781, %v2813, 0
      %v2835 = vsel %vm781, %v2814, 0
      %v2838 = vsel %vm781, %v2815, 0
      %v2841 = vsel %vm781, %v2816, 0
      %2843 = vmatprep.subr.mxu0 0.0
      %2844 = vmatpush1.msra.mxu0 %v2818
      %2845 = vmatprep.subr.mxu0 0.0
      %2846 = vmatpush1.msra.mxu0 0.0
      %2847 = vmatprep.subr.mxu0 0.0
      %2848 = vmatpush1.msra.mxu0 0.0
      %2849 = vmatprep.subr.mxu0 0.0
      %2850 = vmatpush1.msra.mxu0 0.0
      %2851 = vmatprep.subr.mxu0 0.0
      %2852 = vmatpush1.msra.mxu0 0.0
      %2853 = vmatprep.subr.mxu0 0.0
      %2854 = vmatpush1.msra.mxu0 0.0
      %2855 = vmatprep.subr.mxu0 0.0
      %2856 = vmatpush1.msra.mxu0 0.0
      %2857 = vmatprep.subr.mxu0 0.0
      %2858 = vmatpush1.msra.mxu0 0.0
      %2859 = vmatprep.subr.mxu0 0.0
      %2860 = vmatpush1.msra.mxu0 0.0
      %2861 = vmatprep.subr.mxu0 0.0
      %2862 = vmatpush1.msra.mxu0 0.0
      %2863 = vmatprep.subr.mxu0 0.0
      %2864 = vmatpush1.msra.mxu0 0.0
      %2865 = vmatprep.subr.mxu0 0.0
      %2866 = vmatpush1.msra.mxu0 0.0
      %2867 = vmatprep.subr.mxu0 0.0
      %2868 = vmatpush1.msra.mxu0 0.0
      %2869 = vmatprep.subr.mxu0 0.0
      %2870 = vmatpush1.msra.mxu0 0.0
      %2871 = vmatprep.subr.mxu0 0.0
      %2872 = vmatpush1.msra.mxu0 0.0
      %2873 = vmatprep.subr.mxu0 0.0
      %2874 = vmatpush1.msra.mxu0 0.0
      %2875 = vmatprep.subr.mxu0 0.0
      %2876 = vmatpush1.msra.mxu0 0.0
      %2877 = vmatprep.subr.mxu0 0.0
      %2878 = vmatpush1.msra.mxu0 0.0
      %2879 = vmatprep.subr.mxu0 0.0
      %2880 = vmatpush1.msra.mxu0 0.0
      %2881 = vmatprep.subr.mxu0 0.0
      %2882 = vmatpush1.msra.mxu0 0.0
      %2883 = vmatprep.subr.mxu0 0.0
      %2884 = vmatpush1.msra.mxu0 0.0
      %2885 = vmatprep.subr.mxu0 0.0
      %2886 = vmatpush1.msra.mxu0 0.0
      %2887 = vmatprep.subr.mxu0 0.0
      %2888 = vmatpush1.msra.mxu0 0.0
      %2889 = vmatprep.subr.mxu0 0.0
      %2890 = vmatpush1.msra.mxu0 0.0
      %2891 = vmatprep.subr.mxu0 0.0
      %2892 = vmatpush1.msra.mxu0 0.0
      %2893 = vmatprep.subr.mxu0 0.0
      %2894 = vmatpush1.msra.mxu0 0.0
      %2895 = vmatprep.subr.mxu0 0.0
      %2896 = vmatpush1.msra.mxu0 0.0
      %2897 = vmatprep.subr.mxu0 0.0
      %2898 = vmatpush1.msra.mxu0 0.0
      %2899 = vmatprep.subr.mxu0 0.0
      %2900 = vmatpush1.msra.mxu0 0.0
      %2901 = vmatprep.subr.mxu0 0.0
      %2902 = vmatpush1.msra.mxu0 0.0
      %2903 = vmatprep.subr.mxu0 0.0
      %2904 = vmatpush1.msra.mxu0 0.0
      %2905 = vmatprep.subr.mxu0 0.0
      %2906 = vmatpush1.msra.mxu0 0.0
      %2907 = vmatprep.mubr.f32.mxu0 0.0
      %2908 = vmatmul.mubr.f32.gmra.mrb[0].mxu0 %v2820
      %v2909 = vpop.f32.mrb[0].mxu0
      %v2910 = vadd.f32 0.0, %v2909
      %v2911 = vpop.f32.mrb[0].mxu0
      %2912 = vmatprep.mubr.f32.mxu0 0.0
      %2913 = vmatmul.mubr.f32.gmra.mrb[0].mxu0 %v2823
      %v2914 = vpop.f32.mrb[0].mxu0
      %v2915 = vadd.f32 0.0, %v2914
      %v2916 = vpop.f32.mrb[0].mxu0
      %2917 = vmatprep.mubr.f32.mxu0 0.0
      %2918 = vmatmul.mubr.f32.gmra.mrb[0].mxu0 %v2826
      %v2919 = vpop.f32.mrb[0].mxu0
      %v2920 = vadd.f32 0.0, %v2919
      %v2921 = vpop.f32.mrb[0].mxu0
      %2922 = vmatprep.mubr.f32.mxu0 0.0
      %2923 = vmatmul.mubr.f32.gmra.mrb[0].mxu0 %v2829
      %v2924 = vpop.f32.mrb[0].mxu0
      %v2925 = vadd.f32 0.0, %v2924
      %v2926 = vpop.f32.mrb[0].mxu0
      %2927 = vmatprep.mubr.f32.mxu0 0.0
      %2928 = vmatmul.mubr.f32.gmra.mrb[0].mxu0 %v2832
      %v2929 = vpop.f32.mrb[0].mxu0
      %v2930 = vadd.f32 0.0, %v2929
      %v2931 = vpop.f32.mrb[0].mxu0
      %2932 = vmatprep.mubr.f32.mxu0 0.0
      %2933 = vmatmul.mubr.f32.gmra.mrb[0].mxu0 %v2835
      %v2934 = vpop.f32.mrb[0].mxu0
      %v2935 = vadd.f32 0.0, %v2934
      %v2936 = vpop.f32.mrb[0].mxu0
      %2937 = vmatprep.mubr.f32.mxu0 0.0
      %2938 = vmatmul.mubr.f32.gmra.mrb[0].mxu0 %v2838
      %v2939 = vpop.f32.mrb[0].mxu0
      %v2940 = vadd.f32 0.0, %v2939
      %v2941 = vpop.f32.mrb[0].mxu0
      %2942 = vmatprep.mubr.f32.mxu0 0.0
      %2943 = vmatmul.mubr.f32.gmra.mrb[0].mxu0 %v2841
      %v2944 = vpop.f32.mrb[0].mxu0
      %v2945 = vadd.f32 0.0, %v2944
      %v2946 = vpop.f32.mrb[0].mxu0
      %2947 = vdwg.mxu0
      %v2949 = vsel %vm781, %v2799, 0
      %v2952 = vsel %vm781, %v2800, 0
      %v2955 = vsel %vm781, %v2801, 0
      %v2958 = vsel %vm781, %v2802, 0
      %v2961 = vsel %vm781, %v2803, 0
      %v2964 = vsel %vm781, %v2804, 0
      %v2967 = vsel %vm781, %v2805, 0
      %v2970 = vsel %vm781, %v2806, 0
      %2972 = vmatprep.subr.mxu0 0.0
      %2973 = vmatpush1.msra.mxu0 %v2808
      %2974 = vmatprep.subr.mxu0 0.0
      %2975 = vmatpush1.msra.mxu0 0.0
      %2976 = vmatprep.subr.mxu0 0.0
      %2977 = vmatpush1.msra.mxu0 0.0
      %2978 = vmatprep.subr.mxu0 0.0
      %2979 = vmatpush1.msra.mxu0 0.0
      %2980 = vmatprep.subr.mxu0 0.0
      %2981 = vmatpush1.msra.mxu0 0.0
      %2982 = vmatprep.subr.mxu0 0.0
      %2983 = vmatpush1.msra.mxu0 0.0
      %2984 = vmatprep.subr.mxu0 0.0
      %2985 = vmatpush1.msra.mxu0 0.0
      %2986 = vmatprep.subr.mxu0 0.0
      %2987 = vmatpush1.msra.mxu0 0.0
      %2988 = vmatprep.subr.mxu0 0.0
      %2989 = vmatpush1.msra.mxu0 0.0
      %2990 = vmatprep.subr.mxu0 0.0
      %2991 = vmatpush1.msra.mxu0 0.0
      %2992 = vmatprep.subr.mxu0 0.0
      %2993 = vmatpush1.msra.mxu0 0.0
      %2994 = vmatprep.subr.mxu0 0.0
      %2995 = vmatpush1.msra.mxu0 0.0
      %2996 = vmatprep.subr.mxu0 0.0
      %2997 = vmatpush1.msra.mxu0 0.0
      %2998 = vmatprep.subr.mxu0 0.0
      %2999 = vmatpush1.msra.mxu0 0.0
      %3000 = vmatprep.subr.mxu0 0.0
      %3001 = vmatpush1.msra.mxu0 0.0
      %3002 = vmatprep.subr.mxu0 0.0
      %3003 = vmatpush1.msra.mxu0 0.0
      %3004 = vmatprep.subr.mxu0 0.0
      %3005 = vmatpush1.msra.mxu0 0.0
      %3006 = vmatprep.subr.mxu0 0.0
      %3007 = vmatpush1.msra.mxu0 0.0
      %3008 = vmatprep.subr.mxu0 0.0
      %3009 = vmatpush1.msra.mxu0 0.0
      %3010 = vmatprep.subr.mxu0 0.0
      %3011 = vmatpush1.msra.mxu0 0.0
      %3012 = vmatprep.subr.mxu0 0.0
      %3013 = vmatpush1.msra.mxu0 0.0
      %3014 = vmatprep.subr.mxu0 0.0
      %3015 = vmatpush1.msra.mxu0 0.0
      %3016 = vmatprep.subr.mxu0 0.0
      %3017 = vmatpush1.msra.mxu0 0.0
      %3018 = vmatprep.subr.mxu0 0.0
      %3019 = vmatpush1.msra.mxu0 0.0
      %3020 = vmatprep.subr.mxu0 0.0
      %3021 = vmatpush1.msra.mxu0 0.0
      %3022 = vmatprep.subr.mxu0 0.0
      %3023 = vmatpush1.msra.mxu0 0.0
      %3024 = vmatprep.subr.mxu0 0.0
      %3025 = vmatpush1.msra.mxu0 0.0
      %3026 = vmatprep.subr.mxu0 0.0
      %3027 = vmatpush1.msra.mxu0 0.0
      %3028 = vmatprep.subr.mxu0 0.0
      %3029 = vmatpush1.msra.mxu0 0.0
      %3030 = vmatprep.subr.mxu0 0.0
      %3031 = vmatpush1.msra.mxu0 0.0
      %3032 = vmatprep.subr.mxu0 0.0
      %3033 = vmatpush1.msra.mxu0 0.0
      %3034 = vmatprep.subr.mxu0 0.0
      %3035 = vmatpush1.msra.mxu0 0.0
      %3036 = vmatprep.mubr.f32.mxu0 0.0
      %3037 = vmatmul.mubr.f32.gmra.mrb[0].mxu0 %v2949
      %v3038 = vpop.f32.mrb[0].mxu0
      %v3039 = vadd.f32 %v2910, %v3038
      %v3040 = vpop.f32.mrb[0].mxu0
      %3041 = vmatprep.mubr.f32.mxu0 0.0
      %3042 = vmatmul.mubr.f32.gmra.mrb[0].mxu0 %v2952
      %v3043 = vpop.f32.mrb[0].mxu0
      %v3044 = vadd.f32 %v2915, %v3043
      %v3045 = vpop.f32.mrb[0].mxu0
      %3046 = vmatprep.mubr.f32.mxu0 0.0
      %3047 = vmatmul.mubr.f32.gmra.mrb[0].mxu0 %v2955
      %v3048 = vpop.f32.mrb[0].mxu0
      %v3049 = vadd.f32 %v2920, %v3048
      %v3050 = vpop.f32.mrb[0].mxu0
      %3051 = vmatprep.mubr.f32.mxu0 0.0
      %3052 = vmatmul.mubr.f32.gmra.mrb[0].mxu0 %v2958
      %v3053 = vpop.f32.mrb[0].mxu0
      %v3054 = vadd.f32 %v2925, %v3053
      %v3055 = vpop.f32.mrb[0].mxu0
      %3056 = vmatprep.mubr.f32.mxu0 0.0
      %3057 = vmatmul.mubr.f32.gmra.mrb[0].mxu0 %v2961
      %v3058 = vpop.f32.mrb[0].mxu0
      %v3059 = vadd.f32 %v2930, %v3058
      %v3060 = vpop.f32.mrb[0].mxu0
      %3061 = vmatprep.mubr.f32.mxu0 0.0
      %3062 = vmatmul.mubr.f32.gmra.mrb[0].mxu0 %v2964
      %v3063 = vpop.f32.mrb[0].mxu0
      %v3064 = vadd.f32 %v2935, %v3063
      %v3065 = vpop.f32.mrb[0].mxu0
      %3066 = vmatprep.mubr.f32.mxu0 0.0
      %3067 = vmatmul.mubr.f32.gmra.mrb[0].mxu0 %v2967
      %v3068 = vpop.f32.mrb[0].mxu0
      %v3069 = vadd.f32 %v2940, %v3068
      %v3070 = vpop.f32.mrb[0].mxu0
      %3071 = vmatprep.mubr.f32.mxu0 0.0
      %3072 = vmatmul.mubr.f32.gmra.mrb[0].mxu0 %v2970
      %v3073 = vpop.f32.mrb[0].mxu0
      %v3074 = vadd.f32 %v2945, %v3073
      %v3075 = vpop.f32.mrb[0].mxu0
      %3076 = vdwg.mxu0
      %v3077 = vld [vmem:[%s2430 + $0x1] sm:$0xff]
      %v3078 = vld [vmem:[%s2430 + $0x11] sm:$0xff]
      %v3079 = vld [vmem:[%s2430 + $0x21] sm:$0xff]
      %v3080 = vld [vmem:[%s2430 + $0x31] sm:$0xff]
      %v3081 = vld [vmem:[%s2430 + $0x41] sm:$0xff]
      %v3082 = vld [vmem:[%s2430 + $0x51] sm:$0xff]
      %v3083 = vld [vmem:[%s2430 + $0x61] sm:$0xff]
      %v3084 = vld [vmem:[%s2430 + $0x71] sm:$0xff]
      %s3085 = scalar_lea.vmem %s2, 112
      %v3086 = vld [vmem:[%s3085] sm:$0xff]
      %v3088 = vsel %vm781, %v3077, 0
      %v3091 = vsel %vm781, %v3078, 0
      %v3094 = vsel %vm781, %v3079, 0
      %v3097 = vsel %vm781, %v3080, 0
      %v3100 = vsel %vm781, %v3081, 0
      %v3103 = vsel %vm781, %v3082, 0
      %v3106 = vsel %vm781, %v3083, 0
      %v3109 = vsel %vm781, %v3084, 0
      %3111 = vmatprep.subr.mxu0 0.0
      %3112 = vmatpush1.msra.mxu0 %v3086
      %3113 = vmatprep.subr.mxu0 0.0
      %3114 = vmatpush1.msra.mxu0 0.0
      %3115 = vmatprep.subr.mxu0 0.0
      %3116 = vmatpush1.msra.mxu0 0.0
      %3117 = vmatprep.subr.mxu0 0.0
      %3118 = vmatpush1.msra.mxu0 0.0
      %3119 = vmatprep.subr.mxu0 0.0
      %3120 = vmatpush1.msra.mxu0 0.0
      %3121 = vmatprep.subr.mxu0 0.0
      %3122 = vmatpush1.msra.mxu0 0.0
      %3123 = vmatprep.subr.mxu0 0.0
      %3124 = vmatpush1.msra.mxu0 0.0
      %3125 = vmatprep.subr.mxu0 0.0
      %3126 = vmatpush1.msra.mxu0 0.0
      %3127 = vmatprep.subr.mxu0 0.0
      %3128 = vmatpush1.msra.mxu0 0.0
      %3129 = vmatprep.subr.mxu0 0.0
      %3130 = vmatpush1.msra.mxu0 0.0
      %3131 = vmatprep.subr.mxu0 0.0
      %3132 = vmatpush1.msra.mxu0 0.0
      %3133 = vmatprep.subr.mxu0 0.0
      %3134 = vmatpush1.msra.mxu0 0.0
      %3135 = vmatprep.subr.mxu0 0.0
      %3136 = vmatpush1.msra.mxu0 0.0
      %3137 = vmatprep.subr.mxu0 0.0
      %3138 = vmatpush1.msra.mxu0 0.0
      %3139 = vmatprep.subr.mxu0 0.0
      %3140 = vmatpush1.msra.mxu0 0.0
      %3141 = vmatprep.subr.mxu0 0.0
      %3142 = vmatpush1.msra.mxu0 0.0
      %3143 = vmatprep.subr.mxu0 0.0
      %3144 = vmatpush1.msra.mxu0 0.0
      %3145 = vmatprep.subr.mxu0 0.0
      %3146 = vmatpush1.msra.mxu0 0.0
      %3147 = vmatprep.subr.mxu0 0.0
      %3148 = vmatpush1.msra.mxu0 0.0
      %3149 = vmatprep.subr.mxu0 0.0
      %3150 = vmatpush1.msra.mxu0 0.0
      %3151 = vmatprep.subr.mxu0 0.0
      %3152 = vmatpush1.msra.mxu0 0.0
      %3153 = vmatprep.subr.mxu0 0.0
      %3154 = vmatpush1.msra.mxu0 0.0
      %3155 = vmatprep.subr.mxu0 0.0
      %3156 = vmatpush1.msra.mxu0 0.0
      %3157 = vmatprep.subr.mxu0 0.0
      %3158 = vmatpush1.msra.mxu0 0.0
      %3159 = vmatprep.subr.mxu0 0.0
      %3160 = vmatpush1.msra.mxu0 0.0
      %3161 = vmatprep.subr.mxu0 0.0
      %3162 = vmatpush1.msra.mxu0 0.0
      %3163 = vmatprep.subr.mxu0 0.0
      %3164 = vmatpush1.msra.mxu0 0.0
      %3165 = vmatprep.subr.mxu0 0.0
      %3166 = vmatpush1.msra.mxu0 0.0
      %3167 = vmatprep.subr.mxu0 0.0
      %3168 = vmatpush1.msra.mxu0 0.0
      %3169 = vmatprep.subr.mxu0 0.0
      %3170 = vmatpush1.msra.mxu0 0.0
      %3171 = vmatprep.subr.mxu0 0.0
      %3172 = vmatpush1.msra.mxu0 0.0
      %3173 = vmatprep.subr.mxu0 0.0
      %3174 = vmatpush1.msra.mxu0 0.0
      %3175 = vmatprep.mubr.f32.mxu0 0.0
      %3176 = vmatmul.mubr.f32.gmra.mrb[0].mxu0 %v3088
      %v3177 = vpop.f32.mrb[0].mxu0
      %v3178 = vadd.f32 0.0, %v3177
      %v3179 = vpop.f32.mrb[0].mxu0
      %3180 = vmatprep.mubr.f32.mxu0 0.0
      %3181 = vmatmul.mubr.f32.gmra.mrb[0].mxu0 %v3091
      %v3182 = vpop.f32.mrb[0].mxu0
      %v3183 = vadd.f32 0.0, %v3182
      %v3184 = vpop.f32.mrb[0].mxu0
      %3185 = vmatprep.mubr.f32.mxu0 0.0
      %3186 = vmatmul.mubr.f32.gmra.mrb[0].mxu0 %v3094
      %v3187 = vpop.f32.mrb[0].mxu0
      %v3188 = vadd.f32 0.0, %v3187
      %v3189 = vpop.f32.mrb[0].mxu0
      %3190 = vmatprep.mubr.f32.mxu0 0.0
      %3191 = vmatmul.mubr.f32.gmra.mrb[0].mxu0 %v3097
      %v3192 = vpop.f32.mrb[0].mxu0
      %v3193 = vadd.f32 0.0, %v3192
      %v3194 = vpop.f32.mrb[0].mxu0
      %3195 = vmatprep.mubr.f32.mxu0 0.0
      %3196 = vmatmul.mubr.f32.gmra.mrb[0].mxu0 %v3100
      %v3197 = vpop.f32.mrb[0].mxu0
      %v3198 = vadd.f32 0.0, %v3197
      %v3199 = vpop.f32.mrb[0].mxu0
      %3200 = vmatprep.mubr.f32.mxu0 0.0
      %3201 = vmatmul.mubr.f32.gmra.mrb[0].mxu0 %v3103
      %v3202 = vpop.f32.mrb[0].mxu0
      %v3203 = vadd.f32 0.0, %v3202
      %v3204 = vpop.f32.mrb[0].mxu0
      %3205 = vmatprep.mubr.f32.mxu0 0.0
      %3206 = vmatmul.mubr.f32.gmra.mrb[0].mxu0 %v3106
      %v3207 = vpop.f32.mrb[0].mxu0
      %v3208 = vadd.f32 0.0, %v3207
      %v3209 = vpop.f32.mrb[0].mxu0
      %3210 = vmatprep.mubr.f32.mxu0 0.0
      %3211 = vmatmul.mubr.f32.gmra.mrb[0].mxu0 %v3109
      %v3212 = vpop.f32.mrb[0].mxu0
      %v3213 = vadd.f32 0.0, %v3212
      %v3214 = vpop.f32.mrb[0].mxu0
      %3215 = vdwg.mxu0
      %v3216 = vadd.f32 %v3039, %v3178
      %v3217 = vadd.f32 %v3044, %v3183
      %v3218 = vadd.f32 %v3049, %v3188
      %v3219 = vadd.f32 %v3054, %v3193
      %v3220 = vadd.f32 %v3059, %v3198
      %v3221 = vadd.f32 %v3064, %v3203
      %v3222 = vadd.f32 %v3069, %v3208
      %v3223 = vadd.f32 %v3074, %v3213
      %v3224 = vld [vmem:[%s2430 + $0x2] sm:$0xff]
      %v3225 = vld [vmem:[%s2430 + $0x12] sm:$0xff]
      %v3226 = vld [vmem:[%s2430 + $0x22] sm:$0xff]
      %v3227 = vld [vmem:[%s2430 + $0x32] sm:$0xff]
      %v3228 = vld [vmem:[%s2430 + $0x42] sm:$0xff]
      %v3229 = vld [vmem:[%s2430 + $0x52] sm:$0xff]
      %v3230 = vld [vmem:[%s2430 + $0x62] sm:$0xff]
      %v3231 = vld [vmem:[%s2430 + $0x72] sm:$0xff]
      %s3232 = scalar_lea.vmem %s2, 120
      %v3233 = vld [vmem:[%s3232] sm:$0xff]
      %v3235 = vsel %vm781, %v3224, 0
      %v3238 = vsel %vm781, %v3225, 0
      %v3241 = vsel %vm781, %v3226, 0
      %v3244 = vsel %vm781, %v3227, 0
      %v3247 = vsel %vm781, %v3228, 0
      %v3250 = vsel %vm781, %v3229, 0
      %v3253 = vsel %vm781, %v3230, 0
      %v3256 = vsel %vm781, %v3231, 0
      %3258 = vmatprep.subr.mxu0 0.0
      %3259 = vmatpush1.msra.mxu0 %v3233
      %3260 = vmatprep.subr.mxu0 0.0
      %3261 = vmatpush1.msra.mxu0 0.0
      %3262 = vmatprep.subr.mxu0 0.0
      %3263 = vmatpush1.msra.mxu0 0.0
      %3264 = vmatprep.subr.mxu0 0.0
      %3265 = vmatpush1.msra.mxu0 0.0
      %3266 = vmatprep.subr.mxu0 0.0
      %3267 = vmatpush1.msra.mxu0 0.0
      %3268 = vmatprep.subr.mxu0 0.0
      %3269 = vmatpush1.msra.mxu0 0.0
      %3270 = vmatprep.subr.mxu0 0.0
      %3271 = vmatpush1.msra.mxu0 0.0
      %3272 = vmatprep.subr.mxu0 0.0
      %3273 = vmatpush1.msra.mxu0 0.0
      %3274 = vmatprep.subr.mxu0 0.0
      %3275 = vmatpush1.msra.mxu0 0.0
      %3276 = vmatprep.subr.mxu0 0.0
      %3277 = vmatpush1.msra.mxu0 0.0
      %3278 = vmatprep.subr.mxu0 0.0
      %3279 = vmatpush1.msra.mxu0 0.0
      %3280 = vmatprep.subr.mxu0 0.0
      %3281 = vmatpush1.msra.mxu0 0.0
      %3282 = vmatprep.subr.mxu0 0.0
      %3283 = vmatpush1.msra.mxu0 0.0
      %3284 = vmatprep.subr.mxu0 0.0
      %3285 = vmatpush1.msra.mxu0 0.0
      %3286 = vmatprep.subr.mxu0 0.0
      %3287 = vmatpush1.msra.mxu0 0.0
      %3288 = vmatprep.subr.mxu0 0.0
      %3289 = vmatpush1.msra.mxu0 0.0
      %3290 = vmatprep.subr.mxu0 0.0
      %3291 = vmatpush1.msra.mxu0 0.0
      %3292 = vmatprep.subr.mxu0 0.0
      %3293 = vmatpush1.msra.mxu0 0.0
      %3294 = vmatprep.subr.mxu0 0.0
      %3295 = vmatpush1.msra.mxu0 0.0
      %3296 = vmatprep.subr.mxu0 0.0
      %3297 = vmatpush1.msra.mxu0 0.0
      %3298 = vmatprep.subr.mxu0 0.0
      %3299 = vmatpush1.msra.mxu0 0.0
      %3300 = vmatprep.subr.mxu0 0.0
      %3301 = vmatpush1.msra.mxu0 0.0
      %3302 = vmatprep.subr.mxu0 0.0
      %3303 = vmatpush1.msra.mxu0 0.0
      %3304 = vmatprep.subr.mxu0 0.0
      %3305 = vmatpush1.msra.mxu0 0.0
      %3306 = vmatprep.subr.mxu0 0.0
      %3307 = vmatpush1.msra.mxu0 0.0
      %3308 = vmatprep.subr.mxu0 0.0
      %3309 = vmatpush1.msra.mxu0 0.0
      %3310 = vmatprep.subr.mxu0 0.0
      %3311 = vmatpush1.msra.mxu0 0.0
      %3312 = vmatprep.subr.mxu0 0.0
      %3313 = vmatpush1.msra.mxu0 0.0
      %3314 = vmatprep.subr.mxu0 0.0
      %3315 = vmatpush1.msra.mxu0 0.0
      %3316 = vmatprep.subr.mxu0 0.0
      %3317 = vmatpush1.msra.mxu0 0.0
      %3318 = vmatprep.subr.mxu0 0.0
      %3319 = vmatpush1.msra.mxu0 0.0
      %3320 = vmatprep.subr.mxu0 0.0
      %3321 = vmatpush1.msra.mxu0 0.0
      %3322 = vmatprep.mubr.f32.mxu0 0.0
      %3323 = vmatmul.mubr.f32.gmra.mrb[0].mxu0 %v3235
      %v3324 = vpop.f32.mrb[0].mxu0
      %v3325 = vadd.f32 0.0, %v3324
      %v3326 = vpop.f32.mrb[0].mxu0
      %3327 = vmatprep.mubr.f32.mxu0 0.0
      %3328 = vmatmul.mubr.f32.gmra.mrb[0].mxu0 %v3238
      %v3329 = vpop.f32.mrb[0].mxu0
      %v3330 = vadd.f32 0.0, %v3329
      %v3331 = vpop.f32.mrb[0].mxu0
      %3332 = vmatprep.mubr.f32.mxu0 0.0
      %3333 = vmatmul.mubr.f32.gmra.mrb[0].mxu0 %v3241
      %v3334 = vpop.f32.mrb[0].mxu0
      %v3335 = vadd.f32 0.0, %v3334
      %v3336 = vpop.f32.mrb[0].mxu0
      %3337 = vmatprep.mubr.f32.mxu0 0.0
      %3338 = vmatmul.mubr.f32.gmra.mrb[0].mxu0 %v3244
      %v3339 = vpop.f32.mrb[0].mxu0
      %v3340 = vadd.f32 0.0, %v3339
      %v3341 = vpop.f32.mrb[0].mxu0
      %3342 = vmatprep.mubr.f32.mxu0 0.0
      %3343 = vmatmul.mubr.f32.gmra.mrb[0].mxu0 %v3247
      %v3344 = vpop.f32.mrb[0].mxu0
      %v3345 = vadd.f32 0.0, %v3344
      %v3346 = vpop.f32.mrb[0].mxu0
      %3347 = vmatprep.mubr.f32.mxu0 0.0
      %3348 = vmatmul.mubr.f32.gmra.mrb[0].mxu0 %v3250
      %v3349 = vpop.f32.mrb[0].mxu0
      %v3350 = vadd.f32 0.0, %v3349
      %v3351 = vpop.f32.mrb[0].mxu0
      %3352 = vmatprep.mubr.f32.mxu0 0.0
      %3353 = vmatmul.mubr.f32.gmra.mrb[0].mxu0 %v3253
      %v3354 = vpop.f32.mrb[0].mxu0
      %v3355 = vadd.f32 0.0, %v3354
      %v3356 = vpop.f32.mrb[0].mxu0
      %3357 = vmatprep.mubr.f32.mxu0 0.0
      %3358 = vmatmul.mubr.f32.gmra.mrb[0].mxu0 %v3256
      %v3359 = vpop.f32.mrb[0].mxu0
      %v3360 = vadd.f32 0.0, %v3359
      %v3361 = vpop.f32.mrb[0].mxu0
      %3362 = vdwg.mxu0
      %v3363 = vadd.f32 %v3216, %v3325
      %v3364 = vadd.f32 %v3217, %v3330
      %v3365 = vadd.f32 %v3218, %v3335
      %v3366 = vadd.f32 %v3219, %v3340
      %v3367 = vadd.f32 %v3220, %v3345
      %v3368 = vadd.f32 %v3221, %v3350
      %v3369 = vadd.f32 %v3222, %v3355
      %v3370 = vadd.f32 %v3223, %v3360
      %s3371 = scalar_lea.vmem %s170, 192
      %3372 = vst.msk [vmem:[%s3371 - $0x1] sm:$0xfe] %vm2094, %v173
      %3373 = vst.msk [vmem:[%s3371 + $0x7] sm:$0x1] %vm2096, %v174
      %3374 = vst.msk [vmem:[%s3371 + $0x7] sm:$0xfe] %vm2094, %v175
      %3375 = vst.msk [vmem:[%s3371 + $0xf] sm:$0x1] %vm2096, %v176
      %3376 = vst.msk [vmem:[%s3371 + $0xf] sm:$0xfe] %vm2094, %v177
      %3377 = vst.msk [vmem:[%s3371 + $0x17] sm:$0x1] %vm2096, %v178
      %3378 = vst.msk [vmem:[%s3371 + $0x17] sm:$0xfe] %vm2094, %v179
      %3379 = vst.msk [vmem:[%s3371 + $0x1f] sm:$0x1] %vm2096, %v180
      %3380 = vst.msk [vmem:[%s3371 + $0x1f] sm:$0xfe] %vm2094, %v181
      %3381 = vst.msk [vmem:[%s3371 + $0x27] sm:$0x1] %vm2096, %v182
      %3382 = vst.msk [vmem:[%s3371 + $0x27] sm:$0xfe] %vm2094, %v183
      %3383 = vst.msk [vmem:[%s3371 + $0x2f] sm:$0x1] %vm2096, %v184
      %3384 = vst.msk [vmem:[%s3371 + $0x2f] sm:$0xfe] %vm2094, %v185
      %3385 = vst.msk [vmem:[%s3371 + $0x37] sm:$0x1] %vm2096, %v186
      %3386 = vst.msk [vmem:[%s3371 + $0x37] sm:$0xfe] %vm2094, %v187
      %3387 = vst.msk [vmem:[%s3371 + $0x3f] sm:$0x1] %vm2096, %v188
      %3396 = vrot.lane.b32.xlu0 %v3363, 4
      %v3397 = vpop.permute.xlu0 %3396
      %3398 = vrot.lane.b32.xlu0 %v3364, 4
      %v3399 = vpop.permute.xlu0 %3398
      %3400 = vrot.lane.b32.xlu0 %v3365, 4
      %v3401 = vpop.permute.xlu0 %3400
      %3402 = vrot.lane.b32.xlu0 %v3366, 4
      %v3403 = vpop.permute.xlu0 %3402
      %3404 = vrot.lane.b32.xlu0 %v3367, 4
      %v3405 = vpop.permute.xlu0 %3404
      %3406 = vrot.lane.b32.xlu0 %v3368, 4
      %v3407 = vpop.permute.xlu0 %3406
      %3408 = vrot.lane.b32.xlu0 %v3369, 4
      %v3409 = vpop.permute.xlu0 %3408
      %3410 = vrot.lane.b32.xlu0 %v3370, 4
      %v3411 = vpop.permute.xlu0 %3410
      %3420 = vst.msk [vmem:[%s3371] sm:$0xff] %vm1456, %v3397
      %3421 = vst.msk [vmem:[%s3371 + $0x8] sm:$0xff] %vm1456, %v3399
      %3422 = vst.msk [vmem:[%s3371 + $0x10] sm:$0xff] %vm1456, %v3401
      %3423 = vst.msk [vmem:[%s3371 + $0x18] sm:$0xff] %vm1456, %v3403
      %3424 = vst.msk [vmem:[%s3371 + $0x20] sm:$0xff] %vm1456, %v3405
      %3425 = vst.msk [vmem:[%s3371 + $0x28] sm:$0xff] %vm1456, %v3407
      %3426 = vst.msk [vmem:[%s3371 + $0x30] sm:$0xff] %vm1456, %v3409
      %3427 = vst.msk [vmem:[%s3371 + $0x38] sm:$0xff] %vm1456, %v3411
      %p3428 = scmp.lt.s32.totalorder %s14, 1
      %s3429 = scalar_select %p3428, %s14, 1
      %s3430 = smul.addr %s3429, 32
      %s3431 = smul.addr %s3430, 8
      %s3432 = scalar_lea.vmem %s3, %s3431
      // Predicated region
      $region33: #{unet_innermost_forward.1} parent=31 // pred_check
        %p3433 = pneg %p100
      $region34: #{unet_innermost_forward.1} parent=31 // pred_check_branch
        %3435 = sbr.rel (%p3433) target = $region36
      $region35: #{unet_innermost_forward.1} parent=31 // pred_region
        _
      $region36: #{unet_innermost_forward.1} parent=31 // pred_fallthru
        _
    $region32: #{unet_innermost_forward.1} parent=5 // pred_fallthru
      _
    %p3436 = scmp.le.s32.totalorder 2, %s9
    // Predicated region
    $region37: #{unet_innermost_forward.1} parent=5 // pred_check
      %p3437 = pneg %p3436
    $region38: #{unet_innermost_forward.1} parent=5 // pred_check_branch
      %3439 = sbr.rel (%p3437) target = $region40
    $region39: #{unet_innermost_forward.1} parent=5 // pred_region
      %s3440 = ssub.s32 %s9, 2
      // Predicated region
      $region41: #{unet_innermost_forward.1} parent=39 // pred_check
        %p3441 = pneg %p106
      $region42: #{unet_innermost_forward.1} parent=39 // pred_check_branch
        %3443 = sbr.rel (%p3441) target = $region44
      $region43: #{unet_innermost_forward.1} parent=39 // pred_region
        %p3444 = scmp.lt.s32.totalorder %s15, 1
        %s3445 = scalar_select %p3444, %s15, 1
        %s3446 = smul.addr %s3445, 32
        %s3447 = smul.addr %s3446, 8
        %s3448 = scalar_lea.vmem %s3, %s3447
      $region44: #{unet_innermost_forward.1} parent=39 // pred_fallthru
        _
    $region40: #{unet_innermost_forward.1} parent=5 // pred_fallthru
      _
  $region6: #{unet_innermost_forward.1} parent=0 // loop_footer
    %s13 = sadd.s32 1, %s9
  $region7: #{unet_innermost_forward.1} parent=0 // loop_footer_branch
    %8 = sbr.rel target = $region3
  $region8: #{unet_innermost_forward.1} parent=0 // loop_exit
    _

</llo_original>
